<compile_context>
chip_gen: v5e
topology: v5e:2x2
jax: 0.10.0
libtpu: 0.0.40
codegen_flags: <defaults>
</compile_context>

<pallas_src>
import functools

import jax
import jax.numpy as jnp
from jax.experimental import pallas as pl
from jax.experimental.pallas import tpu as pltpu


# ----------------------------------------------------------------------------
# Fused encoder-block Pallas kernel
#   patch-embed (im2col matmul) + `num_layers` transformer layers, one batch
#   element per grid step.  All weights are full-array VMEM blocks (constant
#   block index -> fetched once), layers are statically unrolled.
# ----------------------------------------------------------------------------
def _encoder_block_kernel(
    patches_ref, w_pe_ref, b_pe_ref,
    ln_g_ref, ln_b_ref,
    wq_ref, wk_ref, wv_ref, et_ref, ft_ref, wo_ref, w8_ref, b8_ref,
    o_ref, *, num_heads, num_layers,
):
    f32 = jnp.float32
    bf16 = jnp.bfloat16
    H = num_heads

    # --- patch-embed: (N, K)bf16 @ (K, C)bf16 -> f32, + bias ----------------
    x = jnp.dot(patches_ref[0], w_pe_ref[...],
                preferred_element_type=f32) + b_pe_ref[...]
    N, C = x.shape

    for l in range(num_layers):                      # static unroll
        # --- LayerNorm over channels (f32 elementwise) ----------------------
        mu = jnp.mean(x, axis=-1, keepdims=True)
        var = jnp.mean(jnp.square(x - mu), axis=-1, keepdims=True)
        xn = (x - mu) * jax.lax.rsqrt(var + 1e-5)
        xn = xn * ln_g_ref[l] + ln_b_ref[l]
        xn_bf = xn.astype(bf16)

        # --- head-major q projection (1/sqrt(dh) folded into wq) ------------
        xn_h = jnp.broadcast_to(xn_bf, (H, N, C))
        q = jnp.einsum("hnc,hcd->hnd", xn_h, wq_ref[l],
                       preferred_element_type=f32)            # (H, N, dh)

        # --- EPA/SRA token projection first: (E^T xn) Wk == E^T (xn Wk) -----
        xpe = jnp.dot(et_ref[l], xn_bf, preferred_element_type=f32)  # (P, C)
        xpf = jnp.dot(ft_ref[l], xn_bf, preferred_element_type=f32)  # (P, C)
        P = xpe.shape[0]
        kp = jnp.einsum("hpc,hcd->hpd",
                        jnp.broadcast_to(xpe.astype(bf16), (H, P, C)),
                        wk_ref[l], preferred_element_type=f32)       # (H, P, dh)
        vp = jnp.einsum("hpc,hcd->hpd",
                        jnp.broadcast_to(xpf.astype(bf16), (H, P, C)),
                        wv_ref[l], preferred_element_type=f32)       # (H, P, dh)

        # --- attention over projected tokens, batched over heads ------------
        logits = jnp.einsum("hnd,hpd->hnp", q.astype(bf16), kp.astype(bf16),
                            preferred_element_type=f32)              # (H, N, P)
        m = jnp.max(logits, axis=-1, keepdims=True)
        p = jnp.exp(logits - m)
        p = p * pl.reciprocal(jnp.sum(p, axis=-1, keepdims=True), approx=True)
        o = jnp.einsum("hnp,hpd->hnd", p.astype(bf16), vp.astype(bf16),
                       preferred_element_type=f32)                   # (H, N, dh)

        # --- head merge through Wo (layer-scale gamma folded into columns) --
        o = jnp.einsum("hnd,hdc->hnc", o.astype(bf16), wo_ref[l],
                       preferred_element_type=f32)                   # (H, N, C)
        attn_x = x + jnp.sum(o, axis=0)

        # --- pointwise-conv ("conv8") residual branch -----------------------
        x = attn_x + jnp.dot(attn_x.astype(bf16), w8_ref[l],
                             preferred_element_type=f32) + b8_ref[l]

    o_ref[0] = x


def encoder_block_tokens(patches, blk, num_heads):
    """patches: (B, N, K) bf16  ->  tokens (B, N, C) f32."""
    B, N, K = patches.shape
    C = blk["w_pe"].shape[1]
    L = blk["ln_g"].shape[0]
    kern = functools.partial(_encoder_block_kernel,
                             num_heads=num_heads, num_layers=L)

    def const(arr):
        nd = arr.ndim
        return pl.BlockSpec(arr.shape, lambda b, _nd=nd: (0,) * _nd)

    return pl.pallas_call(
        kern,
        out_shape=jax.ShapeDtypeStruct((B, N, C), jnp.float32),
        grid_spec=pltpu.PrefetchScalarGridSpec(
            num_scalar_prefetch=0,
            grid=(B,),
            in_specs=[
                pl.BlockSpec((1, N, K), lambda b: (b, 0, 0)),
                const(blk["w_pe"]), const(blk["b_pe"]),
                const(blk["ln_g"]), const(blk["ln_b"]),
                const(blk["wq3"]), const(blk["wk3"]), const(blk["wv3"]),
                const(blk["eT"]), const(blk["fT"]),
                const(blk["wo3"]), const(blk["w8"]), const(blk["b8"]),
            ],
            out_specs=pl.BlockSpec((1, N, C), lambda b: (b, 0, 0)),
        ),
        compiler_params=pltpu.CompilerParams(
            dimension_semantics=("parallel",),
            vmem_limit_bytes=32 * 1024 * 1024,
        ),
    )(
        patches, blk["w_pe"], blk["b_pe"], blk["ln_g"], blk["ln_b"],
        blk["wq3"], blk["wk3"], blk["wv3"], blk["eT"], blk["fT"],
        blk["wo3"], blk["w8"], blk["b8"],
    )


# ----------------------------------------------------------------------------
# Plain-JAX glue (layout plumbing only)
# ----------------------------------------------------------------------------
def extract_patches(x, k):
    # x: (B, C, D, H, W) NCDHW, non-overlapping k^3 patches (kernel == stride).
    B, C, D, H, W = x.shape
    Do, Ho, Wo = D // k, H // k, W // k
    x = x.reshape(B, C, Do, k, Ho, k, Wo, k)
    x = x.transpose(0, 2, 4, 6, 1, 3, 5, 7)  # (B, Do, Ho, Wo, C, k, k, k)
    return x.reshape(B, Do * Ho * Wo, C * k * k * k), (Do, Ho, Wo)


def tokens_to_ncdhw(tok, dhw, C):
    B = tok.shape[0]
    Do, Ho, Wo = dhw
    x = tok.reshape(B, Do, Ho, Wo, C)
    return x.transpose(0, 4, 1, 2, 3)  # back to NCDHW


def encoder_block(x, blk, kernel_size, num_heads):
    patches, dhw = extract_patches(x, kernel_size)
    tok = encoder_block_tokens(patches.astype(jnp.bfloat16), blk, num_heads)
    return tokens_to_ncdhw(tok, dhw, blk["w_pe"].shape[1])


@functools.partial(jax.jit, static_argnames=("cnn_kernel_sizes", "tf_num_heads"))
def hybrid_encoder_forward(x, params, cnn_kernel_sizes, tf_num_heads):
    layer_features = []
    for blk, k, nh in zip(params, cnn_kernel_sizes, tf_num_heads):
        x = encoder_block(x, blk, k, nh)
        layer_features.append(x)          # x.clone() equivalent (JAX is functional)
    return x, layer_features


# ----------------------------------------------------------------------------
# Deterministic parameter init + param-prep folding
#   - matmul weights stored bf16; LN / bias params stay f32
#   - per-head restack: Wq/Wk/Wv -> (H, C, dh), Wo -> (H, dh, C)
#   - 1/sqrt(dh) folded into Wq, layer-scale gamma folded into Wo columns
#   - E/F stored pre-transposed as (P, N)
#   - per-layer params stacked with a leading L axis (in-kernel static unroll)
# ----------------------------------------------------------------------------
def init_params(key, in_channels, features, cnn_kernel_sizes, tf_input_sizes,
                tf_proj_sizes, tf_repeats, tf_num_heads):
    params = []
    io = [in_channels] + list(features)
    for i, (ich, och) in enumerate(zip(io[:-1], io[1:])):
        k = cnn_kernel_sizes[i]
        K = ich * k ** 3
        N, P = tf_input_sizes[i], tf_proj_sizes[i]
        L, H = tf_repeats[i], tf_num_heads[i]
        dh = och // H
        scale = 1.0 / (dh ** 0.5)

        key, kw = jax.random.split(key)
        blk = {
            "w_pe": (0.05 * jax.random.normal(kw, (K, och), jnp.float32)
                     ).astype(jnp.bfloat16),
            "b_pe": jnp.zeros((1, och), jnp.float32),
        }

        ln_g, ln_b, wq3, wk3, wv3, eT, fT, wo3, w8, b8 = ([] for _ in range(10))
        for _ in range(L):
            key, *kr = jax.random.split(key, 8)
            wq = 0.05 * jax.random.normal(kr[0], (och, och), jnp.float32)
            wk = 0.05 * jax.random.normal(kr[1], (och, och), jnp.float32)
            wv = 0.05 * jax.random.normal(kr[2], (och, och), jnp.float32)
            e = 0.05 * jax.random.normal(kr[3], (N, P), jnp.float32)
            f = 0.05 * jax.random.normal(kr[4], (N, P), jnp.float32)
            wo = 0.05 * jax.random.normal(kr[5], (och, och), jnp.float32)
            gamma = 1e-6 * jnp.ones((1, och), jnp.float32)
            w8w = 0.05 * jax.random.normal(kr[6], (och, och), jnp.float32)

            # ---- param-prep folding (happens once, off the hot path) -------
            wo_scaled = wo * gamma                          # fold layer scale
            wq3.append(jnp.stack(
                [wq[:, h * dh:(h + 1) * dh] * scale for h in range(H)]))
            wk3.append(jnp.stack(
                [wk[:, h * dh:(h + 1) * dh] for h in range(H)]))
            wv3.append(jnp.stack(
                [wv[:, h * dh:(h + 1) * dh] for h in range(H)]))
            wo3.append(jnp.stack(
                [wo_scaled[h * dh:(h + 1) * dh, :] for h in range(H)]))
            eT.append(e.T)                                  # (P, N)
            fT.append(f.T)
            ln_g.append(jnp.ones((1, och), jnp.float32))
            ln_b.append(jnp.zeros((1, och), jnp.float32))
            w8.append(w8w)
            b8.append(jnp.zeros((1, och), jnp.float32))

        as_bf = lambda xs: jnp.stack(xs).astype(jnp.bfloat16)
        as_f32 = lambda xs: jnp.stack(xs).astype(jnp.float32)
        blk.update({
            "ln_g": as_f32(ln_g), "ln_b": as_f32(ln_b),
            "wq3": as_bf(wq3), "wk3": as_bf(wk3), "wv3": as_bf(wv3),
            "eT": as_bf(eT), "fT": as_bf(fT), "wo3": as_bf(wo3),
            "w8": as_bf(w8), "b8": as_f32(b8),
        })
        params.append(blk)
    return params


# ----------------------------------------------------------------------------
if __name__ == "__main__":
    B = 2
    in_channels = 4
    spatial = 8                                  # D = H = W = 8
    features = [16, 32]
    cnn_kernel_sizes = (2, 2)
    cnn_strides = (2, 2)                         # kernel == stride (patch-embed convs)
    tf_input_sizes = [(spatial // 2) ** 3,       # 64 tokens after first block
                      (spatial // 4) ** 3]       # 8 tokens after second block
    tf_proj_sizes = [32, 8]
    tf_repeats = [1, 2]
    tf_num_heads = (2, 4)
    # cnn_dropouts = 0.0, tf_dropouts = 0.0  (identity in eval mode)

    key = jax.random.PRNGKey(0)
    kx, kp = jax.random.split(key)
    x = jax.random.normal(kx, (B, in_channels, spatial, spatial, spatial),
                          jnp.float32)

    params = init_params(kp, in_channels, features, cnn_kernel_sizes,
                         tf_input_sizes, tf_proj_sizes, tf_repeats,
                         tf_num_heads)

    out, layer_features = hybrid_encoder_forward(
        x, params, cnn_kernel_sizes=cnn_kernel_sizes,
        tf_num_heads=tf_num_heads)

    jax.block_until_ready(out)
    for f in layer_features:
        jax.block_until_ready(f)

    assert out.shape == (B, features[-1], spatial // 4, spatial // 4, spatial // 4)
    assert layer_features[0].shape == (B, features[0], spatial // 2,
                                       spatial // 2, spatial // 2)
    print("KERNEL_OK")
</pallas_src>

<mosaic_0001>
module attributes {stable_mosaic.version = 11 : i64} {
  func.func @_encoder_block_kernel(%arg0: i32, %arg1: memref<1x64x32xbf16, #tpu.memory_space<vmem>>, %arg2: memref<32x16xbf16, #tpu.memory_space<vmem>>, %arg3: memref<1x16xf32, #tpu.memory_space<vmem>>, %arg4: memref<1x1x16xf32, #tpu.memory_space<vmem>>, %arg5: memref<1x1x16xf32, #tpu.memory_space<vmem>>, %arg6: memref<1x2x16x8xbf16, #tpu.memory_space<vmem>>, %arg7: memref<1x2x16x8xbf16, #tpu.memory_space<vmem>>, %arg8: memref<1x2x16x8xbf16, #tpu.memory_space<vmem>>, %arg9: memref<1x32x64xbf16, #tpu.memory_space<vmem>>, %arg10: memref<1x32x64xbf16, #tpu.memory_space<vmem>>, %arg11: memref<1x2x8x16xbf16, #tpu.memory_space<vmem>>, %arg12: memref<1x16x16xbf16, #tpu.memory_space<vmem>>, %arg13: memref<1x1x16xf32, #tpu.memory_space<vmem>>, %arg14: memref<1x64x16xf32, #tpu.memory_space<vmem>>) attributes {dimension_semantics = [#tpu.dimension_semantics<parallel>], iteration_bounds = array<i64: 2>, scalar_prefetch = 0 : i64, scratch_operands = 0 : i64, tpu.core_type = #tpu.core_type<tc>, window_params = [{transform_indices = @transform_0, window_bounds = array<i64: 1, 64, 32>}, {pipeline_mode = #tpu.pipeline_mode<synchronous>, transform_indices = @transform_1, window_bounds = array<i64: 32, 16>}, {pipeline_mode = #tpu.pipeline_mode<synchronous>, transform_indices = @transform_2, window_bounds = array<i64: 1, 16>}, {pipeline_mode = #tpu.pipeline_mode<synchronous>, transform_indices = @transform_3, window_bounds = array<i64: 1, 1, 16>}, {pipeline_mode = #tpu.pipeline_mode<synchronous>, transform_indices = @transform_4, window_bounds = array<i64: 1, 1, 16>}, {pipeline_mode = #tpu.pipeline_mode<synchronous>, transform_indices = @transform_5, window_bounds = array<i64: 1, 2, 16, 8>}, {pipeline_mode = #tpu.pipeline_mode<synchronous>, transform_indices = @transform_6, window_bounds = array<i64: 1, 2, 16, 8>}, {pipeline_mode = #tpu.pipeline_mode<synchronous>, transform_indices = @transform_7, window_bounds = array<i64: 1, 2, 16, 8>}, {pipeline_mode = #tpu.pipeline_mode<synchronous>, transform_indices = @transform_8, window_bounds = array<i64: 1, 32, 64>}, {pipeline_mode = #tpu.pipeline_mode<synchronous>, transform_indices = @transform_9, window_bounds = array<i64: 1, 32, 64>}, {pipeline_mode = #tpu.pipeline_mode<synchronous>, transform_indices = @transform_10, window_bounds = array<i64: 1, 2, 8, 16>}, {pipeline_mode = #tpu.pipeline_mode<synchronous>, transform_indices = @transform_11, window_bounds = array<i64: 1, 16, 16>}, {pipeline_mode = #tpu.pipeline_mode<synchronous>, transform_indices = @transform_12, window_bounds = array<i64: 1, 1, 16>}, {transform_indices = @transform_13, window_bounds = array<i64: 1, 64, 16>}]} {
    %c0 = arith.constant 0 : index
    %c0_0 = arith.constant 0 : index
    %c0_1 = arith.constant 0 : index
    %0 = vector.load %arg1[%c0, %c0_0, %c0_1] : memref<1x64x32xbf16, #tpu.memory_space<vmem>>, vector<1x64x32xbf16>
    %1 = vector.shape_cast %0 : vector<1x64x32xbf16> to vector<64x32xbf16>
    %c0_2 = arith.constant 0 : index
    %c0_3 = arith.constant 0 : index
    %2 = vector.load %arg2[%c0_2, %c0_3] : memref<32x16xbf16, #tpu.memory_space<vmem>>, vector<32x16xbf16>
    %cst = arith.constant dense<0.000000e+00> : vector<64x16xf32>
    %3 = tpu.matmul %1, %2, %cst {dimension_numbers = #tpu.dot_dimension_numbers<[1], [0], [0], [1], [0, 0, 1, 1], [], []>} : vector<64x32xbf16>, vector<32x16xbf16>, vector<64x16xf32> -> vector<64x16xf32>
    %c0_4 = arith.constant 0 : index
    %c0_5 = arith.constant 0 : index
    %4 = vector.load %arg3[%c0_4, %c0_5] : memref<1x16xf32, #tpu.memory_space<vmem>>, vector<1x16xf32>
    %5 = vector.broadcast %4 : vector<1x16xf32> to vector<64x16xf32>
    %6 = arith.addf %3, %5 : vector<64x16xf32>
    %cst_6 = arith.constant dense<0.000000e+00> : vector<64xf32>
    %7 = vector.multi_reduction <add>, %6, %cst_6 [1] : vector<64x16xf32> to vector<64xf32>
    %8 = vector.shape_cast %7 : vector<64xf32> to vector<64x1xf32>
    %cst_7 = arith.constant 1.600000e+01 : f32
    %9 = vector.broadcast %cst_7 : f32 to vector<64x1xf32>
    %10 = arith.divf %8, %9 : vector<64x1xf32>
    %11 = vector.broadcast %10 : vector<64x1xf32> to vector<64x16xf32>
    %12 = arith.subf %6, %11 : vector<64x16xf32>
    %13 = arith.mulf %12, %12 : vector<64x16xf32>
    %cst_8 = arith.constant dense<0.000000e+00> : vector<64xf32>
    %14 = vector.multi_reduction <add>, %13, %cst_8 [1] : vector<64x16xf32> to vector<64xf32>
    %15 = vector.shape_cast %14 : vector<64xf32> to vector<64x1xf32>
    %cst_9 = arith.constant 1.600000e+01 : f32
    %16 = vector.broadcast %cst_9 : f32 to vector<64x1xf32>
    %17 = arith.divf %15, %16 : vector<64x1xf32>
    %18 = vector.broadcast %10 : vector<64x1xf32> to vector<64x16xf32>
    %19 = arith.subf %6, %18 : vector<64x16xf32>
    %cst_10 = arith.constant 9.99999974E-6 : f32
    %20 = vector.broadcast %cst_10 : f32 to vector<64x1xf32>
    %21 = arith.addf %17, %20 : vector<64x1xf32>
    %22 = math.rsqrt %21 : vector<64x1xf32>
    %23 = vector.broadcast %22 : vector<64x1xf32> to vector<64x16xf32>
    %24 = arith.mulf %19, %23 : vector<64x16xf32>
    %c0_11 = arith.constant 0 : index
    %c0_12 = arith.constant 0 : index
    %c0_13 = arith.constant 0 : index
    %25 = vector.load %arg4[%c0_11, %c0_12, %c0_13] : memref<1x1x16xf32, #tpu.memory_space<vmem>>, vector<1x1x16xf32>
    %26 = vector.shape_cast %25 : vector<1x1x16xf32> to vector<1x16xf32>
    %27 = vector.broadcast %26 : vector<1x16xf32> to vector<64x16xf32>
    %28 = arith.mulf %24, %27 : vector<64x16xf32>
    %c0_14 = arith.constant 0 : index
    %c0_15 = arith.constant 0 : index
    %c0_16 = arith.constant 0 : index
    %29 = vector.load %arg5[%c0_14, %c0_15, %c0_16] : memref<1x1x16xf32, #tpu.memory_space<vmem>>, vector<1x1x16xf32>
    %30 = vector.shape_cast %29 : vector<1x1x16xf32> to vector<1x16xf32>
    %31 = vector.broadcast %30 : vector<1x16xf32> to vector<64x16xf32>
    %32 = arith.addf %28, %31 : vector<64x16xf32>
    %33 = arith.truncf %32 : vector<64x16xf32> to vector<64x16xbf16>
    %34 = vector.shape_cast %33 : vector<64x16xbf16> to vector<1x64x16xbf16>
    %35 = vector.broadcast %34 : vector<1x64x16xbf16> to vector<2x64x16xbf16>
    %c0_17 = arith.constant 0 : index
    %c0_18 = arith.constant 0 : index
    %c0_19 = arith.constant 0 : index
    %c0_20 = arith.constant 0 : index
    %36 = vector.load %arg6[%c0_17, %c0_18, %c0_19, %c0_20] : memref<1x2x16x8xbf16, #tpu.memory_space<vmem>>, vector<1x2x16x8xbf16>
    %37 = vector.shape_cast %36 : vector<1x2x16x8xbf16> to vector<2x16x8xbf16>
    "tpu.trace_start"() <{level = 10 : i32, message = "hnc,hcd->hnd"}> : () -> ()
    %cst_21 = arith.constant dense<0.000000e+00> : vector<2x64x8xf32>
    %38 = tpu.matmul %35, %37, %cst_21 {dimension_numbers = #tpu.dot_dimension_numbers<[2], [1], [1], [2], [0, 0, 0, 1, 1, 2], [0], [0]>} : vector<2x64x16xbf16>, vector<2x16x8xbf16>, vector<2x64x8xf32> -> vector<2x64x8xf32>
    "tpu.trace_stop"() : () -> ()
    %c0_22 = arith.constant 0 : index
    %c0_23 = arith.constant 0 : index
    %c0_24 = arith.constant 0 : index
    %39 = vector.load %arg9[%c0_22, %c0_23, %c0_24] : memref<1x32x64xbf16, #tpu.memory_space<vmem>>, vector<1x32x64xbf16>
    %40 = vector.shape_cast %39 : vector<1x32x64xbf16> to vector<32x64xbf16>
    %cst_25 = arith.constant dense<0.000000e+00> : vector<32x16xf32>
    %41 = tpu.matmul %40, %33, %cst_25 {dimension_numbers = #tpu.dot_dimension_numbers<[1], [0], [0], [1], [0, 0, 1, 1], [], []>} : vector<32x64xbf16>, vector<64x16xbf16>, vector<32x16xf32> -> vector<32x16xf32>
    %c0_26 = arith.constant 0 : index
    %c0_27 = arith.constant 0 : index
    %c0_28 = arith.constant 0 : index
    %42 = vector.load %arg10[%c0_26, %c0_27, %c0_28] : memref<1x32x64xbf16, #tpu.memory_space<vmem>>, vector<1x32x64xbf16>
    %43 = vector.shape_cast %42 : vector<1x32x64xbf16> to vector<32x64xbf16>
    %cst_29 = arith.constant dense<0.000000e+00> : vector<32x16xf32>
    %44 = tpu.matmul %43, %33, %cst_29 {dimension_numbers = #tpu.dot_dimension_numbers<[1], [0], [0], [1], [0, 0, 1, 1], [], []>} : vector<32x64xbf16>, vector<64x16xbf16>, vector<32x16xf32> -> vector<32x16xf32>
    %45 = arith.truncf %41 : vector<32x16xf32> to vector<32x16xbf16>
    %46 = vector.shape_cast %45 : vector<32x16xbf16> to vector<1x32x16xbf16>
    %47 = vector.broadcast %46 : vector<1x32x16xbf16> to vector<2x32x16xbf16>
    %c0_30 = arith.constant 0 : index
    %c0_31 = arith.constant 0 : index
    %c0_32 = arith.constant 0 : index
    %c0_33 = arith.constant 0 : index
    %48 = vector.load %arg7[%c0_30, %c0_31, %c0_32, %c0_33] : memref<1x2x16x8xbf16, #tpu.memory_space<vmem>>, vector<1x2x16x8xbf16>
    %49 = vector.shape_cast %48 : vector<1x2x16x8xbf16> to vector<2x16x8xbf16>
    "tpu.trace_start"() <{level = 10 : i32, message = "hpc,hcd->hpd"}> : () -> ()
    %cst_34 = arith.constant dense<0.000000e+00> : vector<2x32x8xf32>
    %50 = tpu.matmul %47, %49, %cst_34 {dimension_numbers = #tpu.dot_dimension_numbers<[2], [1], [1], [2], [0, 0, 0, 1, 1, 2], [0], [0]>} : vector<2x32x16xbf16>, vector<2x16x8xbf16>, vector<2x32x8xf32> -> vector<2x32x8xf32>
    "tpu.trace_stop"() : () -> ()
    %51 = arith.truncf %44 : vector<32x16xf32> to vector<32x16xbf16>
    %52 = vector.shape_cast %51 : vector<32x16xbf16> to vector<1x32x16xbf16>
    %53 = vector.broadcast %52 : vector<1x32x16xbf16> to vector<2x32x16xbf16>
    %c0_35 = arith.constant 0 : index
    %c0_36 = arith.constant 0 : index
    %c0_37 = arith.constant 0 : index
    %c0_38 = arith.constant 0 : index
    %54 = vector.load %arg8[%c0_35, %c0_36, %c0_37, %c0_38] : memref<1x2x16x8xbf16, #tpu.memory_space<vmem>>, vector<1x2x16x8xbf16>
    %55 = vector.shape_cast %54 : vector<1x2x16x8xbf16> to vector<2x16x8xbf16>
    "tpu.trace_start"() <{level = 10 : i32, message = "hpc,hcd->hpd"}> : () -> ()
    %cst_39 = arith.constant dense<0.000000e+00> : vector<2x32x8xf32>
    %56 = tpu.matmul %53, %55, %cst_39 {dimension_numbers = #tpu.dot_dimension_numbers<[2], [1], [1], [2], [0, 0, 0, 1, 1, 2], [0], [0]>} : vector<2x32x16xbf16>, vector<2x16x8xbf16>, vector<2x32x8xf32> -> vector<2x32x8xf32>
    "tpu.trace_stop"() : () -> ()
    %57 = arith.truncf %38 : vector<2x64x8xf32> to vector<2x64x8xbf16>
    %58 = arith.truncf %50 : vector<2x32x8xf32> to vector<2x32x8xbf16>
    "tpu.trace_start"() <{level = 10 : i32, message = "hnd,hpd->hnp"}> : () -> ()
    %cst_40 = arith.constant dense<0.000000e+00> : vector<2x64x32xf32>
    %59 = tpu.matmul %57, %58, %cst_40 {dimension_numbers = #tpu.dot_dimension_numbers<[2], [2], [1], [1], [0, 0, 0, 1, 1, 1], [0], [0]>} : vector<2x64x8xbf16>, vector<2x32x8xbf16>, vector<2x64x32xf32> -> vector<2x64x32xf32>
    "tpu.trace_stop"() : () -> ()
    %cst_41 = arith.constant dense<0xFF800000> : vector<2x64xf32>
    %60 = vector.multi_reduction <maximumf>, %59, %cst_41 [2] : vector<2x64x32xf32> to vector<2x64xf32>
    %61 = vector.shape_cast %60 : vector<2x64xf32> to vector<2x64x1xf32>
    %62 = vector.broadcast %61 : vector<2x64x1xf32> to vector<2x64x32xf32>
    %63 = arith.subf %59, %62 : vector<2x64x32xf32>
    %64 = math.exp %63 : vector<2x64x32xf32>
    %cst_42 = arith.constant dense<0.000000e+00> : vector<2x64xf32>
    %65 = vector.multi_reduction <add>, %64, %cst_42 [2] : vector<2x64x32xf32> to vector<2x64xf32>
    %66 = vector.shape_cast %65 : vector<2x64xf32> to vector<2x64x1xf32>
    %67 = tpu.reciprocal %66 {approx = true} : vector<2x64x1xf32> -> vector<2x64x1xf32>
    %68 = vector.broadcast %67 : vector<2x64x1xf32> to vector<2x64x32xf32>
    %69 = arith.mulf %64, %68 : vector<2x64x32xf32>
    %70 = arith.truncf %69 : vector<2x64x32xf32> to vector<2x64x32xbf16>
    %71 = arith.truncf %56 : vector<2x32x8xf32> to vector<2x32x8xbf16>
    "tpu.trace_start"() <{level = 10 : i32, message = "hnp,hpd->hnd"}> : () -> ()
    %cst_43 = arith.constant dense<0.000000e+00> : vector<2x64x8xf32>
    %72 = tpu.matmul %70, %71, %cst_43 {dimension_numbers = #tpu.dot_dimension_numbers<[2], [1], [1], [2], [0, 0, 0, 1, 1, 2], [0], [0]>} : vector<2x64x32xbf16>, vector<2x32x8xbf16>, vector<2x64x8xf32> -> vector<2x64x8xf32>
    "tpu.trace_stop"() : () -> ()
    %73 = arith.truncf %72 : vector<2x64x8xf32> to vector<2x64x8xbf16>
    %c0_44 = arith.constant 0 : index
    %c0_45 = arith.constant 0 : index
    %c0_46 = arith.constant 0 : index
    %c0_47 = arith.constant 0 : index
    %74 = vector.load %arg11[%c0_44, %c0_45, %c0_46, %c0_47] : memref<1x2x8x16xbf16, #tpu.memory_space<vmem>>, vector<1x2x8x16xbf16>
    %75 = vector.shape_cast %74 : vector<1x2x8x16xbf16> to vector<2x8x16xbf16>
    "tpu.trace_start"() <{level = 10 : i32, message = "hnd,hdc->hnc"}> : () -> ()
    %cst_48 = arith.constant dense<0.000000e+00> : vector<2x64x16xf32>
    %76 = tpu.matmul %73, %75, %cst_48 {dimension_numbers = #tpu.dot_dimension_numbers<[2], [1], [1], [2], [0, 0, 0, 1, 1, 2], [0], [0]>} : vector<2x64x8xbf16>, vector<2x8x16xbf16>, vector<2x64x16xf32> -> vector<2x64x16xf32>
    "tpu.trace_stop"() : () -> ()
    %cst_49 = arith.constant dense<0.000000e+00> : vector<64x16xf32>
    %77 = vector.multi_reduction <add>, %76, %cst_49 [0] : vector<2x64x16xf32> to vector<64x16xf32>
    %78 = arith.addf %6, %77 : vector<64x16xf32>
    %79 = arith.truncf %78 : vector<64x16xf32> to vector<64x16xbf16>
    %c0_50 = arith.constant 0 : index
    %c0_51 = arith.constant 0 : index
    %c0_52 = arith.constant 0 : index
    %80 = vector.load %arg12[%c0_50, %c0_51, %c0_52] : memref<1x16x16xbf16, #tpu.memory_space<vmem>>, vector<1x16x16xbf16>
    %81 = vector.shape_cast %80 : vector<1x16x16xbf16> to vector<16x16xbf16>
    %cst_53 = arith.constant dense<0.000000e+00> : vector<64x16xf32>
    %82 = tpu.matmul %79, %81, %cst_53 {dimension_numbers = #tpu.dot_dimension_numbers<[1], [0], [0], [1], [0, 0, 1, 1], [], []>} : vector<64x16xbf16>, vector<16x16xbf16>, vector<64x16xf32> -> vector<64x16xf32>
    %83 = arith.addf %78, %82 : vector<64x16xf32>
    %c0_54 = arith.constant 0 : index
    %c0_55 = arith.constant 0 : index
    %c0_56 = arith.constant 0 : index
    %84 = vector.load %arg13[%c0_54, %c0_55, %c0_56] : memref<1x1x16xf32, #tpu.memory_space<vmem>>, vector<1x1x16xf32>
    %85 = vector.shape_cast %84 : vector<1x1x16xf32> to vector<1x16xf32>
    %86 = vector.broadcast %85 : vector<1x16xf32> to vector<64x16xf32>
    %87 = arith.addf %83, %86 : vector<64x16xf32>
    %c0_57 = arith.constant 0 : index
    %c0_58 = arith.constant 0 : index
    %c0_59 = arith.constant 0 : index
    %88 = vector.load %arg14[%c0_57, %c0_58, %c0_59] : memref<1x64x16xf32, #tpu.memory_space<vmem>>, vector<1x64x16xf32>
    %89 = vector.shape_cast %88 : vector<1x64x16xf32> to vector<64x16xf32>
    %90 = vector.shape_cast %87 : vector<64x16xf32> to vector<1x64x16xf32>
    tpu.vector_store %arg14[%c0_57, %c0_58, %c0_59], %90 {strides = array<i32>} : memref<1x64x16xf32, #tpu.memory_space<vmem>>, vector<1x64x16xf32>,
    return
  }
  func.func @transform_0(%arg0: i32) -> (i32, i32, i32) {
    %c0_i32 = arith.constant 0 : i32
    %c0_i32_0 = arith.constant 0 : i32
    %c0_i32_1 = arith.constant 0 : i32
    return %arg0, %c0_i32, %c0_i32_0 : i32, i32, i32
  }
  func.func @transform_1(%arg0: i32) -> (i32, i32) {
    %c0_i32 = arith.constant 0 : i32
    %c0_i32_0 = arith.constant 0 : i32
    %c0_i32_1 = arith.constant 0 : i32
    return %c0_i32, %c0_i32_0 : i32, i32
  }
  func.func @transform_2(%arg0: i32) -> (i32, i32) {
    %c0_i32 = arith.constant 0 : i32
    %c0_i32_0 = arith.constant 0 : i32
    %c0_i32_1 = arith.constant 0 : i32
    return %c0_i32, %c0_i32_0 : i32, i32
  }
  func.func @transform_3(%arg0: i32) -> (i32, i32, i32) {
    %c0_i32 = arith.constant 0 : i32
    %c0_i32_0 = arith.constant 0 : i32
    %c0_i32_1 = arith.constant 0 : i32
    %c0_i32_2 = arith.constant 0 : i32
    return %c0_i32, %c0_i32_0, %c0_i32_1 : i32, i32, i32
  }
  func.func @transform_4(%arg0: i32) -> (i32, i32, i32) {
    %c0_i32 = arith.constant 0 : i32
    %c0_i32_0 = arith.constant 0 : i32
    %c0_i32_1 = arith.constant 0 : i32
    %c0_i32_2 = arith.constant 0 : i32
    return %c0_i32, %c0_i32_0, %c0_i32_1 : i32, i32, i32
  }
  func.func @transform_5(%arg0: i32) -> (i32, i32, i32, i32) {
    %c0_i32 = arith.constant 0 : i32
    %c0_i32_0 = arith.constant 0 : i32
    %c0_i32_1 = arith.constant 0 : i32
    %c0_i32_2 = arith.constant 0 : i32
    %c0_i32_3 = arith.constant 0 : i32
    return %c0_i32, %c0_i32_0, %c0_i32_1, %c0_i32_2 : i32, i32, i32, i32
  }
  func.func @transform_6(%arg0: i32) -> (i32, i32, i32, i32) {
    %c0_i32 = arith.constant 0 : i32
    %c0_i32_0 = arith.constant 0 : i32
    %c0_i32_1 = arith.constant 0 : i32
    %c0_i32_2 = arith.constant 0 : i32
    %c0_i32_3 = arith.constant 0 : i32
    return %c0_i32, %c0_i32_0, %c0_i32_1, %c0_i32_2 : i32, i32, i32, i32
  }
  func.func @transform_7(%arg0: i32) -> (i32, i32, i32, i32) {
    %c0_i32 = arith.constant 0 : i32
    %c0_i32_0 = arith.constant 0 : i32
    %c0_i32_1 = arith.constant 0 : i32
    %c0_i32_2 = arith.constant 0 : i32
    %c0_i32_3 = arith.constant 0 : i32
    return %c0_i32, %c0_i32_0, %c0_i32_1, %c0_i32_2 : i32, i32, i32, i32
  }
  func.func @transform_8(%arg0: i32) -> (i32, i32, i32) {
    %c0_i32 = arith.constant 0 : i32
    %c0_i32_0 = arith.constant 0 : i32
    %c0_i32_1 = arith.constant 0 : i32
    %c0_i32_2 = arith.constant 0 : i32
    return %c0_i32, %c0_i32_0, %c0_i32_1 : i32, i32, i32
  }
  func.func @transform_9(%arg0: i32) -> (i32, i32, i32) {
    %c0_i32 = arith.constant 0 : i32
    %c0_i32_0 = arith.constant 0 : i32
    %c0_i32_1 = arith.constant 0 : i32
    %c0_i32_2 = arith.constant 0 : i32
    return %c0_i32, %c0_i32_0, %c0_i32_1 : i32, i32, i32
  }
  func.func @transform_10(%arg0: i32) -> (i32, i32, i32, i32) {
    %c0_i32 = arith.constant 0 : i32
    %c0_i32_0 = arith.constant 0 : i32
    %c0_i32_1 = arith.constant 0 : i32
    %c0_i32_2 = arith.constant 0 : i32
    %c0_i32_3 = arith.constant 0 : i32
    return %c0_i32, %c0_i32_0, %c0_i32_1, %c0_i32_2 : i32, i32, i32, i32
  }
  func.func @transform_11(%arg0: i32) -> (i32, i32, i32) {
    %c0_i32 = arith.constant 0 : i32
    %c0_i32_0 = arith.constant 0 : i32
    %c0_i32_1 = arith.constant 0 : i32
    %c0_i32_2 = arith.constant 0 : i32
    return %c0_i32, %c0_i32_0, %c0_i32_1 : i32, i32, i32
  }
  func.func @transform_12(%arg0: i32) -> (i32, i32, i32) {
    %c0_i32 = arith.constant 0 : i32
    %c0_i32_0 = arith.constant 0 : i32
    %c0_i32_1 = arith.constant 0 : i32
    %c0_i32_2 = arith.constant 0 : i32
    return %c0_i32, %c0_i32_0, %c0_i32_1 : i32, i32, i32
  }
  func.func @transform_13(%arg0: i32) -> (i32, i32, i32) {
    %c0_i32 = arith.constant 0 : i32
    %c0_i32_0 = arith.constant 0 : i32
    %c0_i32_1 = arith.constant 0 : i32
    return %arg0, %c0_i32, %c0_i32_0 : i32, i32, i32
  }
}

module attributes {stable_mosaic.version = 11 : i64} {
  func.func @_encoder_block_kernel(%arg0: i32, %arg1: memref<1x8x128xbf16, #tpu.memory_space<vmem>>, %arg2: memref<128x32xbf16, #tpu.memory_space<vmem>>, %arg3: memref<1x32xf32, #tpu.memory_space<vmem>>, %arg4: memref<2x1x32xf32, #tpu.memory_space<vmem>>, %arg5: memref<2x1x32xf32, #tpu.memory_space<vmem>>, %arg6: memref<2x4x32x8xbf16, #tpu.memory_space<vmem>>, %arg7: memref<2x4x32x8xbf16, #tpu.memory_space<vmem>>, %arg8: memref<2x4x32x8xbf16, #tpu.memory_space<vmem>>, %arg9: memref<2x8x8xbf16, #tpu.memory_space<vmem>>, %arg10: memref<2x8x8xbf16, #tpu.memory_space<vmem>>, %arg11: memref<2x4x8x32xbf16, #tpu.memory_space<vmem>>, %arg12: memref<2x32x32xbf16, #tpu.memory_space<vmem>>, %arg13: memref<2x1x32xf32, #tpu.memory_space<vmem>>, %arg14: memref<1x8x32xf32, #tpu.memory_space<vmem>>) attributes {dimension_semantics = [#tpu.dimension_semantics<parallel>], iteration_bounds = array<i64: 2>, scalar_prefetch = 0 : i64, scratch_operands = 0 : i64, tpu.core_type = #tpu.core_type<tc>, window_params = [{transform_indices = @transform_0, window_bounds = array<i64: 1, 8, 128>}, {pipeline_mode = #tpu.pipeline_mode<synchronous>, transform_indices = @transform_1, window_bounds = array<i64: 128, 32>}, {pipeline_mode = #tpu.pipeline_mode<synchronous>, transform_indices = @transform_2, window_bounds = array<i64: 1, 32>}, {pipeline_mode = #tpu.pipeline_mode<synchronous>, transform_indices = @transform_3, window_bounds = array<i64: 2, 1, 32>}, {pipeline_mode = #tpu.pipeline_mode<synchronous>, transform_indices = @transform_4, window_bounds = array<i64: 2, 1, 32>}, {pipeline_mode = #tpu.pipeline_mode<synchronous>, transform_indices = @transform_5, window_bounds = array<i64: 2, 4, 32, 8>}, {pipeline_mode = #tpu.pipeline_mode<synchronous>, transform_indices = @transform_6, window_bounds = array<i64: 2, 4, 32, 8>}, {pipeline_mode = #tpu.pipeline_mode<synchronous>, transform_indices = @transform_7, window_bounds = array<i64: 2, 4, 32, 8>}, {pipeline_mode = #tpu.pipeline_mode<synchronous>, transform_indices = @transform_8, window_bounds = array<i64: 2, 8, 8>}, {pipeline_mode = #tpu.pipeline_mode<synchronous>, transform_indices = @transform_9, window_bounds = array<i64: 2, 8, 8>}, {pipeline_mode = #tpu.pipeline_mode<synchronous>, transform_indices = @transform_10, window_bounds = array<i64: 2, 4, 8, 32>}, {pipeline_mode = #tpu.pipeline_mode<synchronous>, transform_indices = @transform_11, window_bounds = array<i64: 2, 32, 32>}, {pipeline_mode = #tpu.pipeline_mode<synchronous>, transform_indices = @transform_12, window_bounds = array<i64: 2, 1, 32>}, {transform_indices = @transform_13, window_bounds = array<i64: 1, 8, 32>}]} {
    %c0 = arith.constant 0 : index
    %c0_0 = arith.constant 0 : index
    %c0_1 = arith.constant 0 : index
    %0 = vector.load %arg1[%c0, %c0_0, %c0_1] : memref<1x8x128xbf16, #tpu.memory_space<vmem>>, vector<1x8x128xbf16>
    %1 = vector.shape_cast %0 : vector<1x8x128xbf16> to vector<8x128xbf16>
    %c0_2 = arith.constant 0 : index
    %c0_3 = arith.constant 0 : index
    %2 = vector.load %arg2[%c0_2, %c0_3] : memref<128x32xbf16, #tpu.memory_space<vmem>>, vector<128x32xbf16>
    %cst = arith.constant dense<0.000000e+00> : vector<8x32xf32>
    %3 = tpu.matmul %1, %2, %cst {dimension_numbers = #tpu.dot_dimension_numbers<[1], [0], [0], [1], [0, 0, 1, 1], [], []>} : vector<8x128xbf16>, vector<128x32xbf16>, vector<8x32xf32> -> vector<8x32xf32>
    %c0_4 = arith.constant 0 : index
    %c0_5 = arith.constant 0 : index
    %4 = vector.load %arg3[%c0_4, %c0_5] : memref<1x32xf32, #tpu.memory_space<vmem>>, vector<1x32xf32>
    %5 = vector.broadcast %4 : vector<1x32xf32> to vector<8x32xf32>
    %6 = arith.addf %3, %5 : vector<8x32xf32>
    %cst_6 = arith.constant dense<0.000000e+00> : vector<8xf32>
    %7 = vector.multi_reduction <add>, %6, %cst_6 [1] : vector<8x32xf32> to vector<8xf32>
    %8 = vector.shape_cast %7 : vector<8xf32> to vector<8x1xf32>
    %cst_7 = arith.constant 3.200000e+01 : f32
    %9 = vector.broadcast %cst_7 : f32 to vector<8x1xf32>
    %10 = arith.divf %8, %9 : vector<8x1xf32>
    %11 = vector.broadcast %10 : vector<8x1xf32> to vector<8x32xf32>
    %12 = arith.subf %6, %11 : vector<8x32xf32>
    %13 = arith.mulf %12, %12 : vector<8x32xf32>
    %cst_8 = arith.constant dense<0.000000e+00> : vector<8xf32>
    %14 = vector.multi_reduction <add>, %13, %cst_8 [1] : vector<8x32xf32> to vector<8xf32>
    %15 = vector.shape_cast %14 : vector<8xf32> to vector<8x1xf32>
    %cst_9 = arith.constant 3.200000e+01 : f32
    %16 = vector.broadcast %cst_9 : f32 to vector<8x1xf32>
    %17 = arith.divf %15, %16 : vector<8x1xf32>
    %18 = vector.broadcast %10 : vector<8x1xf32> to vector<8x32xf32>
    %19 = arith.subf %6, %18 : vector<8x32xf32>
    %cst_10 = arith.constant 9.99999974E-6 : f32
    %20 = vector.broadcast %cst_10 : f32 to vector<8x1xf32>
    %21 = arith.addf %17, %20 : vector<8x1xf32>
    %22 = math.rsqrt %21 : vector<8x1xf32>
    %23 = vector.broadcast %22 : vector<8x1xf32> to vector<8x32xf32>
    %24 = arith.mulf %19, %23 : vector<8x32xf32>
    %c0_11 = arith.constant 0 : index
    %c0_12 = arith.constant 0 : index
    %c0_13 = arith.constant 0 : index
    %25 = vector.load %arg4[%c0_11, %c0_12, %c0_13] : memref<2x1x32xf32, #tpu.memory_space<vmem>>, vector<1x1x32xf32>
    %26 = vector.shape_cast %25 : vector<1x1x32xf32> to vector<1x32xf32>
    %27 = vector.broadcast %26 : vector<1x32xf32> to vector<8x32xf32>
    %28 = arith.mulf %24, %27 : vector<8x32xf32>
    %c0_14 = arith.constant 0 : index
    %c0_15 = arith.constant 0 : index
    %c0_16 = arith.constant 0 : index
    %29 = vector.load %arg5[%c0_14, %c0_15, %c0_16] : memref<2x1x32xf32, #tpu.memory_space<vmem>>, vector<1x1x32xf32>
    %30 = vector.shape_cast %29 : vector<1x1x32xf32> to vector<1x32xf32>
    %31 = vector.broadcast %30 : vector<1x32xf32> to vector<8x32xf32>
    %32 = arith.addf %28, %31 : vector<8x32xf32>
    %33 = arith.truncf %32 : vector<8x32xf32> to vector<8x32xbf16>
    %34 = vector.shape_cast %33 : vector<8x32xbf16> to vector<1x8x32xbf16>
    %35 = vector.broadcast %34 : vector<1x8x32xbf16> to vector<4x8x32xbf16>
    %c0_17 = arith.constant 0 : index
    %c0_18 = arith.constant 0 : index
    %c0_19 = arith.constant 0 : index
    %c0_20 = arith.constant 0 : index
    %36 = vector.load %arg6[%c0_17, %c0_18, %c0_19, %c0_20] : memref<2x4x32x8xbf16, #tpu.memory_space<vmem>>, vector<1x4x32x8xbf16>
    %37 = vector.shape_cast %36 : vector<1x4x32x8xbf16> to vector<4x32x8xbf16>
    "tpu.trace_start"() <{level = 10 : i32, message = "hnc,hcd->hnd"}> : () -> ()
    %cst_21 = arith.constant dense<0.000000e+00> : vector<4x8x8xf32>
    %38 = tpu.matmul %35, %37, %cst_21 {dimension_numbers = #tpu.dot_dimension_numbers<[2], [1], [1], [2], [0, 0, 0, 1, 1, 2], [0], [0]>} : vector<4x8x32xbf16>, vector<4x32x8xbf16>, vector<4x8x8xf32> -> vector<4x8x8xf32>
    "tpu.trace_stop"() : () -> ()
    %c0_22 = arith.constant 0 : index
    %c0_23 = arith.constant 0 : index
    %c0_24 = arith.constant 0 : index
    %39 = vector.load %arg9[%c0_22, %c0_23, %c0_24] : memref<2x8x8xbf16, #tpu.memory_space<vmem>>, vector<1x8x8xbf16>
    %40 = vector.shape_cast %39 : vector<1x8x8xbf16> to vector<8x8xbf16>
    %cst_25 = arith.constant dense<0.000000e+00> : vector<8x32xf32>
    %41 = tpu.matmul %40, %33, %cst_25 {dimension_numbers = #tpu.dot_dimension_numbers<[1], [0], [0], [1], [0, 0, 1, 1], [], []>} : vector<8x8xbf16>, vector<8x32xbf16>, vector<8x32xf32> -> vector<8x32xf32>
    %c0_26 = arith.constant 0 : index
    %c0_27 = arith.constant 0 : index
    %c0_28 = arith.constant 0 : index
    %42 = vector.load %arg10[%c0_26, %c0_27, %c0_28] : memref<2x8x8xbf16, #tpu.memory_space<vmem>>, vector<1x8x8xbf16>
    %43 = vector.shape_cast %42 : vector<1x8x8xbf16> to vector<8x8xbf16>
    %cst_29 = arith.constant dense<0.000000e+00> : vector<8x32xf32>
    %44 = tpu.matmul %43, %33, %cst_29 {dimension_numbers = #tpu.dot_dimension_numbers<[1], [0], [0], [1], [0, 0, 1, 1], [], []>} : vector<8x8xbf16>, vector<8x32xbf16>, vector<8x32xf32> -> vector<8x32xf32>
    %45 = arith.truncf %41 : vector<8x32xf32> to vector<8x32xbf16>
    %46 = vector.shape_cast %45 : vector<8x32xbf16> to vector<1x8x32xbf16>
    %47 = vector.broadcast %46 : vector<1x8x32xbf16> to vector<4x8x32xbf16>
    %c0_30 = arith.constant 0 : index
    %c0_31 = arith.constant 0 : index
    %c0_32 = arith.constant 0 : index
    %c0_33 = arith.constant 0 : index
    %48 = vector.load %arg7[%c0_30, %c0_31, %c0_32, %c0_33] : memref<2x4x32x8xbf16, #tpu.memory_space<vmem>>, vector<1x4x32x8xbf16>
    %49 = vector.shape_cast %48 : vector<1x4x32x8xbf16> to vector<4x32x8xbf16>
    "tpu.trace_start"() <{level = 10 : i32, message = "hpc,hcd->hpd"}> : () -> ()
    %cst_34 = arith.constant dense<0.000000e+00> : vector<4x8x8xf32>
    %50 = tpu.matmul %47, %49, %cst_34 {dimension_numbers = #tpu.dot_dimension_numbers<[2], [1], [1], [2], [0, 0, 0, 1, 1, 2], [0], [0]>} : vector<4x8x32xbf16>, vector<4x32x8xbf16>, vector<4x8x8xf32> -> vector<4x8x8xf32>
    "tpu.trace_stop"() : () -> ()
    %51 = arith.truncf %44 : vector<8x32xf32> to vector<8x32xbf16>
    %52 = vector.shape_cast %51 : vector<8x32xbf16> to vector<1x8x32xbf16>
    %53 = vector.broadcast %52 : vector<1x8x32xbf16> to vector<4x8x32xbf16>
    %c0_35 = arith.constant 0 : index
    %c0_36 = arith.constant 0 : index
    %c0_37 = arith.constant 0 : index
    %c0_38 = arith.constant 0 : index
    %54 = vector.load %arg8[%c0_35, %c0_36, %c0_37, %c0_38] : memref<2x4x32x8xbf16, #tpu.memory_space<vmem>>, vector<1x4x32x8xbf16>
    %55 = vector.shape_cast %54 : vector<1x4x32x8xbf16> to vector<4x32x8xbf16>
    "tpu.trace_start"() <{level = 10 : i32, message = "hpc,hcd->hpd"}> : () -> ()
    %cst_39 = arith.constant dense<0.000000e+00> : vector<4x8x8xf32>
    %56 = tpu.matmul %53, %55, %cst_39 {dimension_numbers = #tpu.dot_dimension_numbers<[2], [1], [1], [2], [0, 0, 0, 1, 1, 2], [0], [0]>} : vector<4x8x32xbf16>, vector<4x32x8xbf16>, vector<4x8x8xf32> -> vector<4x8x8xf32>
    "tpu.trace_stop"() : () -> ()
    %57 = arith.truncf %38 : vector<4x8x8xf32> to vector<4x8x8xbf16>
    %58 = arith.truncf %50 : vector<4x8x8xf32> to vector<4x8x8xbf16>
    "tpu.trace_start"() <{level = 10 : i32, message = "hnd,hpd->hnp"}> : () -> ()
    %cst_40 = arith.constant dense<0.000000e+00> : vector<4x8x8xf32>
    %59 = tpu.matmul %57, %58, %cst_40 {dimension_numbers = #tpu.dot_dimension_numbers<[2], [2], [1], [1], [0, 0, 0, 1, 1, 1], [0], [0]>} : vector<4x8x8xbf16>, vector<4x8x8xbf16>, vector<4x8x8xf32> -> vector<4x8x8xf32>
    "tpu.trace_stop"() : () -> ()
    %cst_41 = arith.constant dense<0xFF800000> : vector<4x8xf32>
    %60 = vector.multi_reduction <maximumf>, %59, %cst_41 [2] : vector<4x8x8xf32> to vector<4x8xf32>
    %61 = vector.shape_cast %60 : vector<4x8xf32> to vector<4x8x1xf32>
    %62 = vector.broadcast %61 : vector<4x8x1xf32> to vector<4x8x8xf32>
    %63 = arith.subf %59, %62 : vector<4x8x8xf32>
    %64 = math.exp %63 : vector<4x8x8xf32>
    %cst_42 = arith.constant dense<0.000000e+00> : vector<4x8xf32>
    %65 = vector.multi_reduction <add>, %64, %cst_42 [2] : vector<4x8x8xf32> to vector<4x8xf32>
    %66 = vector.shape_cast %65 : vector<4x8xf32> to vector<4x8x1xf32>
    %67 = tpu.reciprocal %66 {approx = true} : vector<4x8x1xf32> -> vector<4x8x1xf32>
    %68 = vector.broadcast %67 : vector<4x8x1xf32> to vector<4x8x8xf32>
    %69 = arith.mulf %64, %68 : vector<4x8x8xf32>
    %70 = arith.truncf %69 : vector<4x8x8xf32> to vector<4x8x8xbf16>
    %71 = arith.truncf %56 : vector<4x8x8xf32> to vector<4x8x8xbf16>
    "tpu.trace_start"() <{level = 10 : i32, message = "hnp,hpd->hnd"}> : () -> ()
    %cst_43 = arith.constant dense<0.000000e+00> : vector<4x8x8xf32>
    %72 = tpu.matmul %70, %71, %cst_43 {dimension_numbers = #tpu.dot_dimension_numbers<[2], [1], [1], [2], [0, 0, 0, 1, 1, 2], [0], [0]>} : vector<4x8x8xbf16>, vector<4x8x8xbf16>, vector<4x8x8xf32> -> vector<4x8x8xf32>
    "tpu.trace_stop"() : () -> ()
    %73 = arith.truncf %72 : vector<4x8x8xf32> to vector<4x8x8xbf16>
    %c0_44 = arith.constant 0 : index
    %c0_45 = arith.constant 0 : index
    %c0_46 = arith.constant 0 : index
    %c0_47 = arith.constant 0 : index
    %74 = vector.load %arg11[%c0_44, %c0_45, %c0_46, %c0_47] : memref<2x4x8x32xbf16, #tpu.memory_space<vmem>>, vector<1x4x8x32xbf16>
    %75 = vector.shape_cast %74 : vector<1x4x8x32xbf16> to vector<4x8x32xbf16>
    "tpu.trace_start"() <{level = 10 : i32, message = "hnd,hdc->hnc"}> : () -> ()
    %cst_48 = arith.constant dense<0.000000e+00> : vector<4x8x32xf32>
    %76 = tpu.matmul %73, %75, %cst_48 {dimension_numbers = #tpu.dot_dimension_numbers<[2], [1], [1], [2], [0, 0, 0, 1, 1, 2], [0], [0]>} : vector<4x8x8xbf16>, vector<4x8x32xbf16>, vector<4x8x32xf32> -> vector<4x8x32xf32>
    "tpu.trace_stop"() : () -> ()
    %cst_49 = arith.constant dense<0.000000e+00> : vector<8x32xf32>
    %77 = vector.multi_reduction <add>, %76, %cst_49 [0] : vector<4x8x32xf32> to vector<8x32xf32>
    %78 = arith.addf %6, %77 : vector<8x32xf32>
    %79 = arith.truncf %78 : vector<8x32xf32> to vector<8x32xbf16>
    %c0_50 = arith.constant 0 : index
    %c0_51 = arith.constant 0 : index
    %c0_52 = arith.constant 0 : index
    %80 = vector.load %arg12[%c0_50, %c0_51, %c0_52] : memref<2x32x32xbf16, #tpu.memory_space<vmem>>, vector<1x32x32xbf16>
    %81 = vector.shape_cast %80 : vector<1x32x32xbf16> to vector<32x32xbf16>
    %cst_53 = arith.constant dense<0.000000e+00> : vector<8x32xf32>
    %82 = tpu.matmul %79, %81, %cst_53 {dimension_numbers = #tpu.dot_dimension_numbers<[1], [0], [0], [1], [0, 0, 1, 1], [], []>} : vector<8x32xbf16>, vector<32x32xbf16>, vector<8x32xf32> -> vector<8x32xf32>
    %83 = arith.addf %78, %82 : vector<8x32xf32>
    %c0_54 = arith.constant 0 : index
    %c0_55 = arith.constant 0 : index
    %c0_56 = arith.constant 0 : index
    %84 = vector.load %arg13[%c0_54, %c0_55, %c0_56] : memref<2x1x32xf32, #tpu.memory_space<vmem>>, vector<1x1x32xf32>
    %85 = vector.shape_cast %84 : vector<1x1x32xf32> to vector<1x32xf32>
    %86 = vector.broadcast %85 : vector<1x32xf32> to vector<8x32xf32>
    %87 = arith.addf %83, %86 : vector<8x32xf32>
    %cst_57 = arith.constant dense<0.000000e+00> : vector<8xf32>
    %88 = vector.multi_reduction <add>, %87, %cst_57 [1] : vector<8x32xf32> to vector<8xf32>
    %89 = vector.shape_cast %88 : vector<8xf32> to vector<8x1xf32>
    %cst_58 = arith.constant 3.200000e+01 : f32
    %90 = vector.broadcast %cst_58 : f32 to vector<8x1xf32>
    %91 = arith.divf %89, %90 : vector<8x1xf32>
    %92 = vector.broadcast %91 : vector<8x1xf32> to vector<8x32xf32>
    %93 = arith.subf %87, %92 : vector<8x32xf32>
    %94 = arith.mulf %93, %93 : vector<8x32xf32>
    %cst_59 = arith.constant dense<0.000000e+00> : vector<8xf32>
    %95 = vector.multi_reduction <add>, %94, %cst_59 [1] : vector<8x32xf32> to vector<8xf32>
    %96 = vector.shape_cast %95 : vector<8xf32> to vector<8x1xf32>
    %cst_60 = arith.constant 3.200000e+01 : f32
    %97 = vector.broadcast %cst_60 : f32 to vector<8x1xf32>
    %98 = arith.divf %96, %97 : vector<8x1xf32>
    %99 = vector.broadcast %91 : vector<8x1xf32> to vector<8x32xf32>
    %100 = arith.subf %87, %99 : vector<8x32xf32>
    %cst_61 = arith.constant 9.99999974E-6 : f32
    %101 = vector.broadcast %cst_61 : f32 to vector<8x1xf32>
    %102 = arith.addf %98, %101 : vector<8x1xf32>
    %103 = math.rsqrt %102 : vector<8x1xf32>
    %104 = vector.broadcast %103 : vector<8x1xf32> to vector<8x32xf32>
    %105 = arith.mulf %100, %104 : vector<8x32xf32>
    %c1 = arith.constant 1 : index
    %c0_62 = arith.constant 0 : index
    %c0_63 = arith.constant 0 : index
    %106 = vector.load %arg4[%c1, %c0_62, %c0_63] : memref<2x1x32xf32, #tpu.memory_space<vmem>>, vector<1x1x32xf32>
    %107 = vector.shape_cast %106 : vector<1x1x32xf32> to vector<1x32xf32>
    %108 = vector.broadcast %107 : vector<1x32xf32> to vector<8x32xf32>
    %109 = arith.mulf %105, %108 : vector<8x32xf32>
    %c1_64 = arith.constant 1 : index
    %c0_65 = arith.constant 0 : index
    %c0_66 = arith.constant 0 : index
    %110 = vector.load %arg5[%c1_64, %c0_65, %c0_66] : memref<2x1x32xf32, #tpu.memory_space<vmem>>, vector<1x1x32xf32>
    %111 = vector.shape_cast %110 : vector<1x1x32xf32> to vector<1x32xf32>
    %112 = vector.broadcast %111 : vector<1x32xf32> to vector<8x32xf32>
    %113 = arith.addf %109, %112 : vector<8x32xf32>
    %114 = arith.truncf %113 : vector<8x32xf32> to vector<8x32xbf16>
    %115 = vector.shape_cast %114 : vector<8x32xbf16> to vector<1x8x32xbf16>
    %116 = vector.broadcast %115 : vector<1x8x32xbf16> to vector<4x8x32xbf16>
    %c1_67 = arith.constant 1 : index
    %c0_68 = arith.constant 0 : index
    %c0_69 = arith.constant 0 : index
    %c0_70 = arith.constant 0 : index
    %117 = vector.load %arg6[%c1_67, %c0_68, %c0_69, %c0_70] : memref<2x4x32x8xbf16, #tpu.memory_space<vmem>>, vector<1x4x32x8xbf16>
    %118 = vector.shape_cast %117 : vector<1x4x32x8xbf16> to vector<4x32x8xbf16>
    "tpu.trace_start"() <{level = 10 : i32, message = "hnc,hcd->hnd"}> : () -> ()
    %cst_71 = arith.constant dense<0.000000e+00> : vector<4x8x8xf32>
    %119 = tpu.matmul %116, %118, %cst_71 {dimension_numbers = #tpu.dot_dimension_numbers<[2], [1], [1], [2], [0, 0, 0, 1, 1, 2], [0], [0]>} : vector<4x8x32xbf16>, vector<4x32x8xbf16>, vector<4x8x8xf32> -> vector<4x8x8xf32>
    "tpu.trace_stop"() : () -> ()
    %c1_72 = arith.constant 1 : index
    %c0_73 = arith.constant 0 : index
    %c0_74 = arith.constant 0 : index
    %120 = vector.load %arg9[%c1_72, %c0_73, %c0_74] : memref<2x8x8xbf16, #tpu.memory_space<vmem>>, vector<1x8x8xbf16>
    %121 = vector.shape_cast %120 : vector<1x8x8xbf16> to vector<8x8xbf16>
    %cst_75 = arith.constant dense<0.000000e+00> : vector<8x32xf32>
    %122 = tpu.matmul %121, %114, %cst_75 {dimension_numbers = #tpu.dot_dimension_numbers<[1], [0], [0], [1], [0, 0, 1, 1], [], []>} : vector<8x8xbf16>, vector<8x32xbf16>, vector<8x32xf32> -> vector<8x32xf32>
    %c1_76 = arith.constant 1 : index
    %c0_77 = arith.constant 0 : index
    %c0_78 = arith.constant 0 : index
    %123 = vector.load %arg10[%c1_76, %c0_77, %c0_78] : memref<2x8x8xbf16, #tpu.memory_space<vmem>>, vector<1x8x8xbf16>
    %124 = vector.shape_cast %123 : vector<1x8x8xbf16> to vector<8x8xbf16>
    %cst_79 = arith.constant dense<0.000000e+00> : vector<8x32xf32>
    %125 = tpu.matmul %124, %114, %cst_79 {dimension_numbers = #tpu.dot_dimension_numbers<[1], [0], [0], [1], [0, 0, 1, 1], [], []>} : vector<8x8xbf16>, vector<8x32xbf16>, vector<8x32xf32> -> vector<8x32xf32>
    %126 = arith.truncf %122 : vector<8x32xf32> to vector<8x32xbf16>
    %127 = vector.shape_cast %126 : vector<8x32xbf16> to vector<1x8x32xbf16>
    %128 = vector.broadcast %127 : vector<1x8x32xbf16> to vector<4x8x32xbf16>
    %c1_80 = arith.constant 1 : index
    %c0_81 = arith.constant 0 : index
    %c0_82 = arith.constant 0 : index
    %c0_83 = arith.constant 0 : index
    %129 = vector.load %arg7[%c1_80, %c0_81, %c0_82, %c0_83] : memref<2x4x32x8xbf16, #tpu.memory_space<vmem>>, vector<1x4x32x8xbf16>
    %130 = vector.shape_cast %129 : vector<1x4x32x8xbf16> to vector<4x32x8xbf16>
    "tpu.trace_start"() <{level = 10 : i32, message = "hpc,hcd->hpd"}> : () -> ()
    %cst_84 = arith.constant dense<0.000000e+00> : vector<4x8x8xf32>
    %131 = tpu.matmul %128, %130, %cst_84 {dimension_numbers = #tpu.dot_dimension_numbers<[2], [1], [1], [2], [0, 0, 0, 1, 1, 2], [0], [0]>} : vector<4x8x32xbf16>, vector<4x32x8xbf16>, vector<4x8x8xf32> -> vector<4x8x8xf32>
    "tpu.trace_stop"() : () -> ()
    %132 = arith.truncf %125 : vector<8x32xf32> to vector<8x32xbf16>
    %133 = vector.shape_cast %132 : vector<8x32xbf16> to vector<1x8x32xbf16>
    %134 = vector.broadcast %133 : vector<1x8x32xbf16> to vector<4x8x32xbf16>
    %c1_85 = arith.constant 1 : index
    %c0_86 = arith.constant 0 : index
    %c0_87 = arith.constant 0 : index
    %c0_88 = arith.constant 0 : index
    %135 = vector.load %arg8[%c1_85, %c0_86, %c0_87, %c0_88] : memref<2x4x32x8xbf16, #tpu.memory_space<vmem>>, vector<1x4x32x8xbf16>
    %136 = vector.shape_cast %135 : vector<1x4x32x8xbf16> to vector<4x32x8xbf16>
    "tpu.trace_start"() <{level = 10 : i32, message = "hpc,hcd->hpd"}> : () -> ()
    %cst_89 = arith.constant dense<0.000000e+00> : vector<4x8x8xf32>
    %137 = tpu.matmul %134, %136, %cst_89 {dimension_numbers = #tpu.dot_dimension_numbers<[2], [1], [1], [2], [0, 0, 0, 1, 1, 2], [0], [0]>} : vector<4x8x32xbf16>, vector<4x32x8xbf16>, vector<4x8x8xf32> -> vector<4x8x8xf32>
    "tpu.trace_stop"() : () -> ()
    %138 = arith.truncf %119 : vector<4x8x8xf32> to vector<4x8x8xbf16>
    %139 = arith.truncf %131 : vector<4x8x8xf32> to vector<4x8x8xbf16>
    "tpu.trace_start"() <{level = 10 : i32, message = "hnd,hpd->hnp"}> : () -> ()
    %cst_90 = arith.constant dense<0.000000e+00> : vector<4x8x8xf32>
    %140 = tpu.matmul %138, %139, %cst_90 {dimension_numbers = #tpu.dot_dimension_numbers<[2], [2], [1], [1], [0, 0, 0, 1, 1, 1], [0], [0]>} : vector<4x8x8xbf16>, vector<4x8x8xbf16>, vector<4x8x8xf32> -> vector<4x8x8xf32>
    "tpu.trace_stop"() : () -> ()
    %cst_91 = arith.constant dense<0xFF800000> : vector<4x8xf32>
    %141 = vector.multi_reduction <maximumf>, %140, %cst_91 [2] : vector<4x8x8xf32> to vector<4x8xf32>
    %142 = vector.shape_cast %141 : vector<4x8xf32> to vector<4x8x1xf32>
    %143 = vector.broadcast %142 : vector<4x8x1xf32> to vector<4x8x8xf32>
    %144 = arith.subf %140, %143 : vector<4x8x8xf32>
    %145 = math.exp %144 : vector<4x8x8xf32>
    %cst_92 = arith.constant dense<0.000000e+00> : vector<4x8xf32>
    %146 = vector.multi_reduction <add>, %145, %cst_92 [2] : vector<4x8x8xf32> to vector<4x8xf32>
    %147 = vector.shape_cast %146 : vector<4x8xf32> to vector<4x8x1xf32>
    %148 = tpu.reciprocal %147 {approx = true} : vector<4x8x1xf32> -> vector<4x8x1xf32>
    %149 = vector.broadcast %148 : vector<4x8x1xf32> to vector<4x8x8xf32>
    %150 = arith.mulf %145, %149 : vector<4x8x8xf32>
    %151 = arith.truncf %150 : vector<4x8x8xf32> to vector<4x8x8xbf16>
    %152 = arith.truncf %137 : vector<4x8x8xf32> to vector<4x8x8xbf16>
    "tpu.trace_start"() <{level = 10 : i32, message = "hnp,hpd->hnd"}> : () -> ()
    %cst_93 = arith.constant dense<0.000000e+00> : vector<4x8x8xf32>
    %153 = tpu.matmul %151, %152, %cst_93 {dimension_numbers = #tpu.dot_dimension_numbers<[2], [1], [1], [2], [0, 0, 0, 1, 1, 2], [0], [0]>} : vector<4x8x8xbf16>, vector<4x8x8xbf16>, vector<4x8x8xf32> -> vector<4x8x8xf32>
    "tpu.trace_stop"() : () -> ()
    %154 = arith.truncf %153 : vector<4x8x8xf32> to vector<4x8x8xbf16>
    %c1_94 = arith.constant 1 : index
    %c0_95 = arith.constant 0 : index
    %c0_96 = arith.constant 0 : index
    %c0_97 = arith.constant 0 : index
    %155 = vector.load %arg11[%c1_94, %c0_95, %c0_96, %c0_97] : memref<2x4x8x32xbf16, #tpu.memory_space<vmem>>, vector<1x4x8x32xbf16>
    %156 = vector.shape_cast %155 : vector<1x4x8x32xbf16> to vector<4x8x32xbf16>
    "tpu.trace_start"() <{level = 10 : i32, message = "hnd,hdc->hnc"}> : () -> ()
    %cst_98 = arith.constant dense<0.000000e+00> : vector<4x8x32xf32>
    %157 = tpu.matmul %154, %156, %cst_98 {dimension_numbers = #tpu.dot_dimension_numbers<[2], [1], [1], [2], [0, 0, 0, 1, 1, 2], [0], [0]>} : vector<4x8x8xbf16>, vector<4x8x32xbf16>, vector<4x8x32xf32> -> vector<4x8x32xf32>
    "tpu.trace_stop"() : () -> ()
    %cst_99 = arith.constant dense<0.000000e+00> : vector<8x32xf32>
    %158 = vector.multi_reduction <add>, %157, %cst_99 [0] : vector<4x8x32xf32> to vector<8x32xf32>
    %159 = arith.addf %87, %158 : vector<8x32xf32>
    %160 = arith.truncf %159 : vector<8x32xf32> to vector<8x32xbf16>
    %c1_100 = arith.constant 1 : index
    %c0_101 = arith.constant 0 : index
    %c0_102 = arith.constant 0 : index
    %161 = vector.load %arg12[%c1_100, %c0_101, %c0_102] : memref<2x32x32xbf16, #tpu.memory_space<vmem>>, vector<1x32x32xbf16>
    %162 = vector.shape_cast %161 : vector<1x32x32xbf16> to vector<32x32xbf16>
    %cst_103 = arith.constant dense<0.000000e+00> : vector<8x32xf32>
    %163 = tpu.matmul %160, %162, %cst_103 {dimension_numbers = #tpu.dot_dimension_numbers<[1], [0], [0], [1], [0, 0, 1, 1], [], []>} : vector<8x32xbf16>, vector<32x32xbf16>, vector<8x32xf32> -> vector<8x32xf32>
    %164 = arith.addf %159, %163 : vector<8x32xf32>
    %c1_104 = arith.constant 1 : index
    %c0_105 = arith.constant 0 : index
    %c0_106 = arith.constant 0 : index
    %165 = vector.load %arg13[%c1_104, %c0_105, %c0_106] : memref<2x1x32xf32, #tpu.memory_space<vmem>>, vector<1x1x32xf32>
    %166 = vector.shape_cast %165 : vector<1x1x32xf32> to vector<1x32xf32>
    %167 = vector.broadcast %166 : vector<1x32xf32> to vector<8x32xf32>
    %168 = arith.addf %164, %167 : vector<8x32xf32>
    %c0_107 = arith.constant 0 : index
    %c0_108 = arith.constant 0 : index
    %c0_109 = arith.constant 0 : index
    %169 = vector.load %arg14[%c0_107, %c0_108, %c0_109] : memref<1x8x32xf32, #tpu.memory_space<vmem>>, vector<1x8x32xf32>
    %170 = vector.shape_cast %169 : vector<1x8x32xf32> to vector<8x32xf32>
    %171 = vector.shape_cast %168 : vector<8x32xf32> to vector<1x8x32xf32>
    tpu.vector_store %arg14[%c0_107, %c0_108, %c0_109], %171 {strides = array<i32>} : memref<1x8x32xf32, #tpu.memory_space<vmem>>, vector<1x8x32xf32>,
    return
  }
  func.func @transform_0(%arg0: i32) -> (i32, i32, i32) {
    %c0_i32 = arith.constant 0 : i32
    %c0_i32_0 = arith.constant 0 : i32
    %c0_i32_1 = arith.constant 0 : i32
    return %arg0, %c0_i32, %c0_i32_0 : i32, i32, i32
  }
  func.func @transform_1(%arg0: i32) -> (i32, i32) {
    %c0_i32 = arith.constant 0 : i32
    %c0_i32_0 = arith.constant 0 : i32
    %c0_i32_1 = arith.constant 0 : i32
    return %c0_i32, %c0_i32_0 : i32, i32
  }
  func.func @transform_2(%arg0: i32) -> (i32, i32) {
    %c0_i32 = arith.constant 0 : i32
    %c0_i32_0 = arith.constant 0 : i32
    %c0_i32_1 = arith.constant 0 : i32
    return %c0_i32, %c0_i32_0 : i32, i32
  }
  func.func @transform_3(%arg0: i32) -> (i32, i32, i32) {
    %c0_i32 = arith.constant 0 : i32
    %c0_i32_0 = arith.constant 0 : i32
    %c0_i32_1 = arith.constant 0 : i32
    %c0_i32_2 = arith.constant 0 : i32
    return %c0_i32, %c0_i32_0, %c0_i32_1 : i32, i32, i32
  }
  func.func @transform_4(%arg0: i32) -> (i32, i32, i32) {
    %c0_i32 = arith.constant 0 : i32
    %c0_i32_0 = arith.constant 0 : i32
    %c0_i32_1 = arith.constant 0 : i32
    %c0_i32_2 = arith.constant 0 : i32
    return %c0_i32, %c0_i32_0, %c0_i32_1 : i32, i32, i32
  }
  func.func @transform_5(%arg0: i32) -> (i32, i32, i32, i32) {
    %c0_i32 = arith.constant 0 : i32
    %c0_i32_0 = arith.constant 0 : i32
    %c0_i32_1 = arith.constant 0 : i32
    %c0_i32_2 = arith.constant 0 : i32
    %c0_i32_3 = arith.constant 0 : i32
    return %c0_i32, %c0_i32_0, %c0_i32_1, %c0_i32_2 : i32, i32, i32, i32
  }
  func.func @transform_6(%arg0: i32) -> (i32, i32, i32, i32) {
    %c0_i32 = arith.constant 0 : i32
    %c0_i32_0 = arith.constant 0 : i32
    %c0_i32_1 = arith.constant 0 : i32
    %c0_i32_2 = arith.constant 0 : i32
    %c0_i32_3 = arith.constant 0 : i32
    return %c0_i32, %c0_i32_0, %c0_i32_1, %c0_i32_2 : i32, i32, i32, i32
  }
  func.func @transform_7(%arg0: i32) -> (i32, i32, i32, i32) {
    %c0_i32 = arith.constant 0 : i32
    %c0_i32_0 = arith.constant 0 : i32
    %c0_i32_1 = arith.constant 0 : i32
    %c0_i32_2 = arith.constant 0 : i32
    %c0_i32_3 = arith.constant 0 : i32
    return %c0_i32, %c0_i32_0, %c0_i32_1, %c0_i32_2 : i32, i32, i32, i32
  }
  func.func @transform_8(%arg0: i32) -> (i32, i32, i32) {
    %c0_i32 = arith.constant 0 : i32
    %c0_i32_0 = arith.constant 0 : i32
    %c0_i32_1 = arith.constant 0 : i32
    %c0_i32_2 = arith.constant 0 : i32
    return %c0_i32, %c0_i32_0, %c0_i32_1 : i32, i32, i32
  }
  func.func @transform_9(%arg0: i32) -> (i32, i32, i32) {
    %c0_i32 = arith.constant 0 : i32
    %c0_i32_0 = arith.constant 0 : i32
    %c0_i32_1 = arith.constant 0 : i32
    %c0_i32_2 = arith.constant 0 : i32
    return %c0_i32, %c0_i32_0, %c0_i32_1 : i32, i32, i32
  }
  func.func @transform_10(%arg0: i32) -> (i32, i32, i32, i32) {
    %c0_i32 = arith.constant 0 : i32
    %c0_i32_0 = arith.constant 0 : i32
    %c0_i32_1 = arith.constant 0 : i32
    %c0_i32_2 = arith.constant 0 : i32
    %c0_i32_3 = arith.constant 0 : i32
    return %c0_i32, %c0_i32_0, %c0_i32_1, %c0_i32_2 : i32, i32, i32, i32
  }
  func.func @transform_11(%arg0: i32) -> (i32, i32, i32) {
    %c0_i32 = arith.constant 0 : i32
    %c0_i32_0 = arith.constant 0 : i32
    %c0_i32_1 = arith.constant 0 : i32
    %c0_i32_2 = arith.constant 0 : i32
    return %c0_i32, %c0_i32_0, %c0_i32_1 : i32, i32, i32
  }
  func.func @transform_12(%arg0: i32) -> (i32, i32, i32) {
    %c0_i32 = arith.constant 0 : i32
    %c0_i32_0 = arith.constant 0 : i32
    %c0_i32_1 = arith.constant 0 : i32
    %c0_i32_2 = arith.constant 0 : i32
    return %c0_i32, %c0_i32_0, %c0_i32_1 : i32, i32, i32
  }
  func.func @transform_13(%arg0: i32) -> (i32, i32, i32) {
    %c0_i32 = arith.constant 0 : i32
    %c0_i32_0 = arith.constant 0 : i32
    %c0_i32_1 = arith.constant 0 : i32
    return %arg0, %c0_i32, %c0_i32_0 : i32, i32, i32
  }
}

</mosaic_0001>

<llo_original>
// kernel: hybrid_encoder_forward.2
$region0: #{hybrid_encoder_forward.2}
  #allocation0 [shape = 'u32[]', space=smem, size = 0x4, offset = 0x4, fixed_abs, tag = 'smem constant byte address 0x4 - core index']
  #allocation1 [shape = 'u32[72,128]{1,0:T(1,128)}', space=vmem, size = 0x9000, scoped, tag = 'internal scratch']
  %s0 = inlined_call_operand.vmem [shape: bf16[2,64,32], index: 0, kind: input, shape index: {}]
  %s1 = inlined_call_operand.vmem [shape: bf16[32,16], index: 1, kind: input, shape index: {}]
  %s2 = inlined_call_operand.vmem [shape: f32[1,16], index: 2, kind: input, shape index: {}]
  %s3 = inlined_call_operand.vmem [shape: f32[1,1,16], index: 3, kind: input, shape index: {}]
  %s4 = inlined_call_operand.vmem [shape: f32[1,1,16], index: 4, kind: input, shape index: {}]
  %s5 = inlined_call_operand.vmem [shape: bf16[1,2,16,8], index: 5, kind: input, shape index: {}]
  %s6 = inlined_call_operand.vmem [shape: bf16[1,2,16,8], index: 6, kind: input, shape index: {}]
  %s7 = inlined_call_operand.vmem [shape: bf16[1,2,16,8], index: 7, kind: input, shape index: {}]
  %s8 = inlined_call_operand.vmem [shape: bf16[1,32,64], index: 8, kind: input, shape index: {}]
  %s9 = inlined_call_operand.vmem [shape: bf16[1,32,64], index: 9, kind: input, shape index: {}]
  %s10 = inlined_call_operand.vmem [shape: bf16[1,2,8,16], index: 10, kind: input, shape index: {}]
  %s11 = inlined_call_operand.vmem [shape: bf16[1,16,16], index: 11, kind: input, shape index: {}]
  %s12 = inlined_call_operand.vmem [shape: f32[1,1,16], index: 12, kind: input, shape index: {}]
  %s13 = inlined_call_operand.vmem [shape: f32[2,64,16], index: 13, kind: output, shape index: {}]
  %s14 = sld [smem:[#allocation0]]
  $region85: #{hybrid_encoder_forward.2} parent=0
    _
  %s16 = ssub.s32 1, %s14
  %s17 = scalar_select 0, %s16, %s14
  loop: start=0, step=1, limit=4
  $region2: #{hybrid_encoder_forward.2} parent=0 // loop_pre_header
    _
  $region3: #{hybrid_encoder_forward.2} parent=0 // loop_header
    %s19 = sphi 0, %s23
    %p20 = scmp.ge.s32.totalorder %s19, 4
    %s29 = sphi 0, %s31
    %s32 = sphi 0, %s29
    %s33 = sphi 0, %s32
    %s49 = sphi 0, %s33
    %s53 = sphi 0, %s53
    %s55 = sphi 0, %s53
    %s56 = sphi 0, %s55
    %s70 = sphi 0, %s56
    %s74 = sphi 0, %s74
    %s76 = sphi 0, %s74
    %s77 = sphi 0, %s76
    %s91 = sphi 0, %s77
    %s95 = sphi 0, %s95
    %s97 = sphi 0, %s95
    %s98 = sphi 0, %s97
    %s112 = sphi 0, %s98
    %s116 = sphi 0, %s116
    %s118 = sphi 0, %s116
    %s119 = sphi 0, %s118
    %s133 = sphi 0, %s119
    %s137 = sphi 0, %s137
    %s139 = sphi 0, %s137
    %s140 = sphi 0, %s139
    %s154 = sphi 0, %s140
    %s158 = sphi 0, %s158
    %s160 = sphi 0, %s158
    %s161 = sphi 0, %s160
    %s175 = sphi 0, %s161
    %s179 = sphi 0, %s179
    %s181 = sphi 0, %s179
    %s182 = sphi 0, %s181
    %s196 = sphi 0, %s182
    %s200 = sphi 0, %s200
    %s202 = sphi 0, %s200
    %s203 = sphi 0, %s202
    %s217 = sphi 0, %s203
    %s221 = sphi 0, %s221
    %s223 = sphi 0, %s221
    %s224 = sphi 0, %s223
    %s238 = sphi 0, %s224
    %s242 = sphi 0, %s242
    %s244 = sphi 0, %s242
    %s245 = sphi 0, %s244
    %s259 = sphi 0, %s245
    %s263 = sphi 0, %s263
    %s265 = sphi 0, %s263
    %s266 = sphi 0, %s265
    %s280 = sphi 0, %s266
    %s284 = sphi 0, %s284
    %s286 = sphi 0, %s284
    %s287 = sphi 0, %s286
    %s301 = sphi 0, %s287
    %s307 = sphi 0, %s309
    %s310 = sphi 0, %s307
    %s311 = sphi 0, %s310
    %s327 = sphi 0, %s311
  $region4: #{hybrid_encoder_forward.2} parent=0 // loop_header_branch
    %22 = sbr.rel (%p20) target = $region8
  $region5: #{hybrid_encoder_forward.2} parent=0 // loop_body
    %s24 = ssub.s32 %s19, 1
    %s25 = ssub.s32 %s19, 2
    %s26 = sadd.s32 %s19, 1
    %s27 = ssub.s32 %s19, %s26
    %p28 = scmp.eq.s32.totalorder %s27, 0
    %s30 = sadd.s32 %s29, 1
    %s31 = scalar_select %p28, %s29, %s30
    %p34 = pneg %p28
    %p35 = scmp.eq.s32.totalorder %s19, 1
    %p36 = por %p34, %p35
    %p37 = scmp.ne.s32.totalorder %s29, %s32
    %p38 = scmp.eq.s32.totalorder %s19, 0
    %p39 = por %p37, %p38
    %p40 = scmp.ne.s32.totalorder %s29, %s32
    %p41 = scmp.eq.s32.totalorder %s24, 1
    %p42 = por %p40, %p41
    %p43 = scmp.ne.s32.totalorder %s32, %s33
    %p44 = scmp.eq.s32.totalorder %s24, 0
    %p45 = por %p43, %p44
    %p46 = scmp.ne.s32.totalorder %s32, %s33
    %p47 = scmp.eq.s32.totalorder %s25, 1
    %p48 = por %p46, %p47
    %p50 = scmp.ne.s32.totalorder %s33, %s49
    %p51 = scmp.eq.s32.totalorder %s25, 0
    %p52 = por %p50, %p51
    %s54 = sadd.s32 %s53, 1
    %p57 = scmp.eq.s32.totalorder %s19, 1
    %p58 = scmp.ne.s32.totalorder %s53, %s55
    %p59 = scmp.eq.s32.totalorder %s19, 0
    %p60 = por %p58, %p59
    %p61 = scmp.ne.s32.totalorder %s53, %s55
    %p62 = scmp.eq.s32.totalorder %s24, 1
    %p63 = por %p61, %p62
    %p64 = scmp.ne.s32.totalorder %s55, %s56
    %p65 = scmp.eq.s32.totalorder %s24, 0
    %p66 = por %p64, %p65
    %p67 = scmp.ne.s32.totalorder %s55, %s56
    %p68 = scmp.eq.s32.totalorder %s25, 1
    %p69 = por %p67, %p68
    %p71 = scmp.ne.s32.totalorder %s56, %s70
    %p72 = scmp.eq.s32.totalorder %s25, 0
    %p73 = por %p71, %p72
    %s75 = sadd.s32 %s74, 1
    %p78 = scmp.eq.s32.totalorder %s19, 1
    %p79 = scmp.ne.s32.totalorder %s74, %s76
    %p80 = scmp.eq.s32.totalorder %s19, 0
    %p81 = por %p79, %p80
    %p82 = scmp.ne.s32.totalorder %s74, %s76
    %p83 = scmp.eq.s32.totalorder %s24, 1
    %p84 = por %p82, %p83
    %p85 = scmp.ne.s32.totalorder %s76, %s77
    %p86 = scmp.eq.s32.totalorder %s24, 0
    %p87 = por %p85, %p86
    %p88 = scmp.ne.s32.totalorder %s76, %s77
    %p89 = scmp.eq.s32.totalorder %s25, 1
    %p90 = por %p88, %p89
    %p92 = scmp.ne.s32.totalorder %s77, %s91
    %p93 = scmp.eq.s32.totalorder %s25, 0
    %p94 = por %p92, %p93
    %s96 = sadd.s32 %s95, 1
    %p99 = scmp.eq.s32.totalorder %s19, 1
    %p100 = scmp.ne.s32.totalorder %s95, %s97
    %p101 = scmp.eq.s32.totalorder %s19, 0
    %p102 = por %p100, %p101
    %p103 = scmp.ne.s32.totalorder %s95, %s97
    %p104 = scmp.eq.s32.totalorder %s24, 1
    %p105 = por %p103, %p104
    %p106 = scmp.ne.s32.totalorder %s97, %s98
    %p107 = scmp.eq.s32.totalorder %s24, 0
    %p108 = por %p106, %p107
    %p109 = scmp.ne.s32.totalorder %s97, %s98
    %p110 = scmp.eq.s32.totalorder %s25, 1
    %p111 = por %p109, %p110
    %p113 = scmp.ne.s32.totalorder %s98, %s112
    %p114 = scmp.eq.s32.totalorder %s25, 0
    %p115 = por %p113, %p114
    %s117 = sadd.s32 %s116, 1
    %p120 = scmp.eq.s32.totalorder %s19, 1
    %p121 = scmp.ne.s32.totalorder %s116, %s118
    %p122 = scmp.eq.s32.totalorder %s19, 0
    %p123 = por %p121, %p122
    %p124 = scmp.ne.s32.totalorder %s116, %s118
    %p125 = scmp.eq.s32.totalorder %s24, 1
    %p126 = por %p124, %p125
    %p127 = scmp.ne.s32.totalorder %s118, %s119
    %p128 = scmp.eq.s32.totalorder %s24, 0
    %p129 = por %p127, %p128
    %p130 = scmp.ne.s32.totalorder %s118, %s119
    %p131 = scmp.eq.s32.totalorder %s25, 1
    %p132 = por %p130, %p131
    %p134 = scmp.ne.s32.totalorder %s119, %s133
    %p135 = scmp.eq.s32.totalorder %s25, 0
    %p136 = por %p134, %p135
    %s138 = sadd.s32 %s137, 1
    %p141 = scmp.eq.s32.totalorder %s19, 1
    %p142 = scmp.ne.s32.totalorder %s137, %s139
    %p143 = scmp.eq.s32.totalorder %s19, 0
    %p144 = por %p142, %p143
    %p145 = scmp.ne.s32.totalorder %s137, %s139
    %p146 = scmp.eq.s32.totalorder %s24, 1
    %p147 = por %p145, %p146
    %p148 = scmp.ne.s32.totalorder %s139, %s140
    %p149 = scmp.eq.s32.totalorder %s24, 0
    %p150 = por %p148, %p149
    %p151 = scmp.ne.s32.totalorder %s139, %s140
    %p152 = scmp.eq.s32.totalorder %s25, 1
    %p153 = por %p151, %p152
    %p155 = scmp.ne.s32.totalorder %s140, %s154
    %p156 = scmp.eq.s32.totalorder %s25, 0
    %p157 = por %p155, %p156
    %s159 = sadd.s32 %s158, 1
    %p162 = scmp.eq.s32.totalorder %s19, 1
    %p163 = scmp.ne.s32.totalorder %s158, %s160
    %p164 = scmp.eq.s32.totalorder %s19, 0
    %p165 = por %p163, %p164
    %p166 = scmp.ne.s32.totalorder %s158, %s160
    %p167 = scmp.eq.s32.totalorder %s24, 1
    %p168 = por %p166, %p167
    %p169 = scmp.ne.s32.totalorder %s160, %s161
    %p170 = scmp.eq.s32.totalorder %s24, 0
    %p171 = por %p169, %p170
    %p172 = scmp.ne.s32.totalorder %s160, %s161
    %p173 = scmp.eq.s32.totalorder %s25, 1
    %p174 = por %p172, %p173
    %p176 = scmp.ne.s32.totalorder %s161, %s175
    %p177 = scmp.eq.s32.totalorder %s25, 0
    %p178 = por %p176, %p177
    %s180 = sadd.s32 %s179, 1
    %p183 = scmp.eq.s32.totalorder %s19, 1
    %p184 = scmp.ne.s32.totalorder %s179, %s181
    %p185 = scmp.eq.s32.totalorder %s19, 0
    %p186 = por %p184, %p185
    %p187 = scmp.ne.s32.totalorder %s179, %s181
    %p188 = scmp.eq.s32.totalorder %s24, 1
    %p189 = por %p187, %p188
    %p190 = scmp.ne.s32.totalorder %s181, %s182
    %p191 = scmp.eq.s32.totalorder %s24, 0
    %p192 = por %p190, %p191
    %p193 = scmp.ne.s32.totalorder %s181, %s182
    %p194 = scmp.eq.s32.totalorder %s25, 1
    %p195 = por %p193, %p194
    %p197 = scmp.ne.s32.totalorder %s182, %s196
    %p198 = scmp.eq.s32.totalorder %s25, 0
    %p199 = por %p197, %p198
    %s201 = sadd.s32 %s200, 1
    %p204 = scmp.eq.s32.totalorder %s19, 1
    %p205 = scmp.ne.s32.totalorder %s200, %s202
    %p206 = scmp.eq.s32.totalorder %s19, 0
    %p207 = por %p205, %p206
    %p208 = scmp.ne.s32.totalorder %s200, %s202
    %p209 = scmp.eq.s32.totalorder %s24, 1
    %p210 = por %p208, %p209
    %p211 = scmp.ne.s32.totalorder %s202, %s203
    %p212 = scmp.eq.s32.totalorder %s24, 0
    %p213 = por %p211, %p212
    %p214 = scmp.ne.s32.totalorder %s202, %s203
    %p215 = scmp.eq.s32.totalorder %s25, 1
    %p216 = por %p214, %p215
    %p218 = scmp.ne.s32.totalorder %s203, %s217
    %p219 = scmp.eq.s32.totalorder %s25, 0
    %p220 = por %p218, %p219
    %s222 = sadd.s32 %s221, 1
    %p225 = scmp.eq.s32.totalorder %s19, 1
    %p226 = scmp.ne.s32.totalorder %s221, %s223
    %p227 = scmp.eq.s32.totalorder %s19, 0
    %p228 = por %p226, %p227
    %p229 = scmp.ne.s32.totalorder %s221, %s223
    %p230 = scmp.eq.s32.totalorder %s24, 1
    %p231 = por %p229, %p230
    %p232 = scmp.ne.s32.totalorder %s223, %s224
    %p233 = scmp.eq.s32.totalorder %s24, 0
    %p234 = por %p232, %p233
    %p235 = scmp.ne.s32.totalorder %s223, %s224
    %p236 = scmp.eq.s32.totalorder %s25, 1
    %p237 = por %p235, %p236
    %p239 = scmp.ne.s32.totalorder %s224, %s238
    %p240 = scmp.eq.s32.totalorder %s25, 0
    %p241 = por %p239, %p240
    %s243 = sadd.s32 %s242, 1
    %p246 = scmp.eq.s32.totalorder %s19, 1
    %p247 = scmp.ne.s32.totalorder %s242, %s244
    %p248 = scmp.eq.s32.totalorder %s19, 0
    %p249 = por %p247, %p248
    %p250 = scmp.ne.s32.totalorder %s242, %s244
    %p251 = scmp.eq.s32.totalorder %s24, 1
    %p252 = por %p250, %p251
    %p253 = scmp.ne.s32.totalorder %s244, %s245
    %p254 = scmp.eq.s32.totalorder %s24, 0
    %p255 = por %p253, %p254
    %p256 = scmp.ne.s32.totalorder %s244, %s245
    %p257 = scmp.eq.s32.totalorder %s25, 1
    %p258 = por %p256, %p257
    %p260 = scmp.ne.s32.totalorder %s245, %s259
    %p261 = scmp.eq.s32.totalorder %s25, 0
    %p262 = por %p260, %p261
    %s264 = sadd.s32 %s263, 1
    %p267 = scmp.eq.s32.totalorder %s19, 1
    %p268 = scmp.ne.s32.totalorder %s263, %s265
    %p269 = scmp.eq.s32.totalorder %s19, 0
    %p270 = por %p268, %p269
    %p271 = scmp.ne.s32.totalorder %s263, %s265
    %p272 = scmp.eq.s32.totalorder %s24, 1
    %p273 = por %p271, %p272
    %p274 = scmp.ne.s32.totalorder %s265, %s266
    %p275 = scmp.eq.s32.totalorder %s24, 0
    %p276 = por %p274, %p275
    %p277 = scmp.ne.s32.totalorder %s265, %s266
    %p278 = scmp.eq.s32.totalorder %s25, 1
    %p279 = por %p277, %p278
    %p281 = scmp.ne.s32.totalorder %s266, %s280
    %p282 = scmp.eq.s32.totalorder %s25, 0
    %p283 = por %p281, %p282
    %s285 = sadd.s32 %s284, 1
    %p288 = scmp.eq.s32.totalorder %s19, 1
    %p289 = scmp.ne.s32.totalorder %s284, %s286
    %p290 = scmp.eq.s32.totalorder %s19, 0
    %p291 = por %p289, %p290
    %p292 = scmp.ne.s32.totalorder %s284, %s286
    %p293 = scmp.eq.s32.totalorder %s24, 1
    %p294 = por %p292, %p293
    %p295 = scmp.ne.s32.totalorder %s286, %s287
    %p296 = scmp.eq.s32.totalorder %s24, 0
    %p297 = por %p295, %p296
    %p298 = scmp.ne.s32.totalorder %s286, %s287
    %p299 = scmp.eq.s32.totalorder %s25, 1
    %p300 = por %p298, %p299
    %p302 = scmp.ne.s32.totalorder %s287, %s301
    %p303 = scmp.eq.s32.totalorder %s25, 0
    %p304 = por %p302, %p303
    %s305 = ssub.s32 %s19, %s26
    %p306 = scmp.eq.s32.totalorder %s305, 0
    %s308 = sadd.s32 %s307, 1
    %s309 = scalar_select %p306, %s307, %s308
    %p312 = pneg %p306
    %p313 = scmp.eq.s32.totalorder %s19, 1
    %p314 = por %p312, %p313
    %p315 = scmp.ne.s32.totalorder %s307, %s310
    %p316 = scmp.eq.s32.totalorder %s19, 0
    %p317 = por %p315, %p316
    %p318 = scmp.ne.s32.totalorder %s307, %s310
    %p319 = scmp.eq.s32.totalorder %s24, 1
    %p320 = por %p318, %p319
    %p321 = scmp.ne.s32.totalorder %s310, %s311
    %p322 = scmp.eq.s32.totalorder %s24, 0
    %p323 = por %p321, %p322
    %p324 = scmp.ne.s32.totalorder %s310, %s311
    %p325 = scmp.eq.s32.totalorder %s25, 1
    %p326 = por %p324, %p325
    %p328 = scmp.ne.s32.totalorder %s311, %s327
    %p329 = scmp.eq.s32.totalorder %s25, 0
    %p330 = por %p328, %p329
    %p331 = scmp.le.s32.totalorder 1, %s19
    %p332 = scmp.lt.s32.totalorder %s19, 3
    %p333 = pnand %p331, %p332
    %p334 = pneg %p333
    // Predicated region
    $region9: #{hybrid_encoder_forward.2} parent=5 // pred_check
      _
    $region10: #{hybrid_encoder_forward.2} parent=5 // pred_check_branch
      %336 = sbr.rel (%p333) target = $region12
    $region11: #{hybrid_encoder_forward.2} parent=5 // pred_region
      %s337 = ssub.s32 %s19, 1
      // Predicated region
      $region13: #{hybrid_encoder_forward.2} parent=11 // pred_check
        %p338 = pneg %p66
      $region14: #{hybrid_encoder_forward.2} parent=11 // pred_check_branch
        %340 = sbr.rel (%p338) target = $region16
      $region15: #{hybrid_encoder_forward.2} parent=11 // pred_region
        _
      $region16: #{hybrid_encoder_forward.2} parent=11 // pred_fallthru
        _
      // Predicated region
      $region17: #{hybrid_encoder_forward.2} parent=11 // pred_check
        %p341 = pneg %p87
      $region18: #{hybrid_encoder_forward.2} parent=11 // pred_check_branch
        %343 = sbr.rel (%p341) target = $region20
      $region19: #{hybrid_encoder_forward.2} parent=11 // pred_region
        _
      $region20: #{hybrid_encoder_forward.2} parent=11 // pred_fallthru
        _
      // Predicated region
      $region21: #{hybrid_encoder_forward.2} parent=11 // pred_check
        %p344 = pneg %p108
      $region22: #{hybrid_encoder_forward.2} parent=11 // pred_check_branch
        %346 = sbr.rel (%p344) target = $region24
      $region23: #{hybrid_encoder_forward.2} parent=11 // pred_region
        _
      $region24: #{hybrid_encoder_forward.2} parent=11 // pred_fallthru
        _
      // Predicated region
      $region25: #{hybrid_encoder_forward.2} parent=11 // pred_check
        %p347 = pneg %p129
      $region26: #{hybrid_encoder_forward.2} parent=11 // pred_check_branch
        %349 = sbr.rel (%p347) target = $region28
      $region27: #{hybrid_encoder_forward.2} parent=11 // pred_region
        _
      $region28: #{hybrid_encoder_forward.2} parent=11 // pred_fallthru
        _
      // Predicated region
      $region29: #{hybrid_encoder_forward.2} parent=11 // pred_check
        %p350 = pneg %p150
      $region30: #{hybrid_encoder_forward.2} parent=11 // pred_check_branch
        %352 = sbr.rel (%p350) target = $region32
      $region31: #{hybrid_encoder_forward.2} parent=11 // pred_region
        _
      $region32: #{hybrid_encoder_forward.2} parent=11 // pred_fallthru
        _
      // Predicated region
      $region33: #{hybrid_encoder_forward.2} parent=11 // pred_check
        %p353 = pneg %p171
      $region34: #{hybrid_encoder_forward.2} parent=11 // pred_check_branch
        %355 = sbr.rel (%p353) target = $region36
      $region35: #{hybrid_encoder_forward.2} parent=11 // pred_region
        _
      $region36: #{hybrid_encoder_forward.2} parent=11 // pred_fallthru
        _
      // Predicated region
      $region37: #{hybrid_encoder_forward.2} parent=11 // pred_check
        %p356 = pneg %p192
      $region38: #{hybrid_encoder_forward.2} parent=11 // pred_check_branch
        %358 = sbr.rel (%p356) target = $region40
      $region39: #{hybrid_encoder_forward.2} parent=11 // pred_region
        _
      $region40: #{hybrid_encoder_forward.2} parent=11 // pred_fallthru
        _
      // Predicated region
      $region41: #{hybrid_encoder_forward.2} parent=11 // pred_check
        %p359 = pneg %p213
      $region42: #{hybrid_encoder_forward.2} parent=11 // pred_check_branch
        %361 = sbr.rel (%p359) target = $region44
      $region43: #{hybrid_encoder_forward.2} parent=11 // pred_region
        _
      $region44: #{hybrid_encoder_forward.2} parent=11 // pred_fallthru
        _
      // Predicated region
      $region45: #{hybrid_encoder_forward.2} parent=11 // pred_check
        %p362 = pneg %p234
      $region46: #{hybrid_encoder_forward.2} parent=11 // pred_check_branch
        %364 = sbr.rel (%p362) target = $region48
      $region47: #{hybrid_encoder_forward.2} parent=11 // pred_region
        _
      $region48: #{hybrid_encoder_forward.2} parent=11 // pred_fallthru
        _
      // Predicated region
      $region49: #{hybrid_encoder_forward.2} parent=11 // pred_check
        %p365 = pneg %p255
      $region50: #{hybrid_encoder_forward.2} parent=11 // pred_check_branch
        %367 = sbr.rel (%p365) target = $region52
      $region51: #{hybrid_encoder_forward.2} parent=11 // pred_region
        _
      $region52: #{hybrid_encoder_forward.2} parent=11 // pred_fallthru
        _
      // Predicated region
      $region53: #{hybrid_encoder_forward.2} parent=11 // pred_check
        %p368 = pneg %p276
      $region54: #{hybrid_encoder_forward.2} parent=11 // pred_check_branch
        %370 = sbr.rel (%p368) target = $region56
      $region55: #{hybrid_encoder_forward.2} parent=11 // pred_region
        _
      $region56: #{hybrid_encoder_forward.2} parent=11 // pred_fallthru
        _
      // Predicated region
      $region57: #{hybrid_encoder_forward.2} parent=11 // pred_check
        %p371 = pneg %p297
      $region58: #{hybrid_encoder_forward.2} parent=11 // pred_check_branch
        %373 = sbr.rel (%p371) target = $region60
      $region59: #{hybrid_encoder_forward.2} parent=11 // pred_region
        _
      $region60: #{hybrid_encoder_forward.2} parent=11 // pred_fallthru
        _
    $region12: #{hybrid_encoder_forward.2} parent=5 // pred_fallthru
      _
    %p374 = scmp.lt.s32.totalorder %s19, 2
    // Predicated region
    $region61: #{hybrid_encoder_forward.2} parent=5 // pred_check
      %p375 = pneg %p374
    $region62: #{hybrid_encoder_forward.2} parent=5 // pred_check_branch
      %377 = sbr.rel (%p375) target = $region64
    $region63: #{hybrid_encoder_forward.2} parent=5 // pred_region
      // Predicated region
      $region65: #{hybrid_encoder_forward.2} parent=63 // pred_check
        %p378 = pneg %p39
      $region66: #{hybrid_encoder_forward.2} parent=63 // pred_check_branch
        %380 = sbr.rel (%p378) target = $region68
      $region67: #{hybrid_encoder_forward.2} parent=63 // pred_region
        %p381 = scmp.lt.s32.totalorder %s19, 1
        %s382 = scalar_select %p381, %s19, 1
        %s383 = smul.addr %s382, 8
        %s384 = smul.addr %s383, 4
        %s385 = scalar_lea.vmem %s0, %s384
      $region68: #{hybrid_encoder_forward.2} parent=63 // pred_fallthru
        _
    $region64: #{hybrid_encoder_forward.2} parent=5 // pred_fallthru
      _
    %p386 = scmp.le.s32.totalorder 1, %s19
    %p387 = scmp.lt.s32.totalorder %s19, 3
    %p388 = pnand %p386, %p387
    %p389 = pneg %p388
    // Predicated region
    $region69: #{hybrid_encoder_forward.2} parent=5 // pred_check
      _
    $region70: #{hybrid_encoder_forward.2} parent=5 // pred_check_branch
      %391 = sbr.rel (%p388) target = $region72
    $region71: #{hybrid_encoder_forward.2} parent=5 // pred_region
      %s392 = ssub.s32 %s19, 1
      %p393 = scmp.lt.s32.totalorder %s24, 1
      %s394 = scalar_select %p393, %s24, 1
      %s395 = smul.addr %s394, 8
      %s396 = smul.addr %s395, 4
      %s397 = scalar_lea.vmem %s0, %s396
      %p398 = pneg %p45
      %p399 = pneg %p42
      %p400 = pneg %p66
      %p401 = pneg %p63
      %p402 = pneg %p87
      %p403 = pneg %p84
      %p404 = pneg %p108
      %p405 = pneg %p105
      %p406 = pneg %p129
      %p407 = pneg %p126
      %p408 = pneg %p150
      %p409 = pneg %p147
      %p410 = pneg %p171
      %p411 = pneg %p168
      %p412 = pneg %p192
      %p413 = pneg %p189
      %p414 = pneg %p213
      %p415 = pneg %p210
      %p416 = pneg %p234
      %p417 = pneg %p231
      %p418 = pneg %p255
      %p419 = pneg %p252
      %p420 = pneg %p276
      %p421 = pneg %p273
      %p422 = pneg %p297
      %p423 = pneg %p294
      %p424 = pneg %p323
      %p425 = pneg %p320
      %p426 = scmp.lt.s32.totalorder %s24, 1
      %s427 = scalar_select %p426, %s24, 1
      %s428 = smul.addr %s427, 8
      %s429 = smul.addr %s428, 8
      %s430 = scalar_lea.vmem %s13, %s429
      %p431 = scmp.lt.s32.totalorder %s24, 1
      %s432 = scalar_select %p431, %s24, 1
      %s433 = smul.addr %s432, 8
      %s434 = smul.addr %s433, 4
      %s435 = scalar_lea.vmem %s0, %s434
      %p436 = scmp.lt.s32.totalorder %s24, 1
      %s437 = scalar_select %p436, %s24, 1
      %s438 = smul.addr %s437, 8
      %s439 = smul.addr %s438, 8
      %s440 = scalar_lea.vmem %s13, %s439
      %v442 = vld [vmem:[%s435] sm:$0xf]
      %v443 = vld [vmem:[%s435 + $0x4] sm:$0xf]
      %v444 = vld [vmem:[%s435 + $0x8] sm:$0xf]
      %v445 = vld [vmem:[%s435 + $0xc] sm:$0xf]
      %v446 = vld [vmem:[%s435 + $0x10] sm:$0xf]
      %v447 = vld [vmem:[%s435 + $0x14] sm:$0xf]
      %v448 = vld [vmem:[%s435 + $0x18] sm:$0xf]
      %v449 = vld [vmem:[%s435 + $0x1c] sm:$0xf]
      %v450 = vld [vmem:[%s1] sm:$0xf]
      %v451 = vld [vmem:[%s1 + $0x4] sm:$0xf]
      %v452 = vld [vmem:[%s1 + $0x8] sm:$0xf]
      %v453 = vld [vmem:[%s1 + $0xc] sm:$0xf]
      %v454 = vld [vmem:[%s2] sm:$0x1]
      %v456 = vperm.slane %v454, 0
      %v466 = vunpack.c.l.b16 %v442
      %v467 = vunpack.c.l.b16 %v443
      %v468 = vunpack.c.l.b16 %v444
      %v469 = vunpack.c.l.b16 %v445
      %v470 = vunpack.c.l.b16 %v446
      %v471 = vunpack.c.l.b16 %v447
      %v472 = vunpack.c.l.b16 %v448
      %v473 = vunpack.c.l.b16 %v449
      %v474 = vpack.c.b16 %v467, %v466
      %v475 = vpack.c.b16 %v469, %v468
      %v476 = vpack.c.b16 %v471, %v470
      %v477 = vpack.c.b16 %v473, %v472
      %v482 = vunpack.c.l.b16 %v450
      %v483 = vunpack.c.l.b16 %v451
      %v484 = vunpack.c.l.b16 %v452
      %v485 = vunpack.c.l.b16 %v453
      %v486 = vpack.c.b16 %v483, %v482
      %v487 = vpack.c.b16 %v485, %v484
      %vm490 = vcmask 261120
      %v492 = vsel %vm490, %v474, 0
      %v495 = vsel %vm490, %v475, 0
      %v498 = vsel %vm490, %v476, 0
      %v501 = vsel %vm490, %v477, 0
      %503 = vmatpush.bf16.msra.mxu0 0
      %504 = vmatpush.bf16.msra.mxu0 0
      %505 = vmatpush.bf16.msra.mxu0 0
      %506 = vmatpush.bf16.msra.mxu0 0
      %507 = vmatpush.bf16.msra.mxu0 0
      %508 = vmatpush.bf16.msra.mxu0 0
      %509 = vmatpush.bf16.msra.mxu0 %v487
      %510 = vmatpush.bf16.msra.mxu0 %v486
      %511 = vmatmul.bf16.gmra.mxu0 %v492
      %v512 = vpop.f32.mrf.mxu0
      %v513 = vadd.f32 %v456, %v512
      %v514 = vpop.f32.mrf.mxu0
      %v515 = vadd.f32 %v456, %v514
      %516 = vmatmul.bf16.gmra.mxu0 %v495
      %v517 = vpop.f32.mrf.mxu0
      %v518 = vadd.f32 %v456, %v517
      %v519 = vpop.f32.mrf.mxu0
      %v520 = vadd.f32 %v456, %v519
      %521 = vmatmul.bf16.gmra.mxu0 %v498
      %v522 = vpop.f32.mrf.mxu0
      %v523 = vadd.f32 %v456, %v522
      %v524 = vpop.f32.mrf.mxu0
      %v525 = vadd.f32 %v456, %v524
      %526 = vmatmul.bf16.gmra.mxu0 %v501
      %v527 = vpop.f32.mrf.mxu0
      %v528 = vadd.f32 %v456, %v527
      %v529 = vpop.f32.mrf.mxu0
      %v530 = vadd.f32 %v456, %v529
      %531 = vdwg.mxu0
      %vm532 = vcmask 130048
      %v533 = vsel %vm532, %v513, 0.0
      %534 = vadd.xlane.f32.xlu0 %v533
      %v535 = vpop.xlane.xlu0 %534
      %v536 = vsel %vm532, %v515, 0.0
      %537 = vadd.xlane.f32.xlu0 %v536
      %v538 = vpop.xlane.xlu0 %537
      %v539 = vsel %vm532, %v518, 0.0
      %540 = vadd.xlane.f32.xlu0 %v539
      %v541 = vpop.xlane.xlu0 %540
      %v542 = vsel %vm532, %v520, 0.0
      %543 = vadd.xlane.f32.xlu0 %v542
      %v544 = vpop.xlane.xlu0 %543
      %v545 = vsel %vm532, %v523, 0.0
      %546 = vadd.xlane.f32.xlu0 %v545
      %v547 = vpop.xlane.xlu0 %546
      %v548 = vsel %vm532, %v525, 0.0
      %549 = vadd.xlane.f32.xlu0 %v548
      %v550 = vpop.xlane.xlu0 %549
      %v551 = vsel %vm532, %v528, 0.0
      %552 = vadd.xlane.f32.xlu0 %v551
      %v553 = vpop.xlane.xlu0 %552
      %v554 = vsel %vm532, %v530, 0.0
      %555 = vadd.xlane.f32.xlu0 %v554
      %v556 = vpop.xlane.xlu0 %555
      %v557 = vrcp.pop 16.0
      %v558 = vmul.f32 16.0, %v557
      %v559 = vsub.f32 1.0, %v558
      %v560 = vmul.f32 %v557, %v559
      %v561 = vadd.f32 %v557, %v560
      %vm562 = vweird.f32 %v557
      %v563 = vsel %vm562, %v557, %v561
      %v564 = vmul.f32 %v535, %v563
      %v565 = vmul.f32 %v538, %v563
      %v566 = vmul.f32 %v541, %v563
      %v567 = vmul.f32 %v544, %v563
      %v568 = vmul.f32 %v547, %v563
      %v569 = vmul.f32 %v550, %v563
      %v570 = vmul.f32 %v553, %v563
      %v571 = vmul.f32 %v556, %v563
      %v572 = vsub.f32 %v513, %v564
      %v573 = vsub.f32 %v515, %v565
      %v574 = vsub.f32 %v518, %v566
      %v575 = vsub.f32 %v520, %v567
      %v576 = vsub.f32 %v523, %v568
      %v577 = vsub.f32 %v525, %v569
      %v578 = vsub.f32 %v528, %v570
      %v579 = vsub.f32 %v530, %v571
      %v580 = vmul.f32 %v572, %v572
      %v581 = vmul.f32 %v573, %v573
      %v582 = vmul.f32 %v574, %v574
      %v583 = vmul.f32 %v575, %v575
      %v584 = vmul.f32 %v576, %v576
      %v585 = vmul.f32 %v577, %v577
      %v586 = vmul.f32 %v578, %v578
      %v587 = vmul.f32 %v579, %v579
      %v588 = vsel %vm532, %v580, 0.0
      %589 = vadd.xlane.f32.xlu0 %v588
      %v590 = vpop.xlane.xlu0 %589
      %v591 = vsel %vm532, %v581, 0.0
      %592 = vadd.xlane.f32.xlu0 %v591
      %v593 = vpop.xlane.xlu0 %592
      %v594 = vsel %vm532, %v582, 0.0
      %595 = vadd.xlane.f32.xlu0 %v594
      %v596 = vpop.xlane.xlu0 %595
      %v597 = vsel %vm532, %v583, 0.0
      %598 = vadd.xlane.f32.xlu0 %v597
      %v599 = vpop.xlane.xlu0 %598
      %v600 = vsel %vm532, %v584, 0.0
      %601 = vadd.xlane.f32.xlu0 %v600
      %v602 = vpop.xlane.xlu0 %601
      %v603 = vsel %vm532, %v585, 0.0
      %604 = vadd.xlane.f32.xlu0 %v603
      %v605 = vpop.xlane.xlu0 %604
      %v606 = vsel %vm532, %v586, 0.0
      %607 = vadd.xlane.f32.xlu0 %v606
      %v608 = vpop.xlane.xlu0 %607
      %v609 = vsel %vm532, %v587, 0.0
      %610 = vadd.xlane.f32.xlu0 %v609
      %v611 = vpop.xlane.xlu0 %610
      %v612 = vmul.f32 %v590, %v563
      %v613 = vmul.f32 %v593, %v563
      %v614 = vmul.f32 %v596, %v563
      %v615 = vmul.f32 %v599, %v563
      %v616 = vmul.f32 %v602, %v563
      %v617 = vmul.f32 %v605, %v563
      %v618 = vmul.f32 %v608, %v563
      %v619 = vmul.f32 %v611, %v563
      %v620 = vadd.f32 %v612, 1e-05
      %v621 = vadd.f32 %v613, 1e-05
      %v622 = vadd.f32 %v614, 1e-05
      %v623 = vadd.f32 %v615, 1e-05
      %v624 = vadd.f32 %v616, 1e-05
      %v625 = vadd.f32 %v617, 1e-05
      %v626 = vadd.f32 %v618, 1e-05
      %v627 = vadd.f32 %v619, 1e-05
      %v628 = vrsqrt.pop %v620
      %v629 = vmul.f32 %v628, %v620
      %v630 = vmul.f32 %v629, %v628
      %v631 = vmul.f32 0.5, %v630
      %v632 = vsub.f32 1.5, %v631
      %v633 = vmul.f32 %v628, %v632
      %vm634 = vweird.f32 %v620
      %vm635 = vweird.f32 %v628
      %vm636 = vmor %vm634, %vm635
      %v637 = vsel %vm636, %v628, %v633
      %v638 = vrsqrt.pop %v621
      %v639 = vmul.f32 %v638, %v621
      %v640 = vmul.f32 %v639, %v638
      %v641 = vmul.f32 0.5, %v640
      %v642 = vsub.f32 1.5, %v641
      %v643 = vmul.f32 %v638, %v642
      %vm644 = vweird.f32 %v621
      %vm645 = vweird.f32 %v638
      %vm646 = vmor %vm644, %vm645
      %v647 = vsel %vm646, %v638, %v643
      %v648 = vrsqrt.pop %v622
      %v649 = vmul.f32 %v648, %v622
      %v650 = vmul.f32 %v649, %v648
      %v651 = vmul.f32 0.5, %v650
      %v652 = vsub.f32 1.5, %v651
      %v653 = vmul.f32 %v648, %v652
      %vm654 = vweird.f32 %v622
      %vm655 = vweird.f32 %v648
      %vm656 = vmor %vm654, %vm655
      %v657 = vsel %vm656, %v648, %v653
      %v658 = vrsqrt.pop %v623
      %v659 = vmul.f32 %v658, %v623
      %v660 = vmul.f32 %v659, %v658
      %v661 = vmul.f32 0.5, %v660
      %v662 = vsub.f32 1.5, %v661
      %v663 = vmul.f32 %v658, %v662
      %vm664 = vweird.f32 %v623
      %vm665 = vweird.f32 %v658
      %vm666 = vmor %vm664, %vm665
      %v667 = vsel %vm666, %v658, %v663
      %v668 = vrsqrt.pop %v624
      %v669 = vmul.f32 %v668, %v624
      %v670 = vmul.f32 %v669, %v668
      %v671 = vmul.f32 0.5, %v670
      %v672 = vsub.f32 1.5, %v671
      %v673 = vmul.f32 %v668, %v672
      %vm674 = vweird.f32 %v624
      %vm675 = vweird.f32 %v668
      %vm676 = vmor %vm674, %vm675
      %v677 = vsel %vm676, %v668, %v673
      %v678 = vrsqrt.pop %v625
      %v679 = vmul.f32 %v678, %v625
      %v680 = vmul.f32 %v679, %v678
      %v681 = vmul.f32 0.5, %v680
      %v682 = vsub.f32 1.5, %v681
      %v683 = vmul.f32 %v678, %v682
      %vm684 = vweird.f32 %v625
      %vm685 = vweird.f32 %v678
      %vm686 = vmor %vm684, %vm685
      %v687 = vsel %vm686, %v678, %v683
      %v688 = vrsqrt.pop %v626
      %v689 = vmul.f32 %v688, %v626
      %v690 = vmul.f32 %v689, %v688
      %v691 = vmul.f32 0.5, %v690
      %v692 = vsub.f32 1.5, %v691
      %v693 = vmul.f32 %v688, %v692
      %vm694 = vweird.f32 %v626
      %vm695 = vweird.f32 %v688
      %vm696 = vmor %vm694, %vm695
      %v697 = vsel %vm696, %v688, %v693
      %v698 = vrsqrt.pop %v627
      %v699 = vmul.f32 %v698, %v627
      %v700 = vmul.f32 %v699, %v698
      %v701 = vmul.f32 0.5, %v700
      %v702 = vsub.f32 1.5, %v701
      %v703 = vmul.f32 %v698, %v702
      %vm704 = vweird.f32 %v627
      %vm705 = vweird.f32 %v698
      %vm706 = vmor %vm704, %vm705
      %v707 = vsel %vm706, %v698, %v703
      %v708 = vmul.f32 %v572, %v637
      %v709 = vmul.f32 %v573, %v647
      %v710 = vmul.f32 %v574, %v657
      %v711 = vmul.f32 %v575, %v667
      %v712 = vmul.f32 %v576, %v677
      %v713 = vmul.f32 %v577, %v687
      %v714 = vmul.f32 %v578, %v697
      %v715 = vmul.f32 %v579, %v707
      %v716 = vld [vmem:[%s3] sm:$0x1]
      %v718 = vperm.slane %v716, 0
      %v720 = vmul.f32 %v708, %v718
      %v721 = vmul.f32 %v709, %v718
      %v722 = vmul.f32 %v710, %v718
      %v723 = vmul.f32 %v711, %v718
      %v724 = vmul.f32 %v712, %v718
      %v725 = vmul.f32 %v713, %v718
      %v726 = vmul.f32 %v714, %v718
      %v727 = vmul.f32 %v715, %v718
      %v728 = vld [vmem:[%s4] sm:$0x1]
      %v730 = vperm.slane %v728, 0
      %v732 = vadd.f32 %v720, %v730
      %v733 = vadd.f32 %v721, %v730
      %v734 = vadd.f32 %v722, %v730
      %v735 = vadd.f32 %v723, %v730
      %v736 = vadd.f32 %v724, %v730
      %v737 = vadd.f32 %v725, %v730
      %v738 = vadd.f32 %v726, %v730
      %v739 = vadd.f32 %v727, %v730
      %v740 = vpack.c.bf16 %v732, %v732
      %v741 = vpack.c.bf16 %v733, %v733
      %v742 = vpack.c.bf16 %v734, %v734
      %v743 = vpack.c.bf16 %v735, %v735
      %v744 = vpack.c.bf16 %v736, %v736
      %v745 = vpack.c.bf16 %v737, %v737
      %v746 = vpack.c.bf16 %v738, %v738
      %v747 = vpack.c.bf16 %v739, %v739
      %v748 = vld [vmem:[%s5] sm:$0xf]
      %v749 = vld [vmem:[%s5 + $0x4] sm:$0xf]
      %v750 = vld [vmem:[%s5 + $0x8] sm:$0xf]
      %v751 = vld [vmem:[%s5 + $0xc] sm:$0xf]
      %v760 = vunpack.c.l.b16 %v740
      %v761 = vunpack.c.l.b16 %v741
      %v762 = vunpack.c.l.b16 %v742
      %v763 = vunpack.c.l.b16 %v743
      %v764 = vunpack.c.l.b16 %v744
      %v765 = vunpack.c.l.b16 %v745
      %v766 = vunpack.c.l.b16 %v746
      %v767 = vunpack.c.l.b16 %v747
      %v768 = vpack.c.b16 %v761, %v760
      %v769 = vpack.c.b16 %v763, %v762
      %v770 = vpack.c.b16 %v765, %v764
      %v771 = vpack.c.b16 %v767, %v766
      %v774 = vunpack.c.l.b16 %v748
      %v775 = vunpack.c.l.b16 %v749
      %v776 = vpack.c.b16 %v775, %v774
      %v779 = vsel %vm532, %v768, 0
      %v782 = vsel %vm532, %v769, 0
      %v785 = vsel %vm532, %v770, 0
      %v788 = vsel %vm532, %v771, 0
      %790 = vmatpush.bf16.msra.mxu0 0
      %791 = vmatpush.bf16.msra.mxu0 0
      %792 = vmatpush.bf16.msra.mxu0 0
      %793 = vmatpush.bf16.msra.mxu0 0
      %794 = vmatpush.bf16.msra.mxu0 0
      %795 = vmatpush.bf16.msra.mxu0 0
      %796 = vmatpush.bf16.msra.mxu0 0
      %797 = vmatpush.bf16.msra.mxu0 %v776
      %798 = vmatmul.bf16.gmra.mxu0 %v779
      %v799 = vpop.f32.mrf.mxu0
      %v800 = vadd.f32 0.0, %v799
      %v801 = vpop.f32.mrf.mxu0
      %v802 = vadd.f32 0.0, %v801
      %803 = vmatmul.bf16.gmra.mxu0 %v782
      %v804 = vpop.f32.mrf.mxu0
      %v805 = vadd.f32 0.0, %v804
      %v806 = vpop.f32.mrf.mxu0
      %v807 = vadd.f32 0.0, %v806
      %808 = vmatmul.bf16.gmra.mxu0 %v785
      %v809 = vpop.f32.mrf.mxu0
      %v810 = vadd.f32 0.0, %v809
      %v811 = vpop.f32.mrf.mxu0
      %v812 = vadd.f32 0.0, %v811
      %813 = vmatmul.bf16.gmra.mxu0 %v788
      %v814 = vpop.f32.mrf.mxu0
      %v815 = vadd.f32 0.0, %v814
      %v816 = vpop.f32.mrf.mxu0
      %v817 = vadd.f32 0.0, %v816
      %818 = vdwg.mxu0
      %v821 = vunpack.c.l.b16 %v750
      %v822 = vunpack.c.l.b16 %v751
      %v823 = vpack.c.b16 %v822, %v821
      %825 = vmatpush.bf16.msra.mxu0 0
      %826 = vmatpush.bf16.msra.mxu0 0
      %827 = vmatpush.bf16.msra.mxu0 0
      %828 = vmatpush.bf16.msra.mxu0 0
      %829 = vmatpush.bf16.msra.mxu0 0
      %830 = vmatpush.bf16.msra.mxu0 0
      %831 = vmatpush.bf16.msra.mxu0 0
      %832 = vmatpush.bf16.msra.mxu0 %v823
      %833 = vmatmul.bf16.gmra.mxu0 %v779
      %v834 = vpop.f32.mrf.mxu0
      %v835 = vadd.f32 0.0, %v834
      %v836 = vpop.f32.mrf.mxu0
      %v837 = vadd.f32 0.0, %v836
      %838 = vmatmul.bf16.gmra.mxu0 %v782
      %v839 = vpop.f32.mrf.mxu0
      %v840 = vadd.f32 0.0, %v839
      %v841 = vpop.f32.mrf.mxu0
      %v842 = vadd.f32 0.0, %v841
      %843 = vmatmul.bf16.gmra.mxu0 %v785
      %v844 = vpop.f32.mrf.mxu0
      %v845 = vadd.f32 0.0, %v844
      %v846 = vpop.f32.mrf.mxu0
      %v847 = vadd.f32 0.0, %v846
      %848 = vmatmul.bf16.gmra.mxu0 %v788
      %v849 = vpop.f32.mrf.mxu0
      %v850 = vadd.f32 0.0, %v849
      %v851 = vpop.f32.mrf.mxu0
      %v852 = vadd.f32 0.0, %v851
      %853 = vdwg.mxu0
      %v854 = vld [vmem:[%s8] sm:$0xf]
      %v855 = vld [vmem:[%s8 + $0x4] sm:$0xf]
      %v856 = vld [vmem:[%s8 + $0x8] sm:$0xf]
      %v857 = vld [vmem:[%s8 + $0xc] sm:$0xf]
      %v862 = vunpack.c.l.b16 %v854
      %v863 = vunpack.c.l.b16 %v855
      %v864 = vunpack.c.l.b16 %v856
      %v865 = vunpack.c.l.b16 %v857
      %v866 = vpack.c.b16 %v863, %v862
      %v867 = vpack.c.b16 %v865, %v864
      %vm872 = vcmask 523264
      %v874 = vsel %vm872, %v866, 0
      %v877 = vsel %vm872, %v867, 0
      %879 = vmatpush.bf16.msra.mxu0 0
      %880 = vmatpush.bf16.msra.mxu0 0
      %881 = vmatpush.bf16.msra.mxu0 0
      %882 = vmatpush.bf16.msra.mxu0 0
      %883 = vmatpush.bf16.msra.mxu0 %v771
      %884 = vmatpush.bf16.msra.mxu0 %v770
      %885 = vmatpush.bf16.msra.mxu0 %v769
      %886 = vmatpush.bf16.msra.mxu0 %v768
      %887 = vmatmul.bf16.gmra.mxu0 %v874
      %v888 = vpop.f32.mrf.mxu0
      %v889 = vadd.f32 0.0, %v888
      %v890 = vpop.f32.mrf.mxu0
      %v891 = vadd.f32 0.0, %v890
      %892 = vmatmul.bf16.gmra.mxu0 %v877
      %v893 = vpop.f32.mrf.mxu0
      %v894 = vadd.f32 0.0, %v893
      %v895 = vpop.f32.mrf.mxu0
      %v896 = vadd.f32 0.0, %v895
      %897 = vdwg.mxu0
      %v898 = vld [vmem:[%s9] sm:$0xf]
      %v899 = vld [vmem:[%s9 + $0x4] sm:$0xf]
      %v900 = vld [vmem:[%s9 + $0x8] sm:$0xf]
      %v901 = vld [vmem:[%s9 + $0xc] sm:$0xf]
      %v906 = vunpack.c.l.b16 %v898
      %v907 = vunpack.c.l.b16 %v899
      %v908 = vunpack.c.l.b16 %v900
      %v909 = vunpack.c.l.b16 %v901
      %v910 = vpack.c.b16 %v907, %v906
      %v911 = vpack.c.b16 %v909, %v908
      %v913 = vsel %vm872, %v910, 0
      %v916 = vsel %vm872, %v911, 0
      %918 = vmatpush.bf16.msra.mxu0 0
      %919 = vmatpush.bf16.msra.mxu0 0
      %920 = vmatpush.bf16.msra.mxu0 0
      %921 = vmatpush.bf16.msra.mxu0 0
      %922 = vmatpush.bf16.msra.mxu0 %v771
      %923 = vmatpush.bf16.msra.mxu0 %v770
      %924 = vmatpush.bf16.msra.mxu0 %v769
      %925 = vmatpush.bf16.msra.mxu0 %v768
      %926 = vmatmul.bf16.gmra.mxu0 %v913
      %v927 = vpop.f32.mrf.mxu0
      %v928 = vadd.f32 0.0, %v927
      %v929 = vpop.f32.mrf.mxu0
      %v930 = vadd.f32 0.0, %v929
      %931 = vmatmul.bf16.gmra.mxu0 %v916
      %v932 = vpop.f32.mrf.mxu0
      %v933 = vadd.f32 0.0, %v932
      %v934 = vpop.f32.mrf.mxu0
      %v935 = vadd.f32 0.0, %v934
      %936 = vdwg.mxu0
      %v937 = vpack.c.bf16 %v889, %v889
      %v938 = vpack.c.bf16 %v891, %v891
      %v939 = vpack.c.bf16 %v894, %v894
      %v940 = vpack.c.bf16 %v896, %v896
      %v941 = vld [vmem:[%s6] sm:$0xf]
      %v942 = vld [vmem:[%s6 + $0x4] sm:$0xf]
      %v943 = vld [vmem:[%s6 + $0x8] sm:$0xf]
      %v944 = vld [vmem:[%s6 + $0xc] sm:$0xf]
      %v949 = vunpack.c.l.b16 %v937
      %v950 = vunpack.c.l.b16 %v938
      %v951 = vunpack.c.l.b16 %v939
      %v952 = vunpack.c.l.b16 %v940
      %v953 = vpack.c.b16 %v950, %v949
      %v954 = vpack.c.b16 %v952, %v951
      %v957 = vunpack.c.l.b16 %v941
      %v958 = vunpack.c.l.b16 %v942
      %v959 = vpack.c.b16 %v958, %v957
      %v962 = vsel %vm532, %v953, 0
      %v965 = vsel %vm532, %v954, 0
      %967 = vmatpush.bf16.msra.mxu0 0
      %968 = vmatpush.bf16.msra.mxu0 0
      %969 = vmatpush.bf16.msra.mxu0 0
      %970 = vmatpush.bf16.msra.mxu0 0
      %971 = vmatpush.bf16.msra.mxu0 0
      %972 = vmatpush.bf16.msra.mxu0 0
      %973 = vmatpush.bf16.msra.mxu0 0
      %974 = vmatpush.bf16.msra.mxu0 %v959
      %975 = vmatmul.bf16.gmra.mxu0 %v962
      %v976 = vpop.f32.mrf.mxu0
      %v977 = vadd.f32 0.0, %v976
      %v978 = vpop.f32.mrf.mxu0
      %v979 = vadd.f32 0.0, %v978
      %980 = vmatmul.bf16.gmra.mxu0 %v965
      %v981 = vpop.f32.mrf.mxu0
      %v982 = vadd.f32 0.0, %v981
      %v983 = vpop.f32.mrf.mxu0
      %v984 = vadd.f32 0.0, %v983
      %985 = vdwg.mxu0
      %v988 = vunpack.c.l.b16 %v943
      %v989 = vunpack.c.l.b16 %v944
      %v990 = vpack.c.b16 %v989, %v988
      %992 = vmatpush.bf16.msra.mxu0 0
      %993 = vmatpush.bf16.msra.mxu0 0
      %994 = vmatpush.bf16.msra.mxu0 0
      %995 = vmatpush.bf16.msra.mxu0 0
      %996 = vmatpush.bf16.msra.mxu0 0
      %997 = vmatpush.bf16.msra.mxu0 0
      %998 = vmatpush.bf16.msra.mxu0 0
      %999 = vmatpush.bf16.msra.mxu0 %v990
      %1000 = vmatmul.bf16.gmra.mxu0 %v962
      %v1001 = vpop.f32.mrf.mxu0
      %v1002 = vadd.f32 0.0, %v1001
      %v1003 = vpop.f32.mrf.mxu0
      %v1004 = vadd.f32 0.0, %v1003
      %1005 = vmatmul.bf16.gmra.mxu0 %v965
      %v1006 = vpop.f32.mrf.mxu0
      %v1007 = vadd.f32 0.0, %v1006
      %v1008 = vpop.f32.mrf.mxu0
      %v1009 = vadd.f32 0.0, %v1008
      %1010 = vdwg.mxu0
      %v1011 = vpack.c.bf16 %v928, %v928
      %v1012 = vpack.c.bf16 %v930, %v930
      %v1013 = vpack.c.bf16 %v933, %v933
      %v1014 = vpack.c.bf16 %v935, %v935
      %v1015 = vld [vmem:[%s7] sm:$0xf]
      %v1016 = vld [vmem:[%s7 + $0x4] sm:$0xf]
      %v1017 = vld [vmem:[%s7 + $0x8] sm:$0xf]
      %v1018 = vld [vmem:[%s7 + $0xc] sm:$0xf]
      %v1023 = vunpack.c.l.b16 %v1011
      %v1024 = vunpack.c.l.b16 %v1012
      %v1025 = vunpack.c.l.b16 %v1013
      %v1026 = vunpack.c.l.b16 %v1014
      %v1027 = vpack.c.b16 %v1024, %v1023
      %v1028 = vpack.c.b16 %v1026, %v1025
      %v1031 = vunpack.c.l.b16 %v1015
      %v1032 = vunpack.c.l.b16 %v1016
      %v1033 = vpack.c.b16 %v1032, %v1031
      %v1036 = vsel %vm532, %v1027, 0
      %v1039 = vsel %vm532, %v1028, 0
      %1041 = vmatpush.bf16.msra.mxu0 0
      %1042 = vmatpush.bf16.msra.mxu0 0
      %1043 = vmatpush.bf16.msra.mxu0 0
      %1044 = vmatpush.bf16.msra.mxu0 0
      %1045 = vmatpush.bf16.msra.mxu0 0
      %1046 = vmatpush.bf16.msra.mxu0 0
      %1047 = vmatpush.bf16.msra.mxu0 0
      %1048 = vmatpush.bf16.msra.mxu0 %v1033
      %1049 = vmatmul.bf16.gmra.mxu0 %v1036
      %v1050 = vpop.f32.mrf.mxu0
      %v1051 = vadd.f32 0.0, %v1050
      %v1052 = vpop.f32.mrf.mxu0
      %v1053 = vadd.f32 0.0, %v1052
      %1054 = vmatmul.bf16.gmra.mxu0 %v1039
      %v1055 = vpop.f32.mrf.mxu0
      %v1056 = vadd.f32 0.0, %v1055
      %v1057 = vpop.f32.mrf.mxu0
      %v1058 = vadd.f32 0.0, %v1057
      %1059 = vdwg.mxu0
      %v1062 = vunpack.c.l.b16 %v1017
      %v1063 = vunpack.c.l.b16 %v1018
      %v1064 = vpack.c.b16 %v1063, %v1062
      %1066 = vmatpush.bf16.msra.mxu0 0
      %1067 = vmatpush.bf16.msra.mxu0 0
      %1068 = vmatpush.bf16.msra.mxu0 0
      %1069 = vmatpush.bf16.msra.mxu0 0
      %1070 = vmatpush.bf16.msra.mxu0 0
      %1071 = vmatpush.bf16.msra.mxu0 0
      %1072 = vmatpush.bf16.msra.mxu0 0
      %1073 = vmatpush.bf16.msra.mxu0 %v1064
      %1074 = vmatmul.bf16.gmra.mxu0 %v1036
      %v1075 = vpop.f32.mrf.mxu0
      %v1076 = vadd.f32 0.0, %v1075
      %v1077 = vpop.f32.mrf.mxu0
      %v1078 = vadd.f32 0.0, %v1077
      %1079 = vmatmul.bf16.gmra.mxu0 %v1039
      %v1080 = vpop.f32.mrf.mxu0
      %v1081 = vadd.f32 0.0, %v1080
      %v1082 = vpop.f32.mrf.mxu0
      %v1083 = vadd.f32 0.0, %v1082
      %1084 = vdwg.mxu0
      %v1085 = vpack.c.bf16 %v800, %v800
      %v1086 = vpack.c.bf16 %v802, %v802
      %v1087 = vpack.c.bf16 %v805, %v805
      %v1088 = vpack.c.bf16 %v807, %v807
      %v1089 = vpack.c.bf16 %v810, %v810
      %v1090 = vpack.c.bf16 %v812, %v812
      %v1091 = vpack.c.bf16 %v815, %v815
      %v1092 = vpack.c.bf16 %v817, %v817
      %v1093 = vpack.c.bf16 %v835, %v835
      %v1094 = vpack.c.bf16 %v837, %v837
      %v1095 = vpack.c.bf16 %v840, %v840
      %v1096 = vpack.c.bf16 %v842, %v842
      %v1097 = vpack.c.bf16 %v845, %v845
      %v1098 = vpack.c.bf16 %v847, %v847
      %v1099 = vpack.c.bf16 %v850, %v850
      %v1100 = vpack.c.bf16 %v852, %v852
      %v1101 = vpack.c.bf16 %v977, %v977
      %v1102 = vpack.c.bf16 %v979, %v979
      %v1103 = vpack.c.bf16 %v982, %v982
      %v1104 = vpack.c.bf16 %v984, %v984
      %v1105 = vpack.c.bf16 %v1002, %v1002
      %v1106 = vpack.c.bf16 %v1004, %v1004
      %v1107 = vpack.c.bf16 %v1007, %v1007
      %v1108 = vpack.c.bf16 %v1009, %v1009
      %v1117 = vunpack.c.l.b16 %v1085
      %v1118 = vunpack.c.l.b16 %v1086
      %v1119 = vunpack.c.l.b16 %v1087
      %v1120 = vunpack.c.l.b16 %v1088
      %v1121 = vunpack.c.l.b16 %v1089
      %v1122 = vunpack.c.l.b16 %v1090
      %v1123 = vunpack.c.l.b16 %v1091
      %v1124 = vunpack.c.l.b16 %v1092
      %v1125 = vpack.c.b16 %v1118, %v1117
      %v1126 = vpack.c.b16 %v1120, %v1119
      %v1127 = vpack.c.b16 %v1122, %v1121
      %v1128 = vpack.c.b16 %v1124, %v1123
      %v1133 = vunpack.c.l.b16 %v1101
      %v1134 = vunpack.c.l.b16 %v1102
      %v1135 = vunpack.c.l.b16 %v1103
      %v1136 = vunpack.c.l.b16 %v1104
      %v1137 = vpack.c.b16 %v1134, %v1133
      %v1138 = vpack.c.b16 %v1136, %v1135
      %vm1139 = vcmask 64512
      %v1141 = vsel %vm1139, %v1125, 0
      %v1144 = vsel %vm1139, %v1126, 0
      %v1147 = vsel %vm1139, %v1127, 0
      %v1150 = vsel %vm1139, %v1128, 0
      %v1153 = vsel %vm1139, %v1137, 0
      %v1156 = vsel %vm1139, %v1138, 0
      %1158 = vmatpush.bf16.xpose.msra.mxu0 0
      %1159 = vmatpush.bf16.xpose.msra.mxu0 0
      %1160 = vmatpush.bf16.xpose.msra.mxu0 0
      %1161 = vmatpush.bf16.xpose.msra.mxu0 0
      %1162 = vmatpush.bf16.xpose.msra.mxu0 0
      %1163 = vmatpush.bf16.xpose.msra.mxu0 0
      %1164 = vmatpush.bf16.xpose.msra.mxu0 %v1156
      %1165 = vmatpush.bf16.xpose.msra.mxu0 %v1153
      %1166 = vmatmul.bf16.gmra.mxu0 %v1141
      %v1167 = vpop.f32.mrf.mxu0
      %v1168 = vadd.f32 0.0, %v1167
      %v1169 = vpop.f32.mrf.mxu0
      %v1170 = vadd.f32 0.0, %v1169
      %1171 = vmatmul.bf16.gmra.mxu0 %v1144
      %v1172 = vpop.f32.mrf.mxu0
      %v1173 = vadd.f32 0.0, %v1172
      %v1174 = vpop.f32.mrf.mxu0
      %v1175 = vadd.f32 0.0, %v1174
      %1176 = vmatmul.bf16.gmra.mxu0 %v1147
      %v1177 = vpop.f32.mrf.mxu0
      %v1178 = vadd.f32 0.0, %v1177
      %v1179 = vpop.f32.mrf.mxu0
      %v1180 = vadd.f32 0.0, %v1179
      %1181 = vmatmul.bf16.gmra.mxu0 %v1150
      %v1182 = vpop.f32.mrf.mxu0
      %v1183 = vadd.f32 0.0, %v1182
      %v1184 = vpop.f32.mrf.mxu0
      %v1185 = vadd.f32 0.0, %v1184
      %1186 = vdwg.mxu0
      %v1195 = vunpack.c.l.b16 %v1093
      %v1196 = vunpack.c.l.b16 %v1094
      %v1197 = vunpack.c.l.b16 %v1095
      %v1198 = vunpack.c.l.b16 %v1096
      %v1199 = vunpack.c.l.b16 %v1097
      %v1200 = vunpack.c.l.b16 %v1098
      %v1201 = vunpack.c.l.b16 %v1099
      %v1202 = vunpack.c.l.b16 %v1100
      %v1203 = vpack.c.b16 %v1196, %v1195
      %v1204 = vpack.c.b16 %v1198, %v1197
      %v1205 = vpack.c.b16 %v1200, %v1199
      %v1206 = vpack.c.b16 %v1202, %v1201
      %v1211 = vunpack.c.l.b16 %v1105
      %v1212 = vunpack.c.l.b16 %v1106
      %v1213 = vunpack.c.l.b16 %v1107
      %v1214 = vunpack.c.l.b16 %v1108
      %v1215 = vpack.c.b16 %v1212, %v1211
      %v1216 = vpack.c.b16 %v1214, %v1213
      %v1218 = vsel %vm1139, %v1203, 0
      %v1221 = vsel %vm1139, %v1204, 0
      %v1224 = vsel %vm1139, %v1205, 0
      %v1227 = vsel %vm1139, %v1206, 0
      %v1230 = vsel %vm1139, %v1215, 0
      %v1233 = vsel %vm1139, %v1216, 0
      %1235 = vmatpush.bf16.xpose.msra.mxu0 0
      %1236 = vmatpush.bf16.xpose.msra.mxu0 0
      %1237 = vmatpush.bf16.xpose.msra.mxu0 0
      %1238 = vmatpush.bf16.xpose.msra.mxu0 0
      %1239 = vmatpush.bf16.xpose.msra.mxu0 0
      %1240 = vmatpush.bf16.xpose.msra.mxu0 0
      %1241 = vmatpush.bf16.xpose.msra.mxu0 %v1233
      %1242 = vmatpush.bf16.xpose.msra.mxu0 %v1230
      %1243 = vmatmul.bf16.gmra.mxu0 %v1218
      %v1244 = vpop.f32.mrf.mxu0
      %v1245 = vadd.f32 0.0, %v1244
      %v1246 = vpop.f32.mrf.mxu0
      %v1247 = vadd.f32 0.0, %v1246
      %1248 = vmatmul.bf16.gmra.mxu0 %v1221
      %v1249 = vpop.f32.mrf.mxu0
      %v1250 = vadd.f32 0.0, %v1249
      %v1251 = vpop.f32.mrf.mxu0
      %v1252 = vadd.f32 0.0, %v1251
      %1253 = vmatmul.bf16.gmra.mxu0 %v1224
      %v1254 = vpop.f32.mrf.mxu0
      %v1255 = vadd.f32 0.0, %v1254
      %v1256 = vpop.f32.mrf.mxu0
      %v1257 = vadd.f32 0.0, %v1256
      %1258 = vmatmul.bf16.gmra.mxu0 %v1227
      %v1259 = vpop.f32.mrf.mxu0
      %v1260 = vadd.f32 0.0, %v1259
      %v1261 = vpop.f32.mrf.mxu0
      %v1262 = vadd.f32 0.0, %v1261
      %1263 = vdwg.mxu0
      %v1264 = vsel %vm490, %v1168, -inf
      %1265 = vmax.xlane.f32.xlu0 %v1264
      %v1266 = vpop.xlane.xlu0 %1265
      %v1267 = vsel %vm490, %v1170, -inf
      %1268 = vmax.xlane.f32.xlu0 %v1267
      %v1269 = vpop.xlane.xlu0 %1268
      %v1270 = vsel %vm490, %v1173, -inf
      %1271 = vmax.xlane.f32.xlu0 %v1270
      %v1272 = vpop.xlane.xlu0 %1271
      %v1273 = vsel %vm490, %v1175, -inf
      %1274 = vmax.xlane.f32.xlu0 %v1273
      %v1275 = vpop.xlane.xlu0 %1274
      %v1276 = vsel %vm490, %v1178, -inf
      %1277 = vmax.xlane.f32.xlu0 %v1276
      %v1278 = vpop.xlane.xlu0 %1277
      %v1279 = vsel %vm490, %v1180, -inf
      %1280 = vmax.xlane.f32.xlu0 %v1279
      %v1281 = vpop.xlane.xlu0 %1280
      %v1282 = vsel %vm490, %v1183, -inf
      %1283 = vmax.xlane.f32.xlu0 %v1282
      %v1284 = vpop.xlane.xlu0 %1283
      %v1285 = vsel %vm490, %v1185, -inf
      %1286 = vmax.xlane.f32.xlu0 %v1285
      %v1287 = vpop.xlane.xlu0 %1286
      %v1288 = vsel %vm490, %v1245, -inf
      %1289 = vmax.xlane.f32.xlu0 %v1288
      %v1290 = vpop.xlane.xlu0 %1289
      %v1291 = vsel %vm490, %v1247, -inf
      %1292 = vmax.xlane.f32.xlu0 %v1291
      %v1293 = vpop.xlane.xlu0 %1292
      %v1294 = vsel %vm490, %v1250, -inf
      %1295 = vmax.xlane.f32.xlu0 %v1294
      %v1296 = vpop.xlane.xlu0 %1295
      %v1297 = vsel %vm490, %v1252, -inf
      %1298 = vmax.xlane.f32.xlu0 %v1297
      %v1299 = vpop.xlane.xlu0 %1298
      %v1300 = vsel %vm490, %v1255, -inf
      %1301 = vmax.xlane.f32.xlu0 %v1300
      %v1302 = vpop.xlane.xlu0 %1301
      %v1303 = vsel %vm490, %v1257, -inf
      %1304 = vmax.xlane.f32.xlu0 %v1303
      %v1305 = vpop.xlane.xlu0 %1304
      %v1306 = vsel %vm490, %v1260, -inf
      %1307 = vmax.xlane.f32.xlu0 %v1306
      %v1308 = vpop.xlane.xlu0 %1307
      %v1309 = vsel %vm490, %v1262, -inf
      %1310 = vmax.xlane.f32.xlu0 %v1309
      %v1311 = vpop.xlane.xlu0 %1310
      %v1312 = vsub.f32 %v1168, %v1266
      %v1313 = vsub.f32 %v1170, %v1269
      %v1314 = vsub.f32 %v1173, %v1272
      %v1315 = vsub.f32 %v1175, %v1275
      %v1316 = vsub.f32 %v1178, %v1278
      %v1317 = vsub.f32 %v1180, %v1281
      %v1318 = vsub.f32 %v1183, %v1284
      %v1319 = vsub.f32 %v1185, %v1287
      %v1320 = vsub.f32 %v1245, %v1290
      %v1321 = vsub.f32 %v1247, %v1293
      %v1322 = vsub.f32 %v1250, %v1296
      %v1323 = vsub.f32 %v1252, %v1299
      %v1324 = vsub.f32 %v1255, %v1302
      %v1325 = vsub.f32 %v1257, %v1305
      %v1326 = vsub.f32 %v1260, %v1308
      %v1327 = vsub.f32 %v1262, %v1311
      %v1328 = vmul.f32 %v1312, 1.442695
      %v1329 = vpow.pop %v1328
      %v1330 = vmul.f32 %v1313, 1.442695
      %v1331 = vpow.pop %v1330
      %v1332 = vmul.f32 %v1314, 1.442695
      %v1333 = vpow.pop %v1332
      %v1334 = vmul.f32 %v1315, 1.442695
      %v1335 = vpow.pop %v1334
      %v1336 = vmul.f32 %v1316, 1.442695
      %v1337 = vpow.pop %v1336
      %v1338 = vmul.f32 %v1317, 1.442695
      %v1339 = vpow.pop %v1338
      %v1340 = vmul.f32 %v1318, 1.442695
      %v1341 = vpow.pop %v1340
      %v1342 = vmul.f32 %v1319, 1.442695
      %v1343 = vpow.pop %v1342
      %v1344 = vmul.f32 %v1320, 1.442695
      %v1345 = vpow.pop %v1344
      %v1346 = vmul.f32 %v1321, 1.442695
      %v1347 = vpow.pop %v1346
      %v1348 = vmul.f32 %v1322, 1.442695
      %v1349 = vpow.pop %v1348
      %v1350 = vmul.f32 %v1323, 1.442695
      %v1351 = vpow.pop %v1350
      %v1352 = vmul.f32 %v1324, 1.442695
      %v1353 = vpow.pop %v1352
      %v1354 = vmul.f32 %v1325, 1.442695
      %v1355 = vpow.pop %v1354
      %v1356 = vmul.f32 %v1326, 1.442695
      %v1357 = vpow.pop %v1356
      %v1358 = vmul.f32 %v1327, 1.442695
      %v1359 = vpow.pop %v1358
      %v1360 = vsel %vm490, %v1329, 0.0
      %1361 = vadd.xlane.f32.xlu0 %v1360
      %v1362 = vpop.xlane.xlu0 %1361
      %v1363 = vsel %vm490, %v1331, 0.0
      %1364 = vadd.xlane.f32.xlu0 %v1363
      %v1365 = vpop.xlane.xlu0 %1364
      %v1366 = vsel %vm490, %v1333, 0.0
      %1367 = vadd.xlane.f32.xlu0 %v1366
      %v1368 = vpop.xlane.xlu0 %1367
      %v1369 = vsel %vm490, %v1335, 0.0
      %1370 = vadd.xlane.f32.xlu0 %v1369
      %v1371 = vpop.xlane.xlu0 %1370
      %v1372 = vsel %vm490, %v1337, 0.0
      %1373 = vadd.xlane.f32.xlu0 %v1372
      %v1374 = vpop.xlane.xlu0 %1373
      %v1375 = vsel %vm490, %v1339, 0.0
      %1376 = vadd.xlane.f32.xlu0 %v1375
      %v1377 = vpop.xlane.xlu0 %1376
      %v1378 = vsel %vm490, %v1341, 0.0
      %1379 = vadd.xlane.f32.xlu0 %v1378
      %v1380 = vpop.xlane.xlu0 %1379
      %v1381 = vsel %vm490, %v1343, 0.0
      %1382 = vadd.xlane.f32.xlu0 %v1381
      %v1383 = vpop.xlane.xlu0 %1382
      %v1384 = vsel %vm490, %v1345, 0.0
      %1385 = vadd.xlane.f32.xlu0 %v1384
      %v1386 = vpop.xlane.xlu0 %1385
      %v1387 = vsel %vm490, %v1347, 0.0
      %1388 = vadd.xlane.f32.xlu0 %v1387
      %v1389 = vpop.xlane.xlu0 %1388
      %v1390 = vsel %vm490, %v1349, 0.0
      %1391 = vadd.xlane.f32.xlu0 %v1390
      %v1392 = vpop.xlane.xlu0 %1391
      %v1393 = vsel %vm490, %v1351, 0.0
      %1394 = vadd.xlane.f32.xlu0 %v1393
      %v1395 = vpop.xlane.xlu0 %1394
      %v1396 = vsel %vm490, %v1353, 0.0
      %1397 = vadd.xlane.f32.xlu0 %v1396
      %v1398 = vpop.xlane.xlu0 %1397
      %v1399 = vsel %vm490, %v1355, 0.0
      %1400 = vadd.xlane.f32.xlu0 %v1399
      %v1401 = vpop.xlane.xlu0 %1400
      %v1402 = vsel %vm490, %v1357, 0.0
      %1403 = vadd.xlane.f32.xlu0 %v1402
      %v1404 = vpop.xlane.xlu0 %1403
      %v1405 = vsel %vm490, %v1359, 0.0
      %1406 = vadd.xlane.f32.xlu0 %v1405
      %v1407 = vpop.xlane.xlu0 %1406
      %v1408 = vrcp.pop %v1362
      %v1409 = vrcp.pop %v1365
      %v1410 = vrcp.pop %v1368
      %v1411 = vrcp.pop %v1371
      %v1412 = vrcp.pop %v1374
      %v1413 = vrcp.pop %v1377
      %v1414 = vrcp.pop %v1380
      %v1415 = vrcp.pop %v1383
      %v1416 = vrcp.pop %v1386
      %v1417 = vrcp.pop %v1389
      %v1418 = vrcp.pop %v1392
      %v1419 = vrcp.pop %v1395
      %v1420 = vrcp.pop %v1398
      %v1421 = vrcp.pop %v1401
      %v1422 = vrcp.pop %v1404
      %v1423 = vrcp.pop %v1407
      %v1424 = vmul.f32 %v1329, %v1408
      %v1425 = vmul.f32 %v1331, %v1409
      %v1426 = vmul.f32 %v1333, %v1410
      %v1427 = vmul.f32 %v1335, %v1411
      %v1428 = vmul.f32 %v1337, %v1412
      %v1429 = vmul.f32 %v1339, %v1413
      %v1430 = vmul.f32 %v1341, %v1414
      %v1431 = vmul.f32 %v1343, %v1415
      %v1432 = vmul.f32 %v1345, %v1416
      %v1433 = vmul.f32 %v1347, %v1417
      %v1434 = vmul.f32 %v1349, %v1418
      %v1435 = vmul.f32 %v1351, %v1419
      %v1436 = vmul.f32 %v1353, %v1420
      %v1437 = vmul.f32 %v1355, %v1421
      %v1438 = vmul.f32 %v1357, %v1422
      %v1439 = vmul.f32 %v1359, %v1423
      %v1440 = vpack.c.bf16 %v1424, %v1424
      %v1441 = vpack.c.bf16 %v1425, %v1425
      %v1442 = vpack.c.bf16 %v1426, %v1426
      %v1443 = vpack.c.bf16 %v1427, %v1427
      %v1444 = vpack.c.bf16 %v1428, %v1428
      %v1445 = vpack.c.bf16 %v1429, %v1429
      %v1446 = vpack.c.bf16 %v1430, %v1430
      %v1447 = vpack.c.bf16 %v1431, %v1431
      %v1448 = vpack.c.bf16 %v1432, %v1432
      %v1449 = vpack.c.bf16 %v1433, %v1433
      %v1450 = vpack.c.bf16 %v1434, %v1434
      %v1451 = vpack.c.bf16 %v1435, %v1435
      %v1452 = vpack.c.bf16 %v1436, %v1436
      %v1453 = vpack.c.bf16 %v1437, %v1437
      %v1454 = vpack.c.bf16 %v1438, %v1438
      %v1455 = vpack.c.bf16 %v1439, %v1439
      %v1456 = vpack.c.bf16 %v1051, %v1051
      %v1457 = vpack.c.bf16 %v1053, %v1053
      %v1458 = vpack.c.bf16 %v1056, %v1056
      %v1459 = vpack.c.bf16 %v1058, %v1058
      %v1460 = vpack.c.bf16 %v1076, %v1076
      %v1461 = vpack.c.bf16 %v1078, %v1078
      %v1462 = vpack.c.bf16 %v1081, %v1081
      %v1463 = vpack.c.bf16 %v1083, %v1083
      %v1472 = vunpack.c.l.b16 %v1440
      %v1473 = vunpack.c.l.b16 %v1441
      %v1474 = vunpack.c.l.b16 %v1442
      %v1475 = vunpack.c.l.b16 %v1443
      %v1476 = vunpack.c.l.b16 %v1444
      %v1477 = vunpack.c.l.b16 %v1445
      %v1478 = vunpack.c.l.b16 %v1446
      %v1479 = vunpack.c.l.b16 %v1447
      %v1480 = vpack.c.b16 %v1473, %v1472
      %v1481 = vpack.c.b16 %v1475, %v1474
      %v1482 = vpack.c.b16 %v1477, %v1476
      %v1483 = vpack.c.b16 %v1479, %v1478
      %v1488 = vunpack.c.l.b16 %v1456
      %v1489 = vunpack.c.l.b16 %v1457
      %v1490 = vunpack.c.l.b16 %v1458
      %v1491 = vunpack.c.l.b16 %v1459
      %v1492 = vpack.c.b16 %v1489, %v1488
      %v1493 = vpack.c.b16 %v1491, %v1490
      %v1497 = vsel %vm490, %v1480, 0
      %v1500 = vsel %vm490, %v1481, 0
      %v1503 = vsel %vm490, %v1482, 0
      %v1506 = vsel %vm490, %v1483, 0
      %1508 = vmatpush.bf16.msra.mxu0 0
      %1509 = vmatpush.bf16.msra.mxu0 0
      %1510 = vmatpush.bf16.msra.mxu0 0
      %1511 = vmatpush.bf16.msra.mxu0 0
      %1512 = vmatpush.bf16.msra.mxu0 0
      %1513 = vmatpush.bf16.msra.mxu0 0
      %1514 = vmatpush.bf16.msra.mxu0 %v1493
      %1515 = vmatpush.bf16.msra.mxu0 %v1492
      %1516 = vmatmul.bf16.gmra.mxu0 %v1497
      %v1517 = vpop.f32.mrf.mxu0
      %v1518 = vadd.f32 0.0, %v1517
      %v1519 = vpop.f32.mrf.mxu0
      %v1520 = vadd.f32 0.0, %v1519
      %1521 = vmatmul.bf16.gmra.mxu0 %v1500
      %v1522 = vpop.f32.mrf.mxu0
      %v1523 = vadd.f32 0.0, %v1522
      %v1524 = vpop.f32.mrf.mxu0
      %v1525 = vadd.f32 0.0, %v1524
      %1526 = vmatmul.bf16.gmra.mxu0 %v1503
      %v1527 = vpop.f32.mrf.mxu0
      %v1528 = vadd.f32 0.0, %v1527
      %v1529 = vpop.f32.mrf.mxu0
      %v1530 = vadd.f32 0.0, %v1529
      %1531 = vmatmul.bf16.gmra.mxu0 %v1506
      %v1532 = vpop.f32.mrf.mxu0
      %v1533 = vadd.f32 0.0, %v1532
      %v1534 = vpop.f32.mrf.mxu0
      %v1535 = vadd.f32 0.0, %v1534
      %1536 = vdwg.mxu0
      %v1545 = vunpack.c.l.b16 %v1448
      %v1546 = vunpack.c.l.b16 %v1449
      %v1547 = vunpack.c.l.b16 %v1450
      %v1548 = vunpack.c.l.b16 %v1451
      %v1549 = vunpack.c.l.b16 %v1452
      %v1550 = vunpack.c.l.b16 %v1453
      %v1551 = vunpack.c.l.b16 %v1454
      %v1552 = vunpack.c.l.b16 %v1455
      %v1553 = vpack.c.b16 %v1546, %v1545
      %v1554 = vpack.c.b16 %v1548, %v1547
      %v1555 = vpack.c.b16 %v1550, %v1549
      %v1556 = vpack.c.b16 %v1552, %v1551
      %v1561 = vunpack.c.l.b16 %v1460
      %v1562 = vunpack.c.l.b16 %v1461
      %v1563 = vunpack.c.l.b16 %v1462
      %v1564 = vunpack.c.l.b16 %v1463
      %v1565 = vpack.c.b16 %v1562, %v1561
      %v1566 = vpack.c.b16 %v1564, %v1563
      %v1570 = vsel %vm490, %v1553, 0
      %v1573 = vsel %vm490, %v1554, 0
      %v1576 = vsel %vm490, %v1555, 0
      %v1579 = vsel %vm490, %v1556, 0
      %1581 = vmatpush.bf16.msra.mxu0 0
      %1582 = vmatpush.bf16.msra.mxu0 0
      %1583 = vmatpush.bf16.msra.mxu0 0
      %1584 = vmatpush.bf16.msra.mxu0 0
      %1585 = vmatpush.bf16.msra.mxu0 0
      %1586 = vmatpush.bf16.msra.mxu0 0
      %1587 = vmatpush.bf16.msra.mxu0 %v1566
      %1588 = vmatpush.bf16.msra.mxu0 %v1565
      %1589 = vmatmul.bf16.gmra.mxu0 %v1570
      %v1590 = vpop.f32.mrf.mxu0
      %v1591 = vadd.f32 0.0, %v1590
      %v1592 = vpop.f32.mrf.mxu0
      %v1593 = vadd.f32 0.0, %v1592
      %1594 = vmatmul.bf16.gmra.mxu0 %v1573
      %v1595 = vpop.f32.mrf.mxu0
      %v1596 = vadd.f32 0.0, %v1595
      %v1597 = vpop.f32.mrf.mxu0
      %v1598 = vadd.f32 0.0, %v1597
      %1599 = vmatmul.bf16.gmra.mxu0 %v1576
      %v1600 = vpop.f32.mrf.mxu0
      %v1601 = vadd.f32 0.0, %v1600
      %v1602 = vpop.f32.mrf.mxu0
      %v1603 = vadd.f32 0.0, %v1602
      %1604 = vmatmul.bf16.gmra.mxu0 %v1579
      %v1605 = vpop.f32.mrf.mxu0
      %v1606 = vadd.f32 0.0, %v1605
      %v1607 = vpop.f32.mrf.mxu0
      %v1608 = vadd.f32 0.0, %v1607
      %1609 = vdwg.mxu0
      %v1610 = vpack.c.bf16 %v1518, %v1518
      %v1611 = vpack.c.bf16 %v1520, %v1520
      %v1612 = vpack.c.bf16 %v1523, %v1523
      %v1613 = vpack.c.bf16 %v1525, %v1525
      %v1614 = vpack.c.bf16 %v1528, %v1528
      %v1615 = vpack.c.bf16 %v1530, %v1530
      %v1616 = vpack.c.bf16 %v1533, %v1533
      %v1617 = vpack.c.bf16 %v1535, %v1535
      %v1618 = vpack.c.bf16 %v1591, %v1591
      %v1619 = vpack.c.bf16 %v1593, %v1593
      %v1620 = vpack.c.bf16 %v1596, %v1596
      %v1621 = vpack.c.bf16 %v1598, %v1598
      %v1622 = vpack.c.bf16 %v1601, %v1601
      %v1623 = vpack.c.bf16 %v1603, %v1603
      %v1624 = vpack.c.bf16 %v1606, %v1606
      %v1625 = vpack.c.bf16 %v1608, %v1608
      %v1626 = vld [vmem:[%s10] sm:$0xf]
      %v1627 = vld [vmem:[%s10 + $0x4] sm:$0xf]
      %v1636 = vunpack.c.l.b16 %v1610
      %v1637 = vunpack.c.l.b16 %v1611
      %v1638 = vunpack.c.l.b16 %v1612
      %v1639 = vunpack.c.l.b16 %v1613
      %v1640 = vunpack.c.l.b16 %v1614
      %v1641 = vunpack.c.l.b16 %v1615
      %v1642 = vunpack.c.l.b16 %v1616
      %v1643 = vunpack.c.l.b16 %v1617
      %v1644 = vpack.c.b16 %v1637, %v1636
      %v1645 = vpack.c.b16 %v1639, %v1638
      %v1646 = vpack.c.b16 %v1641, %v1640
      %v1647 = vpack.c.b16 %v1643, %v1642
      %v1649 = vsel %vm1139, %v1644, 0
      %v1652 = vsel %vm1139, %v1645, 0
      %v1655 = vsel %vm1139, %v1646, 0
      %v1658 = vsel %vm1139, %v1647, 0
      %vm1660 = vcmask 1043456
      %v1662 = vsel %vm1660, %v1626, 0
      %1664 = vmatpush.bf16.msra.mxu0 0
      %1665 = vmatpush.bf16.msra.mxu0 0
      %1666 = vmatpush.bf16.msra.mxu0 0
      %1667 = vmatpush.bf16.msra.mxu0 0
      %1668 = vmatpush.bf16.msra.mxu0 0
      %1669 = vmatpush.bf16.msra.mxu0 0
      %1670 = vmatpush.bf16.msra.mxu0 0
      %1671 = vmatpush.bf16.msra.mxu0 %v1662
      %1672 = vmatmul.bf16.gmra.mxu0 %v1649
      %v1673 = vpop.f32.mrf.mxu0
      %v1674 = vadd.f32 0.0, %v1673
      %v1675 = vpop.f32.mrf.mxu0
      %v1676 = vadd.f32 0.0, %v1675
      %1677 = vmatmul.bf16.gmra.mxu0 %v1652
      %v1678 = vpop.f32.mrf.mxu0
      %v1679 = vadd.f32 0.0, %v1678
      %v1680 = vpop.f32.mrf.mxu0
      %v1681 = vadd.f32 0.0, %v1680
      %1682 = vmatmul.bf16.gmra.mxu0 %v1655
      %v1683 = vpop.f32.mrf.mxu0
      %v1684 = vadd.f32 0.0, %v1683
      %v1685 = vpop.f32.mrf.mxu0
      %v1686 = vadd.f32 0.0, %v1685
      %1687 = vmatmul.bf16.gmra.mxu0 %v1658
      %v1688 = vpop.f32.mrf.mxu0
      %v1689 = vadd.f32 0.0, %v1688
      %v1690 = vpop.f32.mrf.mxu0
      %v1691 = vadd.f32 0.0, %v1690
      %1692 = vdwg.mxu0
      %v1701 = vunpack.c.l.b16 %v1618
      %v1702 = vunpack.c.l.b16 %v1619
      %v1703 = vunpack.c.l.b16 %v1620
      %v1704 = vunpack.c.l.b16 %v1621
      %v1705 = vunpack.c.l.b16 %v1622
      %v1706 = vunpack.c.l.b16 %v1623
      %v1707 = vunpack.c.l.b16 %v1624
      %v1708 = vunpack.c.l.b16 %v1625
      %v1709 = vpack.c.b16 %v1702, %v1701
      %v1710 = vpack.c.b16 %v1704, %v1703
      %v1711 = vpack.c.b16 %v1706, %v1705
      %v1712 = vpack.c.b16 %v1708, %v1707
      %v1714 = vsel %vm1139, %v1709, 0
      %v1717 = vsel %vm1139, %v1710, 0
      %v1720 = vsel %vm1139, %v1711, 0
      %v1723 = vsel %vm1139, %v1712, 0
      %v1726 = vsel %vm1660, %v1627, 0
      %1728 = vmatpush.bf16.msra.mxu0 0
      %1729 = vmatpush.bf16.msra.mxu0 0
      %1730 = vmatpush.bf16.msra.mxu0 0
      %1731 = vmatpush.bf16.msra.mxu0 0
      %1732 = vmatpush.bf16.msra.mxu0 0
      %1733 = vmatpush.bf16.msra.mxu0 0
      %1734 = vmatpush.bf16.msra.mxu0 0
      %1735 = vmatpush.bf16.msra.mxu0 %v1726
      %1736 = vmatmul.bf16.gmra.mxu0 %v1714
      %v1737 = vpop.f32.mrf.mxu0
      %v1738 = vadd.f32 0.0, %v1737
      %v1739 = vpop.f32.mrf.mxu0
      %v1740 = vadd.f32 0.0, %v1739
      %1741 = vmatmul.bf16.gmra.mxu0 %v1717
      %v1742 = vpop.f32.mrf.mxu0
      %v1743 = vadd.f32 0.0, %v1742
      %v1744 = vpop.f32.mrf.mxu0
      %v1745 = vadd.f32 0.0, %v1744
      %1746 = vmatmul.bf16.gmra.mxu0 %v1720
      %v1747 = vpop.f32.mrf.mxu0
      %v1748 = vadd.f32 0.0, %v1747
      %v1749 = vpop.f32.mrf.mxu0
      %v1750 = vadd.f32 0.0, %v1749
      %1751 = vmatmul.bf16.gmra.mxu0 %v1723
      %v1752 = vpop.f32.mrf.mxu0
      %v1753 = vadd.f32 0.0, %v1752
      %v1754 = vpop.f32.mrf.mxu0
      %v1755 = vadd.f32 0.0, %v1754
      %1756 = vdwg.mxu0
      %v1757 = vsel %vm532, %v1674, 0.0
      %v1758 = vsel %vm532, %v1738, 0.0
      %v1759 = vadd.f32 %v1757, %v1758
      %v1760 = vsel %vm532, %v1676, 0.0
      %v1761 = vsel %vm532, %v1740, 0.0
      %v1762 = vadd.f32 %v1760, %v1761
      %v1763 = vsel %vm532, %v1679, 0.0
      %v1764 = vsel %vm532, %v1743, 0.0
      %v1765 = vadd.f32 %v1763, %v1764
      %v1766 = vsel %vm532, %v1681, 0.0
      %v1767 = vsel %vm532, %v1745, 0.0
      %v1768 = vadd.f32 %v1766, %v1767
      %v1769 = vsel %vm532, %v1684, 0.0
      %v1770 = vsel %vm532, %v1748, 0.0
      %v1771 = vadd.f32 %v1769, %v1770
      %v1772 = vsel %vm532, %v1686, 0.0
      %v1773 = vsel %vm532, %v1750, 0.0
      %v1774 = vadd.f32 %v1772, %v1773
      %v1775 = vsel %vm532, %v1689, 0.0
      %v1776 = vsel %vm532, %v1753, 0.0
      %v1777 = vadd.f32 %v1775, %v1776
      %v1778 = vsel %vm532, %v1691, 0.0
      %v1779 = vsel %vm532, %v1755, 0.0
      %v1780 = vadd.f32 %v1778, %v1779
      %v1781 = vadd.f32 %v513, %v1759
      %v1782 = vadd.f32 %v515, %v1762
      %v1783 = vadd.f32 %v518, %v1765
      %v1784 = vadd.f32 %v520, %v1768
      %v1785 = vadd.f32 %v523, %v1771
      %v1786 = vadd.f32 %v525, %v1774
      %v1787 = vadd.f32 %v528, %v1777
      %v1788 = vadd.f32 %v530, %v1780
      %v1789 = vpack.c.bf16 %v1782, %v1781
      %v1790 = vpack.c.bf16 %v1784, %v1783
      %v1791 = vpack.c.bf16 %v1786, %v1785
      %v1792 = vpack.c.bf16 %v1788, %v1787
      %v1793 = vld [vmem:[%s11] sm:$0xf]
      %v1794 = vld [vmem:[%s11 + $0x4] sm:$0xf]
      %v1797 = vunpack.c.l.b16 %v1793
      %v1798 = vunpack.c.l.b16 %v1794
      %v1799 = vpack.c.b16 %v1798, %v1797
      %v1802 = vsel %vm532, %v1789, 0
      %v1805 = vsel %vm532, %v1790, 0
      %v1808 = vsel %vm532, %v1791, 0
      %v1811 = vsel %vm532, %v1792, 0
      %1813 = vmatpush.bf16.msra.mxu0 0
      %1814 = vmatpush.bf16.msra.mxu0 0
      %1815 = vmatpush.bf16.msra.mxu0 0
      %1816 = vmatpush.bf16.msra.mxu0 0
      %1817 = vmatpush.bf16.msra.mxu0 0
      %1818 = vmatpush.bf16.msra.mxu0 0
      %1819 = vmatpush.bf16.msra.mxu0 0
      %1820 = vmatpush.bf16.msra.mxu0 %v1799
      %1821 = vmatmul.bf16.gmra.mxu0 %v1802
      %v1822 = vpop.f32.mrf.mxu0
      %v1823 = vadd.f32 0.0, %v1822
      %v1824 = vpop.f32.mrf.mxu0
      %v1825 = vadd.f32 0.0, %v1824
      %1826 = vmatmul.bf16.gmra.mxu0 %v1805
      %v1827 = vpop.f32.mrf.mxu0
      %v1828 = vadd.f32 0.0, %v1827
      %v1829 = vpop.f32.mrf.mxu0
      %v1830 = vadd.f32 0.0, %v1829
      %1831 = vmatmul.bf16.gmra.mxu0 %v1808
      %v1832 = vpop.f32.mrf.mxu0
      %v1833 = vadd.f32 0.0, %v1832
      %v1834 = vpop.f32.mrf.mxu0
      %v1835 = vadd.f32 0.0, %v1834
      %1836 = vmatmul.bf16.gmra.mxu0 %v1811
      %v1837 = vpop.f32.mrf.mxu0
      %v1838 = vadd.f32 0.0, %v1837
      %v1839 = vpop.f32.mrf.mxu0
      %v1840 = vadd.f32 0.0, %v1839
      %1841 = vdwg.mxu0
      %v1842 = vadd.f32 %v1781, %v1823
      %v1843 = vadd.f32 %v1782, %v1825
      %v1844 = vadd.f32 %v1783, %v1828
      %v1845 = vadd.f32 %v1784, %v1830
      %v1846 = vadd.f32 %v1785, %v1833
      %v1847 = vadd.f32 %v1786, %v1835
      %v1848 = vadd.f32 %v1787, %v1838
      %v1849 = vadd.f32 %v1788, %v1840
      %v1850 = vld [vmem:[%s12] sm:$0x1]
      %v1852 = vperm.slane %v1850, 0
      %v1854 = vadd.f32 %v1842, %v1852
      %v1855 = vadd.f32 %v1843, %v1852
      %v1856 = vadd.f32 %v1844, %v1852
      %v1857 = vadd.f32 %v1845, %v1852
      %v1858 = vadd.f32 %v1846, %v1852
      %v1859 = vadd.f32 %v1847, %v1852
      %v1860 = vadd.f32 %v1848, %v1852
      %v1861 = vadd.f32 %v1849, %v1852
      %1862 = vst.msk [vmem:[%s440] sm:$0xff] %vm532, %v1854
      %1863 = vst.msk [vmem:[%s440 + $0x8] sm:$0xff] %vm532, %v1855
      %1864 = vst.msk [vmem:[%s440 + $0x10] sm:$0xff] %vm532, %v1856
      %1865 = vst.msk [vmem:[%s440 + $0x18] sm:$0xff] %vm532, %v1857
      %1866 = vst.msk [vmem:[%s440 + $0x20] sm:$0xff] %vm532, %v1858
      %1867 = vst.msk [vmem:[%s440 + $0x28] sm:$0xff] %vm532, %v1859
      %1868 = vst.msk [vmem:[%s440 + $0x30] sm:$0xff] %vm532, %v1860
      %1869 = vst.msk [vmem:[%s440 + $0x38] sm:$0xff] %vm532, %v1861
      %p1870 = scmp.lt.s32.totalorder %s24, 1
      %s1871 = scalar_select %p1870, %s24, 1
      %s1872 = smul.addr %s1871, 8
      %s1873 = smul.addr %s1872, 8
      %s1874 = scalar_lea.vmem %s13, %s1873
      // Predicated region
      $region73: #{hybrid_encoder_forward.2} parent=71 // pred_check
        %p1875 = pneg %p320
      $region74: #{hybrid_encoder_forward.2} parent=71 // pred_check_branch
        %1877 = sbr.rel (%p1875) target = $region76
      $region75: #{hybrid_encoder_forward.2} parent=71 // pred_region
        _
      $region76: #{hybrid_encoder_forward.2} parent=71 // pred_fallthru
        _
    $region72: #{hybrid_encoder_forward.2} parent=5 // pred_fallthru
      _
    %p1878 = scmp.le.s32.totalorder 2, %s19
    // Predicated region
    $region77: #{hybrid_encoder_forward.2} parent=5 // pred_check
      %p1879 = pneg %p1878
    $region78: #{hybrid_encoder_forward.2} parent=5 // pred_check_branch
      %1881 = sbr.rel (%p1879) target = $region80
    $region79: #{hybrid_encoder_forward.2} parent=5 // pred_region
      %s1882 = ssub.s32 %s19, 2
      // Predicated region
      $region81: #{hybrid_encoder_forward.2} parent=79 // pred_check
        %p1883 = pneg %p326
      $region82: #{hybrid_encoder_forward.2} parent=79 // pred_check_branch
        %1885 = sbr.rel (%p1883) target = $region84
      $region83: #{hybrid_encoder_forward.2} parent=79 // pred_region
        %p1886 = scmp.lt.s32.totalorder %s25, 1
        %s1887 = scalar_select %p1886, %s25, 1
        %s1888 = smul.addr %s1887, 8
        %s1889 = smul.addr %s1888, 8
        %s1890 = scalar_lea.vmem %s13, %s1889
      $region84: #{hybrid_encoder_forward.2} parent=79 // pred_fallthru
        _
    $region80: #{hybrid_encoder_forward.2} parent=5 // pred_fallthru
      _
  $region6: #{hybrid_encoder_forward.2} parent=0 // loop_footer
    %s23 = sadd.s32 1, %s19
  $region7: #{hybrid_encoder_forward.2} parent=0 // loop_footer_branch
    %18 = sbr.rel target = $region3
  $region8: #{hybrid_encoder_forward.2} parent=0 // loop_exit
    _

// kernel: hybrid_encoder_forward.3
$region0: #{hybrid_encoder_forward.3}
  #allocation0 [shape = 'u32[]', space=smem, size = 0x4, offset = 0x4, fixed_abs, tag = 'smem constant byte address 0x4 - core index']
  #allocation1 [shape = 'u32[72,128]{1,0:T(1,128)}', space=vmem, size = 0x9000, scoped, tag = 'internal scratch']
  %s0 = inlined_call_operand.vmem [shape: bf16[2,8,128], index: 0, kind: input, shape index: {}]
  %s1 = inlined_call_operand.vmem [shape: bf16[128,32], index: 1, kind: input, shape index: {}]
  %s2 = inlined_call_operand.vmem [shape: f32[1,32], index: 2, kind: input, shape index: {}]
  %s3 = inlined_call_operand.vmem [shape: f32[2,1,32], index: 3, kind: input, shape index: {}]
  %s4 = inlined_call_operand.vmem [shape: f32[2,1,32], index: 4, kind: input, shape index: {}]
  %s5 = inlined_call_operand.vmem [shape: bf16[2,4,32,8], index: 5, kind: input, shape index: {}]
  %s6 = inlined_call_operand.vmem [shape: bf16[2,4,32,8], index: 6, kind: input, shape index: {}]
  %s7 = inlined_call_operand.vmem [shape: bf16[2,4,32,8], index: 7, kind: input, shape index: {}]
  %s8 = inlined_call_operand.vmem [shape: bf16[2,8,8], index: 8, kind: input, shape index: {}]
  %s9 = inlined_call_operand.vmem [shape: bf16[2,8,8], index: 9, kind: input, shape index: {}]
  %s10 = inlined_call_operand.vmem [shape: bf16[2,4,8,32], index: 10, kind: input, shape index: {}]
  %s11 = inlined_call_operand.vmem [shape: bf16[2,32,32], index: 11, kind: input, shape index: {}]
  %s12 = inlined_call_operand.vmem [shape: f32[2,1,32], index: 12, kind: input, shape index: {}]
  %s13 = inlined_call_operand.vmem [shape: f32[2,8,32], index: 13, kind: output, shape index: {}]
  %s14 = sld [smem:[#allocation0]]
  $region85: #{hybrid_encoder_forward.3} parent=0
    _
  %s16 = ssub.s32 1, %s14
  %s17 = scalar_select 0, %s16, %s14
  loop: start=0, step=1, limit=4
  $region2: #{hybrid_encoder_forward.3} parent=0 // loop_pre_header
    _
  $region3: #{hybrid_encoder_forward.3} parent=0 // loop_header
    %s19 = sphi 0, %s23
    %p20 = scmp.ge.s32.totalorder %s19, 4
    %s29 = sphi 0, %s31
    %s32 = sphi 0, %s29
    %s33 = sphi 0, %s32
    %s49 = sphi 0, %s33
    %s53 = sphi 0, %s53
    %s55 = sphi 0, %s53
    %s56 = sphi 0, %s55
    %s70 = sphi 0, %s56
    %s74 = sphi 0, %s74
    %s76 = sphi 0, %s74
    %s77 = sphi 0, %s76
    %s91 = sphi 0, %s77
    %s95 = sphi 0, %s95
    %s97 = sphi 0, %s95
    %s98 = sphi 0, %s97
    %s112 = sphi 0, %s98
    %s116 = sphi 0, %s116
    %s118 = sphi 0, %s116
    %s119 = sphi 0, %s118
    %s133 = sphi 0, %s119
    %s137 = sphi 0, %s137
    %s139 = sphi 0, %s137
    %s140 = sphi 0, %s139
    %s154 = sphi 0, %s140
    %s158 = sphi 0, %s158
    %s160 = sphi 0, %s158
    %s161 = sphi 0, %s160
    %s175 = sphi 0, %s161
    %s179 = sphi 0, %s179
    %s181 = sphi 0, %s179
    %s182 = sphi 0, %s181
    %s196 = sphi 0, %s182
    %s200 = sphi 0, %s200
    %s202 = sphi 0, %s200
    %s203 = sphi 0, %s202
    %s217 = sphi 0, %s203
    %s221 = sphi 0, %s221
    %s223 = sphi 0, %s221
    %s224 = sphi 0, %s223
    %s238 = sphi 0, %s224
    %s242 = sphi 0, %s242
    %s244 = sphi 0, %s242
    %s245 = sphi 0, %s244
    %s259 = sphi 0, %s245
    %s263 = sphi 0, %s263
    %s265 = sphi 0, %s263
    %s266 = sphi 0, %s265
    %s280 = sphi 0, %s266
    %s284 = sphi 0, %s284
    %s286 = sphi 0, %s284
    %s287 = sphi 0, %s286
    %s301 = sphi 0, %s287
    %s307 = sphi 0, %s309
    %s310 = sphi 0, %s307
    %s311 = sphi 0, %s310
    %s327 = sphi 0, %s311
  $region4: #{hybrid_encoder_forward.3} parent=0 // loop_header_branch
    %22 = sbr.rel (%p20) target = $region8
  $region5: #{hybrid_encoder_forward.3} parent=0 // loop_body
    %s24 = ssub.s32 %s19, 1
    %s25 = ssub.s32 %s19, 2
    %s26 = sadd.s32 %s19, 1
    %s27 = ssub.s32 %s19, %s26
    %p28 = scmp.eq.s32.totalorder %s27, 0
    %s30 = sadd.s32 %s29, 1
    %s31 = scalar_select %p28, %s29, %s30
    %p34 = pneg %p28
    %p35 = scmp.eq.s32.totalorder %s19, 1
    %p36 = por %p34, %p35
    %p37 = scmp.ne.s32.totalorder %s29, %s32
    %p38 = scmp.eq.s32.totalorder %s19, 0
    %p39 = por %p37, %p38
    %p40 = scmp.ne.s32.totalorder %s29, %s32
    %p41 = scmp.eq.s32.totalorder %s24, 1
    %p42 = por %p40, %p41
    %p43 = scmp.ne.s32.totalorder %s32, %s33
    %p44 = scmp.eq.s32.totalorder %s24, 0
    %p45 = por %p43, %p44
    %p46 = scmp.ne.s32.totalorder %s32, %s33
    %p47 = scmp.eq.s32.totalorder %s25, 1
    %p48 = por %p46, %p47
    %p50 = scmp.ne.s32.totalorder %s33, %s49
    %p51 = scmp.eq.s32.totalorder %s25, 0
    %p52 = por %p50, %p51
    %s54 = sadd.s32 %s53, 1
    %p57 = scmp.eq.s32.totalorder %s19, 1
    %p58 = scmp.ne.s32.totalorder %s53, %s55
    %p59 = scmp.eq.s32.totalorder %s19, 0
    %p60 = por %p58, %p59
    %p61 = scmp.ne.s32.totalorder %s53, %s55
    %p62 = scmp.eq.s32.totalorder %s24, 1
    %p63 = por %p61, %p62
    %p64 = scmp.ne.s32.totalorder %s55, %s56
    %p65 = scmp.eq.s32.totalorder %s24, 0
    %p66 = por %p64, %p65
    %p67 = scmp.ne.s32.totalorder %s55, %s56
    %p68 = scmp.eq.s32.totalorder %s25, 1
    %p69 = por %p67, %p68
    %p71 = scmp.ne.s32.totalorder %s56, %s70
    %p72 = scmp.eq.s32.totalorder %s25, 0
    %p73 = por %p71, %p72
    %s75 = sadd.s32 %s74, 1
    %p78 = scmp.eq.s32.totalorder %s19, 1
    %p79 = scmp.ne.s32.totalorder %s74, %s76
    %p80 = scmp.eq.s32.totalorder %s19, 0
    %p81 = por %p79, %p80
    %p82 = scmp.ne.s32.totalorder %s74, %s76
    %p83 = scmp.eq.s32.totalorder %s24, 1
    %p84 = por %p82, %p83
    %p85 = scmp.ne.s32.totalorder %s76, %s77
    %p86 = scmp.eq.s32.totalorder %s24, 0
    %p87 = por %p85, %p86
    %p88 = scmp.ne.s32.totalorder %s76, %s77
    %p89 = scmp.eq.s32.totalorder %s25, 1
    %p90 = por %p88, %p89
    %p92 = scmp.ne.s32.totalorder %s77, %s91
    %p93 = scmp.eq.s32.totalorder %s25, 0
    %p94 = por %p92, %p93
    %s96 = sadd.s32 %s95, 1
    %p99 = scmp.eq.s32.totalorder %s19, 1
    %p100 = scmp.ne.s32.totalorder %s95, %s97
    %p101 = scmp.eq.s32.totalorder %s19, 0
    %p102 = por %p100, %p101
    %p103 = scmp.ne.s32.totalorder %s95, %s97
    %p104 = scmp.eq.s32.totalorder %s24, 1
    %p105 = por %p103, %p104
    %p106 = scmp.ne.s32.totalorder %s97, %s98
    %p107 = scmp.eq.s32.totalorder %s24, 0
    %p108 = por %p106, %p107
    %p109 = scmp.ne.s32.totalorder %s97, %s98
    %p110 = scmp.eq.s32.totalorder %s25, 1
    %p111 = por %p109, %p110
    %p113 = scmp.ne.s32.totalorder %s98, %s112
    %p114 = scmp.eq.s32.totalorder %s25, 0
    %p115 = por %p113, %p114
    %s117 = sadd.s32 %s116, 1
    %p120 = scmp.eq.s32.totalorder %s19, 1
    %p121 = scmp.ne.s32.totalorder %s116, %s118
    %p122 = scmp.eq.s32.totalorder %s19, 0
    %p123 = por %p121, %p122
    %p124 = scmp.ne.s32.totalorder %s116, %s118
    %p125 = scmp.eq.s32.totalorder %s24, 1
    %p126 = por %p124, %p125
    %p127 = scmp.ne.s32.totalorder %s118, %s119
    %p128 = scmp.eq.s32.totalorder %s24, 0
    %p129 = por %p127, %p128
    %p130 = scmp.ne.s32.totalorder %s118, %s119
    %p131 = scmp.eq.s32.totalorder %s25, 1
    %p132 = por %p130, %p131
    %p134 = scmp.ne.s32.totalorder %s119, %s133
    %p135 = scmp.eq.s32.totalorder %s25, 0
    %p136 = por %p134, %p135
    %s138 = sadd.s32 %s137, 1
    %p141 = scmp.eq.s32.totalorder %s19, 1
    %p142 = scmp.ne.s32.totalorder %s137, %s139
    %p143 = scmp.eq.s32.totalorder %s19, 0
    %p144 = por %p142, %p143
    %p145 = scmp.ne.s32.totalorder %s137, %s139
    %p146 = scmp.eq.s32.totalorder %s24, 1
    %p147 = por %p145, %p146
    %p148 = scmp.ne.s32.totalorder %s139, %s140
    %p149 = scmp.eq.s32.totalorder %s24, 0
    %p150 = por %p148, %p149
    %p151 = scmp.ne.s32.totalorder %s139, %s140
    %p152 = scmp.eq.s32.totalorder %s25, 1
    %p153 = por %p151, %p152
    %p155 = scmp.ne.s32.totalorder %s140, %s154
    %p156 = scmp.eq.s32.totalorder %s25, 0
    %p157 = por %p155, %p156
    %s159 = sadd.s32 %s158, 1
    %p162 = scmp.eq.s32.totalorder %s19, 1
    %p163 = scmp.ne.s32.totalorder %s158, %s160
    %p164 = scmp.eq.s32.totalorder %s19, 0
    %p165 = por %p163, %p164
    %p166 = scmp.ne.s32.totalorder %s158, %s160
    %p167 = scmp.eq.s32.totalorder %s24, 1
    %p168 = por %p166, %p167
    %p169 = scmp.ne.s32.totalorder %s160, %s161
    %p170 = scmp.eq.s32.totalorder %s24, 0
    %p171 = por %p169, %p170
    %p172 = scmp.ne.s32.totalorder %s160, %s161
    %p173 = scmp.eq.s32.totalorder %s25, 1
    %p174 = por %p172, %p173
    %p176 = scmp.ne.s32.totalorder %s161, %s175
    %p177 = scmp.eq.s32.totalorder %s25, 0
    %p178 = por %p176, %p177
    %s180 = sadd.s32 %s179, 1
    %p183 = scmp.eq.s32.totalorder %s19, 1
    %p184 = scmp.ne.s32.totalorder %s179, %s181
    %p185 = scmp.eq.s32.totalorder %s19, 0
    %p186 = por %p184, %p185
    %p187 = scmp.ne.s32.totalorder %s179, %s181
    %p188 = scmp.eq.s32.totalorder %s24, 1
    %p189 = por %p187, %p188
    %p190 = scmp.ne.s32.totalorder %s181, %s182
    %p191 = scmp.eq.s32.totalorder %s24, 0
    %p192 = por %p190, %p191
    %p193 = scmp.ne.s32.totalorder %s181, %s182
    %p194 = scmp.eq.s32.totalorder %s25, 1
    %p195 = por %p193, %p194
    %p197 = scmp.ne.s32.totalorder %s182, %s196
    %p198 = scmp.eq.s32.totalorder %s25, 0
    %p199 = por %p197, %p198
    %s201 = sadd.s32 %s200, 1
    %p204 = scmp.eq.s32.totalorder %s19, 1
    %p205 = scmp.ne.s32.totalorder %s200, %s202
    %p206 = scmp.eq.s32.totalorder %s19, 0
    %p207 = por %p205, %p206
    %p208 = scmp.ne.s32.totalorder %s200, %s202
    %p209 = scmp.eq.s32.totalorder %s24, 1
    %p210 = por %p208, %p209
    %p211 = scmp.ne.s32.totalorder %s202, %s203
    %p212 = scmp.eq.s32.totalorder %s24, 0
    %p213 = por %p211, %p212
    %p214 = scmp.ne.s32.totalorder %s202, %s203
    %p215 = scmp.eq.s32.totalorder %s25, 1
    %p216 = por %p214, %p215
    %p218 = scmp.ne.s32.totalorder %s203, %s217
    %p219 = scmp.eq.s32.totalorder %s25, 0
    %p220 = por %p218, %p219
    %s222 = sadd.s32 %s221, 1
    %p225 = scmp.eq.s32.totalorder %s19, 1
    %p226 = scmp.ne.s32.totalorder %s221, %s223
    %p227 = scmp.eq.s32.totalorder %s19, 0
    %p228 = por %p226, %p227
    %p229 = scmp.ne.s32.totalorder %s221, %s223
    %p230 = scmp.eq.s32.totalorder %s24, 1
    %p231 = por %p229, %p230
    %p232 = scmp.ne.s32.totalorder %s223, %s224
    %p233 = scmp.eq.s32.totalorder %s24, 0
    %p234 = por %p232, %p233
    %p235 = scmp.ne.s32.totalorder %s223, %s224
    %p236 = scmp.eq.s32.totalorder %s25, 1
    %p237 = por %p235, %p236
    %p239 = scmp.ne.s32.totalorder %s224, %s238
    %p240 = scmp.eq.s32.totalorder %s25, 0
    %p241 = por %p239, %p240
    %s243 = sadd.s32 %s242, 1
    %p246 = scmp.eq.s32.totalorder %s19, 1
    %p247 = scmp.ne.s32.totalorder %s242, %s244
    %p248 = scmp.eq.s32.totalorder %s19, 0
    %p249 = por %p247, %p248
    %p250 = scmp.ne.s32.totalorder %s242, %s244
    %p251 = scmp.eq.s32.totalorder %s24, 1
    %p252 = por %p250, %p251
    %p253 = scmp.ne.s32.totalorder %s244, %s245
    %p254 = scmp.eq.s32.totalorder %s24, 0
    %p255 = por %p253, %p254
    %p256 = scmp.ne.s32.totalorder %s244, %s245
    %p257 = scmp.eq.s32.totalorder %s25, 1
    %p258 = por %p256, %p257
    %p260 = scmp.ne.s32.totalorder %s245, %s259
    %p261 = scmp.eq.s32.totalorder %s25, 0
    %p262 = por %p260, %p261
    %s264 = sadd.s32 %s263, 1
    %p267 = scmp.eq.s32.totalorder %s19, 1
    %p268 = scmp.ne.s32.totalorder %s263, %s265
    %p269 = scmp.eq.s32.totalorder %s19, 0
    %p270 = por %p268, %p269
    %p271 = scmp.ne.s32.totalorder %s263, %s265
    %p272 = scmp.eq.s32.totalorder %s24, 1
    %p273 = por %p271, %p272
    %p274 = scmp.ne.s32.totalorder %s265, %s266
    %p275 = scmp.eq.s32.totalorder %s24, 0
    %p276 = por %p274, %p275
    %p277 = scmp.ne.s32.totalorder %s265, %s266
    %p278 = scmp.eq.s32.totalorder %s25, 1
    %p279 = por %p277, %p278
    %p281 = scmp.ne.s32.totalorder %s266, %s280
    %p282 = scmp.eq.s32.totalorder %s25, 0
    %p283 = por %p281, %p282
    %s285 = sadd.s32 %s284, 1
    %p288 = scmp.eq.s32.totalorder %s19, 1
    %p289 = scmp.ne.s32.totalorder %s284, %s286
    %p290 = scmp.eq.s32.totalorder %s19, 0
    %p291 = por %p289, %p290
    %p292 = scmp.ne.s32.totalorder %s284, %s286
    %p293 = scmp.eq.s32.totalorder %s24, 1
    %p294 = por %p292, %p293
    %p295 = scmp.ne.s32.totalorder %s286, %s287
    %p296 = scmp.eq.s32.totalorder %s24, 0
    %p297 = por %p295, %p296
    %p298 = scmp.ne.s32.totalorder %s286, %s287
    %p299 = scmp.eq.s32.totalorder %s25, 1
    %p300 = por %p298, %p299
    %p302 = scmp.ne.s32.totalorder %s287, %s301
    %p303 = scmp.eq.s32.totalorder %s25, 0
    %p304 = por %p302, %p303
    %s305 = ssub.s32 %s19, %s26
    %p306 = scmp.eq.s32.totalorder %s305, 0
    %s308 = sadd.s32 %s307, 1
    %s309 = scalar_select %p306, %s307, %s308
    %p312 = pneg %p306
    %p313 = scmp.eq.s32.totalorder %s19, 1
    %p314 = por %p312, %p313
    %p315 = scmp.ne.s32.totalorder %s307, %s310
    %p316 = scmp.eq.s32.totalorder %s19, 0
    %p317 = por %p315, %p316
    %p318 = scmp.ne.s32.totalorder %s307, %s310
    %p319 = scmp.eq.s32.totalorder %s24, 1
    %p320 = por %p318, %p319
    %p321 = scmp.ne.s32.totalorder %s310, %s311
    %p322 = scmp.eq.s32.totalorder %s24, 0
    %p323 = por %p321, %p322
    %p324 = scmp.ne.s32.totalorder %s310, %s311
    %p325 = scmp.eq.s32.totalorder %s25, 1
    %p326 = por %p324, %p325
    %p328 = scmp.ne.s32.totalorder %s311, %s327
    %p329 = scmp.eq.s32.totalorder %s25, 0
    %p330 = por %p328, %p329
    %p331 = scmp.le.s32.totalorder 1, %s19
    %p332 = scmp.lt.s32.totalorder %s19, 3
    %p333 = pnand %p331, %p332
    %p334 = pneg %p333
    // Predicated region
    $region9: #{hybrid_encoder_forward.3} parent=5 // pred_check
      _
    $region10: #{hybrid_encoder_forward.3} parent=5 // pred_check_branch
      %336 = sbr.rel (%p333) target = $region12
    $region11: #{hybrid_encoder_forward.3} parent=5 // pred_region
      %s337 = ssub.s32 %s19, 1
      // Predicated region
      $region13: #{hybrid_encoder_forward.3} parent=11 // pred_check
        %p338 = pneg %p66
      $region14: #{hybrid_encoder_forward.3} parent=11 // pred_check_branch
        %340 = sbr.rel (%p338) target = $region16
      $region15: #{hybrid_encoder_forward.3} parent=11 // pred_region
        _
      $region16: #{hybrid_encoder_forward.3} parent=11 // pred_fallthru
        _
      // Predicated region
      $region17: #{hybrid_encoder_forward.3} parent=11 // pred_check
        %p341 = pneg %p87
      $region18: #{hybrid_encoder_forward.3} parent=11 // pred_check_branch
        %343 = sbr.rel (%p341) target = $region20
      $region19: #{hybrid_encoder_forward.3} parent=11 // pred_region
        _
      $region20: #{hybrid_encoder_forward.3} parent=11 // pred_fallthru
        _
      // Predicated region
      $region21: #{hybrid_encoder_forward.3} parent=11 // pred_check
        %p344 = pneg %p108
      $region22: #{hybrid_encoder_forward.3} parent=11 // pred_check_branch
        %346 = sbr.rel (%p344) target = $region24
      $region23: #{hybrid_encoder_forward.3} parent=11 // pred_region
        _
      $region24: #{hybrid_encoder_forward.3} parent=11 // pred_fallthru
        _
      // Predicated region
      $region25: #{hybrid_encoder_forward.3} parent=11 // pred_check
        %p347 = pneg %p129
      $region26: #{hybrid_encoder_forward.3} parent=11 // pred_check_branch
        %349 = sbr.rel (%p347) target = $region28
      $region27: #{hybrid_encoder_forward.3} parent=11 // pred_region
        _
      $region28: #{hybrid_encoder_forward.3} parent=11 // pred_fallthru
        _
      // Predicated region
      $region29: #{hybrid_encoder_forward.3} parent=11 // pred_check
        %p350 = pneg %p150
      $region30: #{hybrid_encoder_forward.3} parent=11 // pred_check_branch
        %352 = sbr.rel (%p350) target = $region32
      $region31: #{hybrid_encoder_forward.3} parent=11 // pred_region
        _
      $region32: #{hybrid_encoder_forward.3} parent=11 // pred_fallthru
        _
      // Predicated region
      $region33: #{hybrid_encoder_forward.3} parent=11 // pred_check
        %p353 = pneg %p171
      $region34: #{hybrid_encoder_forward.3} parent=11 // pred_check_branch
        %355 = sbr.rel (%p353) target = $region36
      $region35: #{hybrid_encoder_forward.3} parent=11 // pred_region
        _
      $region36: #{hybrid_encoder_forward.3} parent=11 // pred_fallthru
        _
      // Predicated region
      $region37: #{hybrid_encoder_forward.3} parent=11 // pred_check
        %p356 = pneg %p192
      $region38: #{hybrid_encoder_forward.3} parent=11 // pred_check_branch
        %358 = sbr.rel (%p356) target = $region40
      $region39: #{hybrid_encoder_forward.3} parent=11 // pred_region
        _
      $region40: #{hybrid_encoder_forward.3} parent=11 // pred_fallthru
        _
      // Predicated region
      $region41: #{hybrid_encoder_forward.3} parent=11 // pred_check
        %p359 = pneg %p213
      $region42: #{hybrid_encoder_forward.3} parent=11 // pred_check_branch
        %361 = sbr.rel (%p359) target = $region44
      $region43: #{hybrid_encoder_forward.3} parent=11 // pred_region
        _
      $region44: #{hybrid_encoder_forward.3} parent=11 // pred_fallthru
        _
      // Predicated region
      $region45: #{hybrid_encoder_forward.3} parent=11 // pred_check
        %p362 = pneg %p234
      $region46: #{hybrid_encoder_forward.3} parent=11 // pred_check_branch
        %364 = sbr.rel (%p362) target = $region48
      $region47: #{hybrid_encoder_forward.3} parent=11 // pred_region
        _
      $region48: #{hybrid_encoder_forward.3} parent=11 // pred_fallthru
        _
      // Predicated region
      $region49: #{hybrid_encoder_forward.3} parent=11 // pred_check
        %p365 = pneg %p255
      $region50: #{hybrid_encoder_forward.3} parent=11 // pred_check_branch
        %367 = sbr.rel (%p365) target = $region52
      $region51: #{hybrid_encoder_forward.3} parent=11 // pred_region
        _
      $region52: #{hybrid_encoder_forward.3} parent=11 // pred_fallthru
        _
      // Predicated region
      $region53: #{hybrid_encoder_forward.3} parent=11 // pred_check
        %p368 = pneg %p276
      $region54: #{hybrid_encoder_forward.3} parent=11 // pred_check_branch
        %370 = sbr.rel (%p368) target = $region56
      $region55: #{hybrid_encoder_forward.3} parent=11 // pred_region
        _
      $region56: #{hybrid_encoder_forward.3} parent=11 // pred_fallthru
        _
      // Predicated region
      $region57: #{hybrid_encoder_forward.3} parent=11 // pred_check
        %p371 = pneg %p297
      $region58: #{hybrid_encoder_forward.3} parent=11 // pred_check_branch
        %373 = sbr.rel (%p371) target = $region60
      $region59: #{hybrid_encoder_forward.3} parent=11 // pred_region
        _
      $region60: #{hybrid_encoder_forward.3} parent=11 // pred_fallthru
        _
    $region12: #{hybrid_encoder_forward.3} parent=5 // pred_fallthru
      _
    %p374 = scmp.lt.s32.totalorder %s19, 2
    // Predicated region
    $region61: #{hybrid_encoder_forward.3} parent=5 // pred_check
      %p375 = pneg %p374
    $region62: #{hybrid_encoder_forward.3} parent=5 // pred_check_branch
      %377 = sbr.rel (%p375) target = $region64
    $region63: #{hybrid_encoder_forward.3} parent=5 // pred_region
      // Predicated region
      $region65: #{hybrid_encoder_forward.3} parent=63 // pred_check
        %p378 = pneg %p39
      $region66: #{hybrid_encoder_forward.3} parent=63 // pred_check_branch
        %380 = sbr.rel (%p378) target = $region68
      $region67: #{hybrid_encoder_forward.3} parent=63 // pred_region
        %p381 = scmp.lt.s32.totalorder %s19, 1
        %s382 = scalar_select %p381, %s19, 1
        %s383 = smul.addr %s382, 4
        %s384 = scalar_lea.vmem %s0, %s383
      $region68: #{hybrid_encoder_forward.3} parent=63 // pred_fallthru
        _
    $region64: #{hybrid_encoder_forward.3} parent=5 // pred_fallthru
      _
    %p385 = scmp.le.s32.totalorder 1, %s19
    %p386 = scmp.lt.s32.totalorder %s19, 3
    %p387 = pnand %p385, %p386
    %p388 = pneg %p387
    // Predicated region
    $region69: #{hybrid_encoder_forward.3} parent=5 // pred_check
      _
    $region70: #{hybrid_encoder_forward.3} parent=5 // pred_check_branch
      %390 = sbr.rel (%p387) target = $region72
    $region71: #{hybrid_encoder_forward.3} parent=5 // pred_region
      %s391 = ssub.s32 %s19, 1
      %p392 = scmp.lt.s32.totalorder %s24, 1
      %s393 = scalar_select %p392, %s24, 1
      %s394 = smul.addr %s393, 4
      %s395 = scalar_lea.vmem %s0, %s394
      %p396 = pneg %p45
      %p397 = pneg %p42
      %p398 = pneg %p66
      %p399 = pneg %p63
      %p400 = pneg %p87
      %p401 = pneg %p84
      %p402 = pneg %p108
      %p403 = pneg %p105
      %p404 = pneg %p129
      %p405 = pneg %p126
      %p406 = pneg %p150
      %p407 = pneg %p147
      %p408 = pneg %p171
      %p409 = pneg %p168
      %p410 = pneg %p192
      %p411 = pneg %p189
      %p412 = pneg %p213
      %p413 = pneg %p210
      %p414 = pneg %p234
      %p415 = pneg %p231
      %p416 = pneg %p255
      %p417 = pneg %p252
      %p418 = pneg %p276
      %p419 = pneg %p273
      %p420 = pneg %p297
      %p421 = pneg %p294
      %p422 = pneg %p323
      %p423 = pneg %p320
      %p424 = scmp.lt.s32.totalorder %s24, 1
      %s425 = scalar_select %p424, %s24, 1
      %s426 = smul.addr %s425, 8
      %s427 = scalar_lea.vmem %s13, %s426
      %p428 = scmp.lt.s32.totalorder %s24, 1
      %s429 = scalar_select %p428, %s24, 1
      %s430 = smul.addr %s429, 4
      %s431 = scalar_lea.vmem %s0, %s430
      %p432 = scmp.lt.s32.totalorder %s24, 1
      %s433 = scalar_select %p432, %s24, 1
      %s434 = smul.addr %s433, 8
      %s435 = scalar_lea.vmem %s13, %s434
      %v437 = vld [vmem:[%s431] sm:$0xf]
      %v438 = vld [vmem:[%s1] sm:$0xf]
      %v439 = vld [vmem:[%s1 + $0x4] sm:$0xf]
      %v440 = vld [vmem:[%s1 + $0x8] sm:$0xf]
      %v441 = vld [vmem:[%s1 + $0xc] sm:$0xf]
      %v442 = vld [vmem:[%s1 + $0x10] sm:$0xf]
      %v443 = vld [vmem:[%s1 + $0x14] sm:$0xf]
      %v444 = vld [vmem:[%s1 + $0x18] sm:$0xf]
      %v445 = vld [vmem:[%s1 + $0x1c] sm:$0xf]
      %v446 = vld [vmem:[%s1 + $0x20] sm:$0xf]
      %v447 = vld [vmem:[%s1 + $0x24] sm:$0xf]
      %v448 = vld [vmem:[%s1 + $0x28] sm:$0xf]
      %v449 = vld [vmem:[%s1 + $0x2c] sm:$0xf]
      %v450 = vld [vmem:[%s1 + $0x30] sm:$0xf]
      %v451 = vld [vmem:[%s1 + $0x34] sm:$0xf]
      %v452 = vld [vmem:[%s1 + $0x38] sm:$0xf]
      %v453 = vld [vmem:[%s1 + $0x3c] sm:$0xf]
      %v454 = vld [vmem:[%s2] sm:$0x1]
      %v456 = vperm.slane %v454, 0
      %v474 = vunpack.c.l.b16 %v438
      %v475 = vunpack.c.l.b16 %v439
      %v476 = vunpack.c.l.b16 %v440
      %v477 = vunpack.c.l.b16 %v441
      %v478 = vunpack.c.l.b16 %v442
      %v479 = vunpack.c.l.b16 %v443
      %v480 = vunpack.c.l.b16 %v444
      %v481 = vunpack.c.l.b16 %v445
      %v482 = vunpack.c.l.b16 %v446
      %v483 = vunpack.c.l.b16 %v447
      %v484 = vunpack.c.l.b16 %v448
      %v485 = vunpack.c.l.b16 %v449
      %v486 = vunpack.c.l.b16 %v450
      %v487 = vunpack.c.l.b16 %v451
      %v488 = vunpack.c.l.b16 %v452
      %v489 = vunpack.c.l.b16 %v453
      %v490 = vpack.c.b16 %v475, %v474
      %v491 = vpack.c.b16 %v477, %v476
      %v492 = vpack.c.b16 %v479, %v478
      %v493 = vpack.c.b16 %v481, %v480
      %v494 = vpack.c.b16 %v483, %v482
      %v495 = vpack.c.b16 %v485, %v484
      %v496 = vpack.c.b16 %v487, %v486
      %v497 = vpack.c.b16 %v489, %v488
      %506 = vmatpush.bf16.msra.mxu0 %v497
      %507 = vmatpush.bf16.msra.mxu0 %v496
      %508 = vmatpush.bf16.msra.mxu0 %v495
      %509 = vmatpush.bf16.msra.mxu0 %v494
      %510 = vmatpush.bf16.msra.mxu0 %v493
      %511 = vmatpush.bf16.msra.mxu0 %v492
      %512 = vmatpush.bf16.msra.mxu0 %v491
      %513 = vmatpush.bf16.msra.mxu0 %v490
      %514 = vmatmul.bf16.gmra.mxu0 %v437
      %v515 = vpop.f32.mrf.mxu0
      %v516 = vadd.f32 %v456, %v515
      %v517 = vpop.f32.mrf.mxu0
      %518 = vdwg.mxu0
      %vm519 = vcmask 261120
      %v520 = vsel %vm519, %v516, 0.0
      %521 = vadd.xlane.f32.xlu0 %v520
      %v522 = vpop.xlane.xlu0 %521
      %v523 = vrcp.pop 32.0
      %v524 = vmul.f32 32.0, %v523
      %v525 = vsub.f32 1.0, %v524
      %v526 = vmul.f32 %v523, %v525
      %v527 = vadd.f32 %v523, %v526
      %vm528 = vweird.f32 %v523
      %v529 = vsel %vm528, %v523, %v527
      %v530 = vmul.f32 %v522, %v529
      %v531 = vsub.f32 %v516, %v530
      %v532 = vmul.f32 %v531, %v531
      %v533 = vsel %vm519, %v532, 0.0
      %534 = vadd.xlane.f32.xlu0 %v533
      %v535 = vpop.xlane.xlu0 %534
      %v536 = vmul.f32 %v535, %v529
      %v537 = vadd.f32 %v536, 1e-05
      %v538 = vrsqrt.pop %v537
      %v539 = vmul.f32 %v538, %v537
      %v540 = vmul.f32 %v539, %v538
      %v541 = vmul.f32 0.5, %v540
      %v542 = vsub.f32 1.5, %v541
      %v543 = vmul.f32 %v538, %v542
      %vm544 = vweird.f32 %v537
      %vm545 = vweird.f32 %v538
      %vm546 = vmor %vm544, %vm545
      %v547 = vsel %vm546, %v538, %v543
      %v548 = vmul.f32 %v531, %v547
      %v549 = vld [vmem:[%s3] sm:$0x1]
      %v551 = vperm.slane %v549, 0
      %v553 = vmul.f32 %v548, %v551
      %v554 = vld [vmem:[%s4] sm:$0x1]
      %v556 = vperm.slane %v554, 0
      %v558 = vadd.f32 %v553, %v556
      %v559 = vpack.c.bf16 %v558, %v558
      %v560 = vld [vmem:[%s5] sm:$0xf]
      %v561 = vld [vmem:[%s5 + $0x4] sm:$0xf]
      %v562 = vld [vmem:[%s5 + $0x8] sm:$0xf]
      %v563 = vld [vmem:[%s5 + $0xc] sm:$0xf]
      %v564 = vld [vmem:[%s5 + $0x10] sm:$0xf]
      %v565 = vld [vmem:[%s5 + $0x14] sm:$0xf]
      %v566 = vld [vmem:[%s5 + $0x18] sm:$0xf]
      %v567 = vld [vmem:[%s5 + $0x1c] sm:$0xf]
      %v568 = vld [vmem:[%s5 + $0x20] sm:$0xf]
      %v569 = vld [vmem:[%s5 + $0x24] sm:$0xf]
      %v570 = vld [vmem:[%s5 + $0x28] sm:$0xf]
      %v571 = vld [vmem:[%s5 + $0x2c] sm:$0xf]
      %v572 = vld [vmem:[%s5 + $0x30] sm:$0xf]
      %v573 = vld [vmem:[%s5 + $0x34] sm:$0xf]
      %v574 = vld [vmem:[%s5 + $0x38] sm:$0xf]
      %v575 = vld [vmem:[%s5 + $0x3c] sm:$0xf]
      %v580 = vunpack.c.l.b16 %v560
      %v581 = vunpack.c.l.b16 %v561
      %v582 = vunpack.c.l.b16 %v562
      %v583 = vunpack.c.l.b16 %v563
      %v584 = vpack.c.b16 %v581, %v580
      %v585 = vpack.c.b16 %v583, %v582
      %v589 = vsel %vm519, %v559, 0
      %591 = vmatpush.bf16.msra.mxu0 0
      %592 = vmatpush.bf16.msra.mxu0 0
      %593 = vmatpush.bf16.msra.mxu0 0
      %594 = vmatpush.bf16.msra.mxu0 0
      %595 = vmatpush.bf16.msra.mxu0 0
      %596 = vmatpush.bf16.msra.mxu0 0
      %597 = vmatpush.bf16.msra.mxu0 %v585
      %598 = vmatpush.bf16.msra.mxu0 %v584
      %599 = vmatmul.bf16.gmra.mxu0 %v589
      %v600 = vpop.f32.mrf.mxu0
      %v601 = vadd.f32 0.0, %v600
      %v602 = vpop.f32.mrf.mxu0
      %603 = vdwg.mxu0
      %v608 = vunpack.c.l.b16 %v564
      %v609 = vunpack.c.l.b16 %v565
      %v610 = vunpack.c.l.b16 %v566
      %v611 = vunpack.c.l.b16 %v567
      %v612 = vpack.c.b16 %v609, %v608
      %v613 = vpack.c.b16 %v611, %v610
      %616 = vmatpush.bf16.msra.mxu0 0
      %617 = vmatpush.bf16.msra.mxu0 0
      %618 = vmatpush.bf16.msra.mxu0 0
      %619 = vmatpush.bf16.msra.mxu0 0
      %620 = vmatpush.bf16.msra.mxu0 0
      %621 = vmatpush.bf16.msra.mxu0 0
      %622 = vmatpush.bf16.msra.mxu0 %v613
      %623 = vmatpush.bf16.msra.mxu0 %v612
      %624 = vmatmul.bf16.gmra.mxu0 %v589
      %v625 = vpop.f32.mrf.mxu0
      %v626 = vadd.f32 0.0, %v625
      %v627 = vpop.f32.mrf.mxu0
      %628 = vdwg.mxu0
      %v633 = vunpack.c.l.b16 %v568
      %v634 = vunpack.c.l.b16 %v569
      %v635 = vunpack.c.l.b16 %v570
      %v636 = vunpack.c.l.b16 %v571
      %v637 = vpack.c.b16 %v634, %v633
      %v638 = vpack.c.b16 %v636, %v635
      %641 = vmatpush.bf16.msra.mxu0 0
      %642 = vmatpush.bf16.msra.mxu0 0
      %643 = vmatpush.bf16.msra.mxu0 0
      %644 = vmatpush.bf16.msra.mxu0 0
      %645 = vmatpush.bf16.msra.mxu0 0
      %646 = vmatpush.bf16.msra.mxu0 0
      %647 = vmatpush.bf16.msra.mxu0 %v638
      %648 = vmatpush.bf16.msra.mxu0 %v637
      %649 = vmatmul.bf16.gmra.mxu0 %v589
      %v650 = vpop.f32.mrf.mxu0
      %v651 = vadd.f32 0.0, %v650
      %v652 = vpop.f32.mrf.mxu0
      %653 = vdwg.mxu0
      %v658 = vunpack.c.l.b16 %v572
      %v659 = vunpack.c.l.b16 %v573
      %v660 = vunpack.c.l.b16 %v574
      %v661 = vunpack.c.l.b16 %v575
      %v662 = vpack.c.b16 %v659, %v658
      %v663 = vpack.c.b16 %v661, %v660
      %666 = vmatpush.bf16.msra.mxu0 0
      %667 = vmatpush.bf16.msra.mxu0 0
      %668 = vmatpush.bf16.msra.mxu0 0
      %669 = vmatpush.bf16.msra.mxu0 0
      %670 = vmatpush.bf16.msra.mxu0 0
      %671 = vmatpush.bf16.msra.mxu0 0
      %672 = vmatpush.bf16.msra.mxu0 %v663
      %673 = vmatpush.bf16.msra.mxu0 %v662
      %674 = vmatmul.bf16.gmra.mxu0 %v589
      %v675 = vpop.f32.mrf.mxu0
      %v676 = vadd.f32 0.0, %v675
      %v677 = vpop.f32.mrf.mxu0
      %678 = vdwg.mxu0
      %v679 = vld [vmem:[%s8] sm:$0xf]
      %vm680 = vcmask 64512
      %v682 = vsel %vm680, %v679, 0
      %vm684 = vcmask 1043456
      %v685 = vsel %vm684, %v559, 0
      %687 = vmatpush.bf16.msra.mxu0 0
      %688 = vmatpush.bf16.msra.mxu0 0
      %689 = vmatpush.bf16.msra.mxu0 0
      %690 = vmatpush.bf16.msra.mxu0 0
      %691 = vmatpush.bf16.msra.mxu0 0
      %692 = vmatpush.bf16.msra.mxu0 0
      %693 = vmatpush.bf16.msra.mxu0 0
      %694 = vmatpush.bf16.msra.mxu0 %v685
      %695 = vmatmul.bf16.gmra.mxu0 %v682
      %v696 = vpop.f32.mrf.mxu0
      %v697 = vadd.f32 0.0, %v696
      %v698 = vpop.f32.mrf.mxu0
      %699 = vdwg.mxu0
      %v700 = vld [vmem:[%s9] sm:$0xf]
      %v702 = vsel %vm680, %v700, 0
      %704 = vmatpush.bf16.msra.mxu0 0
      %705 = vmatpush.bf16.msra.mxu0 0
      %706 = vmatpush.bf16.msra.mxu0 0
      %707 = vmatpush.bf16.msra.mxu0 0
      %708 = vmatpush.bf16.msra.mxu0 0
      %709 = vmatpush.bf16.msra.mxu0 0
      %710 = vmatpush.bf16.msra.mxu0 0
      %711 = vmatpush.bf16.msra.mxu0 %v685
      %712 = vmatmul.bf16.gmra.mxu0 %v702
      %v713 = vpop.f32.mrf.mxu0
      %v714 = vadd.f32 0.0, %v713
      %v715 = vpop.f32.mrf.mxu0
      %716 = vdwg.mxu0
      %v717 = vpack.c.bf16 %v697, %v697
      %v718 = vld [vmem:[%s6] sm:$0xf]
      %v719 = vld [vmem:[%s6 + $0x4] sm:$0xf]
      %v720 = vld [vmem:[%s6 + $0x8] sm:$0xf]
      %v721 = vld [vmem:[%s6 + $0xc] sm:$0xf]
      %v722 = vld [vmem:[%s6 + $0x10] sm:$0xf]
      %v723 = vld [vmem:[%s6 + $0x14] sm:$0xf]
      %v724 = vld [vmem:[%s6 + $0x18] sm:$0xf]
      %v725 = vld [vmem:[%s6 + $0x1c] sm:$0xf]
      %v726 = vld [vmem:[%s6 + $0x20] sm:$0xf]
      %v727 = vld [vmem:[%s6 + $0x24] sm:$0xf]
      %v728 = vld [vmem:[%s6 + $0x28] sm:$0xf]
      %v729 = vld [vmem:[%s6 + $0x2c] sm:$0xf]
      %v730 = vld [vmem:[%s6 + $0x30] sm:$0xf]
      %v731 = vld [vmem:[%s6 + $0x34] sm:$0xf]
      %v732 = vld [vmem:[%s6 + $0x38] sm:$0xf]
      %v733 = vld [vmem:[%s6 + $0x3c] sm:$0xf]
      %v738 = vunpack.c.l.b16 %v718
      %v739 = vunpack.c.l.b16 %v719
      %v740 = vunpack.c.l.b16 %v720
      %v741 = vunpack.c.l.b16 %v721
      %v742 = vpack.c.b16 %v739, %v738
      %v743 = vpack.c.b16 %v741, %v740
      %v747 = vsel %vm519, %v717, 0
      %749 = vmatpush.bf16.msra.mxu0 0
      %750 = vmatpush.bf16.msra.mxu0 0
      %751 = vmatpush.bf16.msra.mxu0 0
      %752 = vmatpush.bf16.msra.mxu0 0
      %753 = vmatpush.bf16.msra.mxu0 0
      %754 = vmatpush.bf16.msra.mxu0 0
      %755 = vmatpush.bf16.msra.mxu0 %v743
      %756 = vmatpush.bf16.msra.mxu0 %v742
      %757 = vmatmul.bf16.gmra.mxu0 %v747
      %v758 = vpop.f32.mrf.mxu0
      %v759 = vadd.f32 0.0, %v758
      %v760 = vpop.f32.mrf.mxu0
      %761 = vdwg.mxu0
      %v766 = vunpack.c.l.b16 %v722
      %v767 = vunpack.c.l.b16 %v723
      %v768 = vunpack.c.l.b16 %v724
      %v769 = vunpack.c.l.b16 %v725
      %v770 = vpack.c.b16 %v767, %v766
      %v771 = vpack.c.b16 %v769, %v768
      %774 = vmatpush.bf16.msra.mxu0 0
      %775 = vmatpush.bf16.msra.mxu0 0
      %776 = vmatpush.bf16.msra.mxu0 0
      %777 = vmatpush.bf16.msra.mxu0 0
      %778 = vmatpush.bf16.msra.mxu0 0
      %779 = vmatpush.bf16.msra.mxu0 0
      %780 = vmatpush.bf16.msra.mxu0 %v771
      %781 = vmatpush.bf16.msra.mxu0 %v770
      %782 = vmatmul.bf16.gmra.mxu0 %v747
      %v783 = vpop.f32.mrf.mxu0
      %v784 = vadd.f32 0.0, %v783
      %v785 = vpop.f32.mrf.mxu0
      %786 = vdwg.mxu0
      %v791 = vunpack.c.l.b16 %v726
      %v792 = vunpack.c.l.b16 %v727
      %v793 = vunpack.c.l.b16 %v728
      %v794 = vunpack.c.l.b16 %v729
      %v795 = vpack.c.b16 %v792, %v791
      %v796 = vpack.c.b16 %v794, %v793
      %799 = vmatpush.bf16.msra.mxu0 0
      %800 = vmatpush.bf16.msra.mxu0 0
      %801 = vmatpush.bf16.msra.mxu0 0
      %802 = vmatpush.bf16.msra.mxu0 0
      %803 = vmatpush.bf16.msra.mxu0 0
      %804 = vmatpush.bf16.msra.mxu0 0
      %805 = vmatpush.bf16.msra.mxu0 %v796
      %806 = vmatpush.bf16.msra.mxu0 %v795
      %807 = vmatmul.bf16.gmra.mxu0 %v747
      %v808 = vpop.f32.mrf.mxu0
      %v809 = vadd.f32 0.0, %v808
      %v810 = vpop.f32.mrf.mxu0
      %811 = vdwg.mxu0
      %v816 = vunpack.c.l.b16 %v730
      %v817 = vunpack.c.l.b16 %v731
      %v818 = vunpack.c.l.b16 %v732
      %v819 = vunpack.c.l.b16 %v733
      %v820 = vpack.c.b16 %v817, %v816
      %v821 = vpack.c.b16 %v819, %v818
      %824 = vmatpush.bf16.msra.mxu0 0
      %825 = vmatpush.bf16.msra.mxu0 0
      %826 = vmatpush.bf16.msra.mxu0 0
      %827 = vmatpush.bf16.msra.mxu0 0
      %828 = vmatpush.bf16.msra.mxu0 0
      %829 = vmatpush.bf16.msra.mxu0 0
      %830 = vmatpush.bf16.msra.mxu0 %v821
      %831 = vmatpush.bf16.msra.mxu0 %v820
      %832 = vmatmul.bf16.gmra.mxu0 %v747
      %v833 = vpop.f32.mrf.mxu0
      %v834 = vadd.f32 0.0, %v833
      %v835 = vpop.f32.mrf.mxu0
      %836 = vdwg.mxu0
      %v837 = vpack.c.bf16 %v714, %v714
      %v838 = vld [vmem:[%s7] sm:$0xf]
      %v839 = vld [vmem:[%s7 + $0x4] sm:$0xf]
      %v840 = vld [vmem:[%s7 + $0x8] sm:$0xf]
      %v841 = vld [vmem:[%s7 + $0xc] sm:$0xf]
      %v842 = vld [vmem:[%s7 + $0x10] sm:$0xf]
      %v843 = vld [vmem:[%s7 + $0x14] sm:$0xf]
      %v844 = vld [vmem:[%s7 + $0x18] sm:$0xf]
      %v845 = vld [vmem:[%s7 + $0x1c] sm:$0xf]
      %v846 = vld [vmem:[%s7 + $0x20] sm:$0xf]
      %v847 = vld [vmem:[%s7 + $0x24] sm:$0xf]
      %v848 = vld [vmem:[%s7 + $0x28] sm:$0xf]
      %v849 = vld [vmem:[%s7 + $0x2c] sm:$0xf]
      %v850 = vld [vmem:[%s7 + $0x30] sm:$0xf]
      %v851 = vld [vmem:[%s7 + $0x34] sm:$0xf]
      %v852 = vld [vmem:[%s7 + $0x38] sm:$0xf]
      %v853 = vld [vmem:[%s7 + $0x3c] sm:$0xf]
      %v858 = vunpack.c.l.b16 %v838
      %v859 = vunpack.c.l.b16 %v839
      %v860 = vunpack.c.l.b16 %v840
      %v861 = vunpack.c.l.b16 %v841
      %v862 = vpack.c.b16 %v859, %v858
      %v863 = vpack.c.b16 %v861, %v860
      %v867 = vsel %vm519, %v837, 0
      %869 = vmatpush.bf16.msra.mxu0 0
      %870 = vmatpush.bf16.msra.mxu0 0
      %871 = vmatpush.bf16.msra.mxu0 0
      %872 = vmatpush.bf16.msra.mxu0 0
      %873 = vmatpush.bf16.msra.mxu0 0
      %874 = vmatpush.bf16.msra.mxu0 0
      %875 = vmatpush.bf16.msra.mxu0 %v863
      %876 = vmatpush.bf16.msra.mxu0 %v862
      %877 = vmatmul.bf16.gmra.mxu0 %v867
      %v878 = vpop.f32.mrf.mxu0
      %v879 = vadd.f32 0.0, %v878
      %v880 = vpop.f32.mrf.mxu0
      %881 = vdwg.mxu0
      %v886 = vunpack.c.l.b16 %v842
      %v887 = vunpack.c.l.b16 %v843
      %v888 = vunpack.c.l.b16 %v844
      %v889 = vunpack.c.l.b16 %v845
      %v890 = vpack.c.b16 %v887, %v886
      %v891 = vpack.c.b16 %v889, %v888
      %894 = vmatpush.bf16.msra.mxu0 0
      %895 = vmatpush.bf16.msra.mxu0 0
      %896 = vmatpush.bf16.msra.mxu0 0
      %897 = vmatpush.bf16.msra.mxu0 0
      %898 = vmatpush.bf16.msra.mxu0 0
      %899 = vmatpush.bf16.msra.mxu0 0
      %900 = vmatpush.bf16.msra.mxu0 %v891
      %901 = vmatpush.bf16.msra.mxu0 %v890
      %902 = vmatmul.bf16.gmra.mxu0 %v867
      %v903 = vpop.f32.mrf.mxu0
      %v904 = vadd.f32 0.0, %v903
      %v905 = vpop.f32.mrf.mxu0
      %906 = vdwg.mxu0
      %v911 = vunpack.c.l.b16 %v846
      %v912 = vunpack.c.l.b16 %v847
      %v913 = vunpack.c.l.b16 %v848
      %v914 = vunpack.c.l.b16 %v849
      %v915 = vpack.c.b16 %v912, %v911
      %v916 = vpack.c.b16 %v914, %v913
      %919 = vmatpush.bf16.msra.mxu0 0
      %920 = vmatpush.bf16.msra.mxu0 0
      %921 = vmatpush.bf16.msra.mxu0 0
      %922 = vmatpush.bf16.msra.mxu0 0
      %923 = vmatpush.bf16.msra.mxu0 0
      %924 = vmatpush.bf16.msra.mxu0 0
      %925 = vmatpush.bf16.msra.mxu0 %v916
      %926 = vmatpush.bf16.msra.mxu0 %v915
      %927 = vmatmul.bf16.gmra.mxu0 %v867
      %v928 = vpop.f32.mrf.mxu0
      %v929 = vadd.f32 0.0, %v928
      %v930 = vpop.f32.mrf.mxu0
      %931 = vdwg.mxu0
      %v936 = vunpack.c.l.b16 %v850
      %v937 = vunpack.c.l.b16 %v851
      %v938 = vunpack.c.l.b16 %v852
      %v939 = vunpack.c.l.b16 %v853
      %v940 = vpack.c.b16 %v937, %v936
      %v941 = vpack.c.b16 %v939, %v938
      %944 = vmatpush.bf16.msra.mxu0 0
      %945 = vmatpush.bf16.msra.mxu0 0
      %946 = vmatpush.bf16.msra.mxu0 0
      %947 = vmatpush.bf16.msra.mxu0 0
      %948 = vmatpush.bf16.msra.mxu0 0
      %949 = vmatpush.bf16.msra.mxu0 0
      %950 = vmatpush.bf16.msra.mxu0 %v941
      %951 = vmatpush.bf16.msra.mxu0 %v940
      %952 = vmatmul.bf16.gmra.mxu0 %v867
      %v953 = vpop.f32.mrf.mxu0
      %v954 = vadd.f32 0.0, %v953
      %v955 = vpop.f32.mrf.mxu0
      %956 = vdwg.mxu0
      %v957 = vpack.c.bf16 %v601, %v601
      %v958 = vpack.c.bf16 %v626, %v626
      %v959 = vpack.c.bf16 %v651, %v651
      %v960 = vpack.c.bf16 %v676, %v676
      %v961 = vpack.c.bf16 %v759, %v759
      %v962 = vpack.c.bf16 %v784, %v784
      %v963 = vpack.c.bf16 %v809, %v809
      %v964 = vpack.c.bf16 %v834, %v834
      %v966 = vsel %vm680, %v957, 0
      %v969 = vsel %vm680, %v961, 0
      %971 = vmatpush.bf16.xpose.msra.mxu0 0
      %972 = vmatpush.bf16.xpose.msra.mxu0 0
      %973 = vmatpush.bf16.xpose.msra.mxu0 0
      %974 = vmatpush.bf16.xpose.msra.mxu0 0
      %975 = vmatpush.bf16.xpose.msra.mxu0 0
      %976 = vmatpush.bf16.xpose.msra.mxu0 0
      %977 = vmatpush.bf16.xpose.msra.mxu0 0
      %978 = vmatpush.bf16.xpose.msra.mxu0 %v969
      %979 = vmatmul.bf16.gmra.mxu0 %v966
      %v980 = vpop.f32.mrf.mxu0
      %v981 = vadd.f32 0.0, %v980
      %v982 = vpop.f32.mrf.mxu0
      %983 = vdwg.mxu0
      %v985 = vsel %vm680, %v958, 0
      %v988 = vsel %vm680, %v962, 0
      %990 = vmatpush.bf16.xpose.msra.mxu0 0
      %991 = vmatpush.bf16.xpose.msra.mxu0 0
      %992 = vmatpush.bf16.xpose.msra.mxu0 0
      %993 = vmatpush.bf16.xpose.msra.mxu0 0
      %994 = vmatpush.bf16.xpose.msra.mxu0 0
      %995 = vmatpush.bf16.xpose.msra.mxu0 0
      %996 = vmatpush.bf16.xpose.msra.mxu0 0
      %997 = vmatpush.bf16.xpose.msra.mxu0 %v988
      %998 = vmatmul.bf16.gmra.mxu0 %v985
      %v999 = vpop.f32.mrf.mxu0
      %v1000 = vadd.f32 0.0, %v999
      %v1001 = vpop.f32.mrf.mxu0
      %1002 = vdwg.mxu0
      %v1004 = vsel %vm680, %v959, 0
      %v1007 = vsel %vm680, %v963, 0
      %1009 = vmatpush.bf16.xpose.msra.mxu0 0
      %1010 = vmatpush.bf16.xpose.msra.mxu0 0
      %1011 = vmatpush.bf16.xpose.msra.mxu0 0
      %1012 = vmatpush.bf16.xpose.msra.mxu0 0
      %1013 = vmatpush.bf16.xpose.msra.mxu0 0
      %1014 = vmatpush.bf16.xpose.msra.mxu0 0
      %1015 = vmatpush.bf16.xpose.msra.mxu0 0
      %1016 = vmatpush.bf16.xpose.msra.mxu0 %v1007
      %1017 = vmatmul.bf16.gmra.mxu0 %v1004
      %v1018 = vpop.f32.mrf.mxu0
      %v1019 = vadd.f32 0.0, %v1018
      %v1020 = vpop.f32.mrf.mxu0
      %1021 = vdwg.mxu0
      %v1023 = vsel %vm680, %v960, 0
      %v1026 = vsel %vm680, %v964, 0
      %1028 = vmatpush.bf16.xpose.msra.mxu0 0
      %1029 = vmatpush.bf16.xpose.msra.mxu0 0
      %1030 = vmatpush.bf16.xpose.msra.mxu0 0
      %1031 = vmatpush.bf16.xpose.msra.mxu0 0
      %1032 = vmatpush.bf16.xpose.msra.mxu0 0
      %1033 = vmatpush.bf16.xpose.msra.mxu0 0
      %1034 = vmatpush.bf16.xpose.msra.mxu0 0
      %1035 = vmatpush.bf16.xpose.msra.mxu0 %v1026
      %1036 = vmatmul.bf16.gmra.mxu0 %v1023
      %v1037 = vpop.f32.mrf.mxu0
      %v1038 = vadd.f32 0.0, %v1037
      %v1039 = vpop.f32.mrf.mxu0
      %1040 = vdwg.mxu0
      %v1041 = vsel %vm680, %v981, -inf
      %1042 = vmax.xlane.f32.xlu0 %v1041
      %v1043 = vpop.xlane.xlu0 %1042
      %v1044 = vsel %vm680, %v1000, -inf
      %1045 = vmax.xlane.f32.xlu0 %v1044
      %v1046 = vpop.xlane.xlu0 %1045
      %v1047 = vsel %vm680, %v1019, -inf
      %1048 = vmax.xlane.f32.xlu0 %v1047
      %v1049 = vpop.xlane.xlu0 %1048
      %v1050 = vsel %vm680, %v1038, -inf
      %1051 = vmax.xlane.f32.xlu0 %v1050
      %v1052 = vpop.xlane.xlu0 %1051
      %v1053 = vsub.f32 %v981, %v1043
      %v1054 = vsub.f32 %v1000, %v1046
      %v1055 = vsub.f32 %v1019, %v1049
      %v1056 = vsub.f32 %v1038, %v1052
      %v1057 = vmul.f32 %v1053, 1.442695
      %v1058 = vpow.pop %v1057
      %v1059 = vmul.f32 %v1054, 1.442695
      %v1060 = vpow.pop %v1059
      %v1061 = vmul.f32 %v1055, 1.442695
      %v1062 = vpow.pop %v1061
      %v1063 = vmul.f32 %v1056, 1.442695
      %v1064 = vpow.pop %v1063
      %v1065 = vsel %vm680, %v1058, 0.0
      %1066 = vadd.xlane.f32.xlu0 %v1065
      %v1067 = vpop.xlane.xlu0 %1066
      %v1068 = vsel %vm680, %v1060, 0.0
      %1069 = vadd.xlane.f32.xlu0 %v1068
      %v1070 = vpop.xlane.xlu0 %1069
      %v1071 = vsel %vm680, %v1062, 0.0
      %1072 = vadd.xlane.f32.xlu0 %v1071
      %v1073 = vpop.xlane.xlu0 %1072
      %v1074 = vsel %vm680, %v1064, 0.0
      %1075 = vadd.xlane.f32.xlu0 %v1074
      %v1076 = vpop.xlane.xlu0 %1075
      %v1077 = vrcp.pop %v1067
      %v1078 = vrcp.pop %v1070
      %v1079 = vrcp.pop %v1073
      %v1080 = vrcp.pop %v1076
      %v1081 = vmul.f32 %v1058, %v1077
      %v1082 = vmul.f32 %v1060, %v1078
      %v1083 = vmul.f32 %v1062, %v1079
      %v1084 = vmul.f32 %v1064, %v1080
      %v1085 = vpack.c.bf16 %v1081, %v1081
      %v1086 = vpack.c.bf16 %v1082, %v1082
      %v1087 = vpack.c.bf16 %v1083, %v1083
      %v1088 = vpack.c.bf16 %v1084, %v1084
      %v1089 = vpack.c.bf16 %v879, %v879
      %v1090 = vpack.c.bf16 %v904, %v904
      %v1091 = vpack.c.bf16 %v929, %v929
      %v1092 = vpack.c.bf16 %v954, %v954
      %v1094 = vsel %vm680, %v1085, 0
      %v1097 = vsel %vm684, %v1089, 0
      %1099 = vmatpush.bf16.msra.mxu0 0
      %1100 = vmatpush.bf16.msra.mxu0 0
      %1101 = vmatpush.bf16.msra.mxu0 0
      %1102 = vmatpush.bf16.msra.mxu0 0
      %1103 = vmatpush.bf16.msra.mxu0 0
      %1104 = vmatpush.bf16.msra.mxu0 0
      %1105 = vmatpush.bf16.msra.mxu0 0
      %1106 = vmatpush.bf16.msra.mxu0 %v1097
      %1107 = vmatmul.bf16.gmra.mxu0 %v1094
      %v1108 = vpop.f32.mrf.mxu0
      %v1109 = vadd.f32 0.0, %v1108
      %v1110 = vpop.f32.mrf.mxu0
      %1111 = vdwg.mxu0
      %v1113 = vsel %vm680, %v1086, 0
      %v1116 = vsel %vm684, %v1090, 0
      %1118 = vmatpush.bf16.msra.mxu0 0
      %1119 = vmatpush.bf16.msra.mxu0 0
      %1120 = vmatpush.bf16.msra.mxu0 0
      %1121 = vmatpush.bf16.msra.mxu0 0
      %1122 = vmatpush.bf16.msra.mxu0 0
      %1123 = vmatpush.bf16.msra.mxu0 0
      %1124 = vmatpush.bf16.msra.mxu0 0
      %1125 = vmatpush.bf16.msra.mxu0 %v1116
      %1126 = vmatmul.bf16.gmra.mxu0 %v1113
      %v1127 = vpop.f32.mrf.mxu0
      %v1128 = vadd.f32 0.0, %v1127
      %v1129 = vpop.f32.mrf.mxu0
      %1130 = vdwg.mxu0
      %v1132 = vsel %vm680, %v1087, 0
      %v1135 = vsel %vm684, %v1091, 0
      %1137 = vmatpush.bf16.msra.mxu0 0
      %1138 = vmatpush.bf16.msra.mxu0 0
      %1139 = vmatpush.bf16.msra.mxu0 0
      %1140 = vmatpush.bf16.msra.mxu0 0
      %1141 = vmatpush.bf16.msra.mxu0 0
      %1142 = vmatpush.bf16.msra.mxu0 0
      %1143 = vmatpush.bf16.msra.mxu0 0
      %1144 = vmatpush.bf16.msra.mxu0 %v1135
      %1145 = vmatmul.bf16.gmra.mxu0 %v1132
      %v1146 = vpop.f32.mrf.mxu0
      %v1147 = vadd.f32 0.0, %v1146
      %v1148 = vpop.f32.mrf.mxu0
      %1149 = vdwg.mxu0
      %v1151 = vsel %vm680, %v1088, 0
      %v1154 = vsel %vm684, %v1092, 0
      %1156 = vmatpush.bf16.msra.mxu0 0
      %1157 = vmatpush.bf16.msra.mxu0 0
      %1158 = vmatpush.bf16.msra.mxu0 0
      %1159 = vmatpush.bf16.msra.mxu0 0
      %1160 = vmatpush.bf16.msra.mxu0 0
      %1161 = vmatpush.bf16.msra.mxu0 0
      %1162 = vmatpush.bf16.msra.mxu0 0
      %1163 = vmatpush.bf16.msra.mxu0 %v1154
      %1164 = vmatmul.bf16.gmra.mxu0 %v1151
      %v1165 = vpop.f32.mrf.mxu0
      %v1166 = vadd.f32 0.0, %v1165
      %v1167 = vpop.f32.mrf.mxu0
      %1168 = vdwg.mxu0
      %v1169 = vpack.c.bf16 %v1109, %v1109
      %v1170 = vpack.c.bf16 %v1128, %v1128
      %v1171 = vpack.c.bf16 %v1147, %v1147
      %v1172 = vpack.c.bf16 %v1166, %v1166
      %v1173 = vld [vmem:[%s10] sm:$0xf]
      %v1174 = vld [vmem:[%s10 + $0x4] sm:$0xf]
      %v1175 = vld [vmem:[%s10 + $0x8] sm:$0xf]
      %v1176 = vld [vmem:[%s10 + $0xc] sm:$0xf]
      %v1178 = vsel %vm680, %v1169, 0
      %v1181 = vsel %vm684, %v1173, 0
      %1183 = vmatpush.bf16.msra.mxu0 0
      %1184 = vmatpush.bf16.msra.mxu0 0
      %1185 = vmatpush.bf16.msra.mxu0 0
      %1186 = vmatpush.bf16.msra.mxu0 0
      %1187 = vmatpush.bf16.msra.mxu0 0
      %1188 = vmatpush.bf16.msra.mxu0 0
      %1189 = vmatpush.bf16.msra.mxu0 0
      %1190 = vmatpush.bf16.msra.mxu0 %v1181
      %1191 = vmatmul.bf16.gmra.mxu0 %v1178
      %v1192 = vpop.f32.mrf.mxu0
      %v1193 = vadd.f32 0.0, %v1192
      %v1194 = vpop.f32.mrf.mxu0
      %1195 = vdwg.mxu0
      %v1197 = vsel %vm680, %v1170, 0
      %v1200 = vsel %vm684, %v1174, 0
      %1202 = vmatpush.bf16.msra.mxu0 0
      %1203 = vmatpush.bf16.msra.mxu0 0
      %1204 = vmatpush.bf16.msra.mxu0 0
      %1205 = vmatpush.bf16.msra.mxu0 0
      %1206 = vmatpush.bf16.msra.mxu0 0
      %1207 = vmatpush.bf16.msra.mxu0 0
      %1208 = vmatpush.bf16.msra.mxu0 0
      %1209 = vmatpush.bf16.msra.mxu0 %v1200
      %1210 = vmatmul.bf16.gmra.mxu0 %v1197
      %v1211 = vpop.f32.mrf.mxu0
      %v1212 = vadd.f32 0.0, %v1211
      %v1213 = vpop.f32.mrf.mxu0
      %1214 = vdwg.mxu0
      %v1216 = vsel %vm680, %v1171, 0
      %v1219 = vsel %vm684, %v1175, 0
      %1221 = vmatpush.bf16.msra.mxu0 0
      %1222 = vmatpush.bf16.msra.mxu0 0
      %1223 = vmatpush.bf16.msra.mxu0 0
      %1224 = vmatpush.bf16.msra.mxu0 0
      %1225 = vmatpush.bf16.msra.mxu0 0
      %1226 = vmatpush.bf16.msra.mxu0 0
      %1227 = vmatpush.bf16.msra.mxu0 0
      %1228 = vmatpush.bf16.msra.mxu0 %v1219
      %1229 = vmatmul.bf16.gmra.mxu0 %v1216
      %v1230 = vpop.f32.mrf.mxu0
      %v1231 = vadd.f32 0.0, %v1230
      %v1232 = vpop.f32.mrf.mxu0
      %1233 = vdwg.mxu0
      %v1235 = vsel %vm680, %v1172, 0
      %v1238 = vsel %vm684, %v1176, 0
      %1240 = vmatpush.bf16.msra.mxu0 0
      %1241 = vmatpush.bf16.msra.mxu0 0
      %1242 = vmatpush.bf16.msra.mxu0 0
      %1243 = vmatpush.bf16.msra.mxu0 0
      %1244 = vmatpush.bf16.msra.mxu0 0
      %1245 = vmatpush.bf16.msra.mxu0 0
      %1246 = vmatpush.bf16.msra.mxu0 0
      %1247 = vmatpush.bf16.msra.mxu0 %v1238
      %1248 = vmatmul.bf16.gmra.mxu0 %v1235
      %v1249 = vpop.f32.mrf.mxu0
      %v1250 = vadd.f32 0.0, %v1249
      %v1251 = vpop.f32.mrf.mxu0
      %1252 = vdwg.mxu0
      %v1253 = vsel %vm519, %v1193, 0.0
      %v1254 = vsel %vm519, %v1212, 0.0
      %v1255 = vadd.f32 %v1253, %v1254
      %v1256 = vsel %vm519, %v1231, 0.0
      %v1257 = vadd.f32 %v1255, %v1256
      %v1258 = vsel %vm519, %v1250, 0.0
      %v1259 = vadd.f32 %v1257, %v1258
      %v1260 = vadd.f32 %v516, %v1259
      %v1261 = vpack.c.bf16 %v1260, %v1260
      %v1262 = vld [vmem:[%s11] sm:$0xf]
      %v1263 = vld [vmem:[%s11 + $0x4] sm:$0xf]
      %v1264 = vld [vmem:[%s11 + $0x8] sm:$0xf]
      %v1265 = vld [vmem:[%s11 + $0xc] sm:$0xf]
      %v1270 = vunpack.c.l.b16 %v1262
      %v1271 = vunpack.c.l.b16 %v1263
      %v1272 = vunpack.c.l.b16 %v1264
      %v1273 = vunpack.c.l.b16 %v1265
      %v1274 = vpack.c.b16 %v1271, %v1270
      %v1275 = vpack.c.b16 %v1273, %v1272
      %v1279 = vsel %vm519, %v1261, 0
      %1281 = vmatpush.bf16.msra.mxu0 0
      %1282 = vmatpush.bf16.msra.mxu0 0
      %1283 = vmatpush.bf16.msra.mxu0 0
      %1284 = vmatpush.bf16.msra.mxu0 0
      %1285 = vmatpush.bf16.msra.mxu0 0
      %1286 = vmatpush.bf16.msra.mxu0 0
      %1287 = vmatpush.bf16.msra.mxu0 %v1275
      %1288 = vmatpush.bf16.msra.mxu0 %v1274
      %1289 = vmatmul.bf16.gmra.mxu0 %v1279
      %v1290 = vpop.f32.mrf.mxu0
      %v1291 = vadd.f32 0.0, %v1290
      %v1292 = vpop.f32.mrf.mxu0
      %1293 = vdwg.mxu0
      %v1294 = vadd.f32 %v1260, %v1291
      %v1295 = vld [vmem:[%s12] sm:$0x1]
      %v1297 = vperm.slane %v1295, 0
      %v1299 = vadd.f32 %v1294, %v1297
      %v1300 = vsel %vm519, %v1299, 0.0
      %1301 = vadd.xlane.f32.xlu0 %v1300
      %v1302 = vpop.xlane.xlu0 %1301
      %v1303 = vmul.f32 %v1302, %v529
      %v1304 = vsub.f32 %v1299, %v1303
      %v1305 = vmul.f32 %v1304, %v1304
      %v1306 = vsel %vm519, %v1305, 0.0
      %1307 = vadd.xlane.f32.xlu0 %v1306
      %v1308 = vpop.xlane.xlu0 %1307
      %v1309 = vmul.f32 %v1308, %v529
      %v1310 = vadd.f32 %v1309, 1e-05
      %v1311 = vrsqrt.pop %v1310
      %v1312 = vmul.f32 %v1311, %v1310
      %v1313 = vmul.f32 %v1312, %v1311
      %v1314 = vmul.f32 0.5, %v1313
      %v1315 = vsub.f32 1.5, %v1314
      %v1316 = vmul.f32 %v1311, %v1315
      %vm1317 = vweird.f32 %v1310
      %vm1318 = vweird.f32 %v1311
      %vm1319 = vmor %vm1317, %vm1318
      %v1320 = vsel %vm1319, %v1311, %v1316
      %v1321 = vmul.f32 %v1304, %v1320
      %s1322 = scalar_lea.vmem %s3, 1
      %v1323 = vld [vmem:[%s1322] sm:$0x1]
      %v1325 = vperm.slane %v1323, 0
      %v1327 = vmul.f32 %v1321, %v1325
      %s1328 = scalar_lea.vmem %s4, 1
      %v1329 = vld [vmem:[%s1328] sm:$0x1]
      %v1331 = vperm.slane %v1329, 0
      %v1333 = vadd.f32 %v1327, %v1331
      %v1334 = vpack.c.bf16 %v1333, %v1333
      %s1335 = scalar_lea.vmem %s5, 64
      %v1336 = vld [vmem:[%s1335] sm:$0xf]
      %v1337 = vld [vmem:[%s1335 + $0x4] sm:$0xf]
      %v1338 = vld [vmem:[%s1335 + $0x8] sm:$0xf]
      %v1339 = vld [vmem:[%s1335 + $0xc] sm:$0xf]
      %v1340 = vld [vmem:[%s1335 + $0x10] sm:$0xf]
      %v1341 = vld [vmem:[%s1335 + $0x14] sm:$0xf]
      %v1342 = vld [vmem:[%s1335 + $0x18] sm:$0xf]
      %v1343 = vld [vmem:[%s1335 + $0x1c] sm:$0xf]
      %v1344 = vld [vmem:[%s1335 + $0x20] sm:$0xf]
      %v1345 = vld [vmem:[%s1335 + $0x24] sm:$0xf]
      %v1346 = vld [vmem:[%s1335 + $0x28] sm:$0xf]
      %v1347 = vld [vmem:[%s1335 + $0x2c] sm:$0xf]
      %v1348 = vld [vmem:[%s1335 + $0x30] sm:$0xf]
      %v1349 = vld [vmem:[%s1335 + $0x34] sm:$0xf]
      %v1350 = vld [vmem:[%s1335 + $0x38] sm:$0xf]
      %v1351 = vld [vmem:[%s1335 + $0x3c] sm:$0xf]
      %v1356 = vunpack.c.l.b16 %v1336
      %v1357 = vunpack.c.l.b16 %v1337
      %v1358 = vunpack.c.l.b16 %v1338
      %v1359 = vunpack.c.l.b16 %v1339
      %v1360 = vpack.c.b16 %v1357, %v1356
      %v1361 = vpack.c.b16 %v1359, %v1358
      %v1365 = vsel %vm519, %v1334, 0
      %1367 = vmatpush.bf16.msra.mxu0 0
      %1368 = vmatpush.bf16.msra.mxu0 0
      %1369 = vmatpush.bf16.msra.mxu0 0
      %1370 = vmatpush.bf16.msra.mxu0 0
      %1371 = vmatpush.bf16.msra.mxu0 0
      %1372 = vmatpush.bf16.msra.mxu0 0
      %1373 = vmatpush.bf16.msra.mxu0 %v1361
      %1374 = vmatpush.bf16.msra.mxu0 %v1360
      %1375 = vmatmul.bf16.gmra.mxu0 %v1365
      %v1376 = vpop.f32.mrf.mxu0
      %v1377 = vadd.f32 0.0, %v1376
      %v1378 = vpop.f32.mrf.mxu0
      %1379 = vdwg.mxu0
      %v1384 = vunpack.c.l.b16 %v1340
      %v1385 = vunpack.c.l.b16 %v1341
      %v1386 = vunpack.c.l.b16 %v1342
      %v1387 = vunpack.c.l.b16 %v1343
      %v1388 = vpack.c.b16 %v1385, %v1384
      %v1389 = vpack.c.b16 %v1387, %v1386
      %1392 = vmatpush.bf16.msra.mxu0 0
      %1393 = vmatpush.bf16.msra.mxu0 0
      %1394 = vmatpush.bf16.msra.mxu0 0
      %1395 = vmatpush.bf16.msra.mxu0 0
      %1396 = vmatpush.bf16.msra.mxu0 0
      %1397 = vmatpush.bf16.msra.mxu0 0
      %1398 = vmatpush.bf16.msra.mxu0 %v1389
      %1399 = vmatpush.bf16.msra.mxu0 %v1388
      %1400 = vmatmul.bf16.gmra.mxu0 %v1365
      %v1401 = vpop.f32.mrf.mxu0
      %v1402 = vadd.f32 0.0, %v1401
      %v1403 = vpop.f32.mrf.mxu0
      %1404 = vdwg.mxu0
      %v1409 = vunpack.c.l.b16 %v1344
      %v1410 = vunpack.c.l.b16 %v1345
      %v1411 = vunpack.c.l.b16 %v1346
      %v1412 = vunpack.c.l.b16 %v1347
      %v1413 = vpack.c.b16 %v1410, %v1409
      %v1414 = vpack.c.b16 %v1412, %v1411
      %1417 = vmatpush.bf16.msra.mxu0 0
      %1418 = vmatpush.bf16.msra.mxu0 0
      %1419 = vmatpush.bf16.msra.mxu0 0
      %1420 = vmatpush.bf16.msra.mxu0 0
      %1421 = vmatpush.bf16.msra.mxu0 0
      %1422 = vmatpush.bf16.msra.mxu0 0
      %1423 = vmatpush.bf16.msra.mxu0 %v1414
      %1424 = vmatpush.bf16.msra.mxu0 %v1413
      %1425 = vmatmul.bf16.gmra.mxu0 %v1365
      %v1426 = vpop.f32.mrf.mxu0
      %v1427 = vadd.f32 0.0, %v1426
      %v1428 = vpop.f32.mrf.mxu0
      %1429 = vdwg.mxu0
      %v1434 = vunpack.c.l.b16 %v1348
      %v1435 = vunpack.c.l.b16 %v1349
      %v1436 = vunpack.c.l.b16 %v1350
      %v1437 = vunpack.c.l.b16 %v1351
      %v1438 = vpack.c.b16 %v1435, %v1434
      %v1439 = vpack.c.b16 %v1437, %v1436
      %1442 = vmatpush.bf16.msra.mxu0 0
      %1443 = vmatpush.bf16.msra.mxu0 0
      %1444 = vmatpush.bf16.msra.mxu0 0
      %1445 = vmatpush.bf16.msra.mxu0 0
      %1446 = vmatpush.bf16.msra.mxu0 0
      %1447 = vmatpush.bf16.msra.mxu0 0
      %1448 = vmatpush.bf16.msra.mxu0 %v1439
      %1449 = vmatpush.bf16.msra.mxu0 %v1438
      %1450 = vmatmul.bf16.gmra.mxu0 %v1365
      %v1451 = vpop.f32.mrf.mxu0
      %v1452 = vadd.f32 0.0, %v1451
      %v1453 = vpop.f32.mrf.mxu0
      %1454 = vdwg.mxu0
      %s1455 = scalar_lea.vmem %s8, 4
      %v1456 = vld [vmem:[%s1455] sm:$0xf]
      %v1458 = vsel %vm680, %v1456, 0
      %v1460 = vsel %vm684, %v1334, 0
      %1462 = vmatpush.bf16.msra.mxu0 0
      %1463 = vmatpush.bf16.msra.mxu0 0
      %1464 = vmatpush.bf16.msra.mxu0 0
      %1465 = vmatpush.bf16.msra.mxu0 0
      %1466 = vmatpush.bf16.msra.mxu0 0
      %1467 = vmatpush.bf16.msra.mxu0 0
      %1468 = vmatpush.bf16.msra.mxu0 0
      %1469 = vmatpush.bf16.msra.mxu0 %v1460
      %1470 = vmatmul.bf16.gmra.mxu0 %v1458
      %v1471 = vpop.f32.mrf.mxu0
      %v1472 = vadd.f32 0.0, %v1471
      %v1473 = vpop.f32.mrf.mxu0
      %1474 = vdwg.mxu0
      %s1475 = scalar_lea.vmem %s9, 4
      %v1476 = vld [vmem:[%s1475] sm:$0xf]
      %v1478 = vsel %vm680, %v1476, 0
      %1480 = vmatpush.bf16.msra.mxu0 0
      %1481 = vmatpush.bf16.msra.mxu0 0
      %1482 = vmatpush.bf16.msra.mxu0 0
      %1483 = vmatpush.bf16.msra.mxu0 0
      %1484 = vmatpush.bf16.msra.mxu0 0
      %1485 = vmatpush.bf16.msra.mxu0 0
      %1486 = vmatpush.bf16.msra.mxu0 0
      %1487 = vmatpush.bf16.msra.mxu0 %v1460
      %1488 = vmatmul.bf16.gmra.mxu0 %v1478
      %v1489 = vpop.f32.mrf.mxu0
      %v1490 = vadd.f32 0.0, %v1489
      %v1491 = vpop.f32.mrf.mxu0
      %1492 = vdwg.mxu0
      %v1493 = vpack.c.bf16 %v1472, %v1472
      %s1494 = scalar_lea.vmem %s6, 64
      %v1495 = vld [vmem:[%s1494] sm:$0xf]
      %v1496 = vld [vmem:[%s1494 + $0x4] sm:$0xf]
      %v1497 = vld [vmem:[%s1494 + $0x8] sm:$0xf]
      %v1498 = vld [vmem:[%s1494 + $0xc] sm:$0xf]
      %v1499 = vld [vmem:[%s1494 + $0x10] sm:$0xf]
      %v1500 = vld [vmem:[%s1494 + $0x14] sm:$0xf]
      %v1501 = vld [vmem:[%s1494 + $0x18] sm:$0xf]
      %v1502 = vld [vmem:[%s1494 + $0x1c] sm:$0xf]
      %v1503 = vld [vmem:[%s1494 + $0x20] sm:$0xf]
      %v1504 = vld [vmem:[%s1494 + $0x24] sm:$0xf]
      %v1505 = vld [vmem:[%s1494 + $0x28] sm:$0xf]
      %v1506 = vld [vmem:[%s1494 + $0x2c] sm:$0xf]
      %v1507 = vld [vmem:[%s1494 + $0x30] sm:$0xf]
      %v1508 = vld [vmem:[%s1494 + $0x34] sm:$0xf]
      %v1509 = vld [vmem:[%s1494 + $0x38] sm:$0xf]
      %v1510 = vld [vmem:[%s1494 + $0x3c] sm:$0xf]
      %v1515 = vunpack.c.l.b16 %v1495
      %v1516 = vunpack.c.l.b16 %v1496
      %v1517 = vunpack.c.l.b16 %v1497
      %v1518 = vunpack.c.l.b16 %v1498
      %v1519 = vpack.c.b16 %v1516, %v1515
      %v1520 = vpack.c.b16 %v1518, %v1517
      %v1524 = vsel %vm519, %v1493, 0
      %1526 = vmatpush.bf16.msra.mxu0 0
      %1527 = vmatpush.bf16.msra.mxu0 0
      %1528 = vmatpush.bf16.msra.mxu0 0
      %1529 = vmatpush.bf16.msra.mxu0 0
      %1530 = vmatpush.bf16.msra.mxu0 0
      %1531 = vmatpush.bf16.msra.mxu0 0
      %1532 = vmatpush.bf16.msra.mxu0 %v1520
      %1533 = vmatpush.bf16.msra.mxu0 %v1519
      %1534 = vmatmul.bf16.gmra.mxu0 %v1524
      %v1535 = vpop.f32.mrf.mxu0
      %v1536 = vadd.f32 0.0, %v1535
      %v1537 = vpop.f32.mrf.mxu0
      %1538 = vdwg.mxu0
      %v1543 = vunpack.c.l.b16 %v1499
      %v1544 = vunpack.c.l.b16 %v1500
      %v1545 = vunpack.c.l.b16 %v1501
      %v1546 = vunpack.c.l.b16 %v1502
      %v1547 = vpack.c.b16 %v1544, %v1543
      %v1548 = vpack.c.b16 %v1546, %v1545
      %1551 = vmatpush.bf16.msra.mxu0 0
      %1552 = vmatpush.bf16.msra.mxu0 0
      %1553 = vmatpush.bf16.msra.mxu0 0
      %1554 = vmatpush.bf16.msra.mxu0 0
      %1555 = vmatpush.bf16.msra.mxu0 0
      %1556 = vmatpush.bf16.msra.mxu0 0
      %1557 = vmatpush.bf16.msra.mxu0 %v1548
      %1558 = vmatpush.bf16.msra.mxu0 %v1547
      %1559 = vmatmul.bf16.gmra.mxu0 %v1524
      %v1560 = vpop.f32.mrf.mxu0
      %v1561 = vadd.f32 0.0, %v1560
      %v1562 = vpop.f32.mrf.mxu0
      %1563 = vdwg.mxu0
      %v1568 = vunpack.c.l.b16 %v1503
      %v1569 = vunpack.c.l.b16 %v1504
      %v1570 = vunpack.c.l.b16 %v1505
      %v1571 = vunpack.c.l.b16 %v1506
      %v1572 = vpack.c.b16 %v1569, %v1568
      %v1573 = vpack.c.b16 %v1571, %v1570
      %1576 = vmatpush.bf16.msra.mxu0 0
      %1577 = vmatpush.bf16.msra.mxu0 0
      %1578 = vmatpush.bf16.msra.mxu0 0
      %1579 = vmatpush.bf16.msra.mxu0 0
      %1580 = vmatpush.bf16.msra.mxu0 0
      %1581 = vmatpush.bf16.msra.mxu0 0
      %1582 = vmatpush.bf16.msra.mxu0 %v1573
      %1583 = vmatpush.bf16.msra.mxu0 %v1572
      %1584 = vmatmul.bf16.gmra.mxu0 %v1524
      %v1585 = vpop.f32.mrf.mxu0
      %v1586 = vadd.f32 0.0, %v1585
      %v1587 = vpop.f32.mrf.mxu0
      %1588 = vdwg.mxu0
      %v1593 = vunpack.c.l.b16 %v1507
      %v1594 = vunpack.c.l.b16 %v1508
      %v1595 = vunpack.c.l.b16 %v1509
      %v1596 = vunpack.c.l.b16 %v1510
      %v1597 = vpack.c.b16 %v1594, %v1593
      %v1598 = vpack.c.b16 %v1596, %v1595
      %1601 = vmatpush.bf16.msra.mxu0 0
      %1602 = vmatpush.bf16.msra.mxu0 0
      %1603 = vmatpush.bf16.msra.mxu0 0
      %1604 = vmatpush.bf16.msra.mxu0 0
      %1605 = vmatpush.bf16.msra.mxu0 0
      %1606 = vmatpush.bf16.msra.mxu0 0
      %1607 = vmatpush.bf16.msra.mxu0 %v1598
      %1608 = vmatpush.bf16.msra.mxu0 %v1597
      %1609 = vmatmul.bf16.gmra.mxu0 %v1524
      %v1610 = vpop.f32.mrf.mxu0
      %v1611 = vadd.f32 0.0, %v1610
      %v1612 = vpop.f32.mrf.mxu0
      %1613 = vdwg.mxu0
      %v1614 = vpack.c.bf16 %v1490, %v1490
      %s1615 = scalar_lea.vmem %s7, 64
      %v1616 = vld [vmem:[%s1615] sm:$0xf]
      %v1617 = vld [vmem:[%s1615 + $0x4] sm:$0xf]
      %v1618 = vld [vmem:[%s1615 + $0x8] sm:$0xf]
      %v1619 = vld [vmem:[%s1615 + $0xc] sm:$0xf]
      %v1620 = vld [vmem:[%s1615 + $0x10] sm:$0xf]
      %v1621 = vld [vmem:[%s1615 + $0x14] sm:$0xf]
      %v1622 = vld [vmem:[%s1615 + $0x18] sm:$0xf]
      %v1623 = vld [vmem:[%s1615 + $0x1c] sm:$0xf]
      %v1624 = vld [vmem:[%s1615 + $0x20] sm:$0xf]
      %v1625 = vld [vmem:[%s1615 + $0x24] sm:$0xf]
      %v1626 = vld [vmem:[%s1615 + $0x28] sm:$0xf]
      %v1627 = vld [vmem:[%s1615 + $0x2c] sm:$0xf]
      %v1628 = vld [vmem:[%s1615 + $0x30] sm:$0xf]
      %v1629 = vld [vmem:[%s1615 + $0x34] sm:$0xf]
      %v1630 = vld [vmem:[%s1615 + $0x38] sm:$0xf]
      %v1631 = vld [vmem:[%s1615 + $0x3c] sm:$0xf]
      %v1636 = vunpack.c.l.b16 %v1616
      %v1637 = vunpack.c.l.b16 %v1617
      %v1638 = vunpack.c.l.b16 %v1618
      %v1639 = vunpack.c.l.b16 %v1619
      %v1640 = vpack.c.b16 %v1637, %v1636
      %v1641 = vpack.c.b16 %v1639, %v1638
      %v1645 = vsel %vm519, %v1614, 0
      %1647 = vmatpush.bf16.msra.mxu0 0
      %1648 = vmatpush.bf16.msra.mxu0 0
      %1649 = vmatpush.bf16.msra.mxu0 0
      %1650 = vmatpush.bf16.msra.mxu0 0
      %1651 = vmatpush.bf16.msra.mxu0 0
      %1652 = vmatpush.bf16.msra.mxu0 0
      %1653 = vmatpush.bf16.msra.mxu0 %v1641
      %1654 = vmatpush.bf16.msra.mxu0 %v1640
      %1655 = vmatmul.bf16.gmra.mxu0 %v1645
      %v1656 = vpop.f32.mrf.mxu0
      %v1657 = vadd.f32 0.0, %v1656
      %v1658 = vpop.f32.mrf.mxu0
      %1659 = vdwg.mxu0
      %v1664 = vunpack.c.l.b16 %v1620
      %v1665 = vunpack.c.l.b16 %v1621
      %v1666 = vunpack.c.l.b16 %v1622
      %v1667 = vunpack.c.l.b16 %v1623
      %v1668 = vpack.c.b16 %v1665, %v1664
      %v1669 = vpack.c.b16 %v1667, %v1666
      %1672 = vmatpush.bf16.msra.mxu0 0
      %1673 = vmatpush.bf16.msra.mxu0 0
      %1674 = vmatpush.bf16.msra.mxu0 0
      %1675 = vmatpush.bf16.msra.mxu0 0
      %1676 = vmatpush.bf16.msra.mxu0 0
      %1677 = vmatpush.bf16.msra.mxu0 0
      %1678 = vmatpush.bf16.msra.mxu0 %v1669
      %1679 = vmatpush.bf16.msra.mxu0 %v1668
      %1680 = vmatmul.bf16.gmra.mxu0 %v1645
      %v1681 = vpop.f32.mrf.mxu0
      %v1682 = vadd.f32 0.0, %v1681
      %v1683 = vpop.f32.mrf.mxu0
      %1684 = vdwg.mxu0
      %v1689 = vunpack.c.l.b16 %v1624
      %v1690 = vunpack.c.l.b16 %v1625
      %v1691 = vunpack.c.l.b16 %v1626
      %v1692 = vunpack.c.l.b16 %v1627
      %v1693 = vpack.c.b16 %v1690, %v1689
      %v1694 = vpack.c.b16 %v1692, %v1691
      %1697 = vmatpush.bf16.msra.mxu0 0
      %1698 = vmatpush.bf16.msra.mxu0 0
      %1699 = vmatpush.bf16.msra.mxu0 0
      %1700 = vmatpush.bf16.msra.mxu0 0
      %1701 = vmatpush.bf16.msra.mxu0 0
      %1702 = vmatpush.bf16.msra.mxu0 0
      %1703 = vmatpush.bf16.msra.mxu0 %v1694
      %1704 = vmatpush.bf16.msra.mxu0 %v1693
      %1705 = vmatmul.bf16.gmra.mxu0 %v1645
      %v1706 = vpop.f32.mrf.mxu0
      %v1707 = vadd.f32 0.0, %v1706
      %v1708 = vpop.f32.mrf.mxu0
      %1709 = vdwg.mxu0
      %v1714 = vunpack.c.l.b16 %v1628
      %v1715 = vunpack.c.l.b16 %v1629
      %v1716 = vunpack.c.l.b16 %v1630
      %v1717 = vunpack.c.l.b16 %v1631
      %v1718 = vpack.c.b16 %v1715, %v1714
      %v1719 = vpack.c.b16 %v1717, %v1716
      %1722 = vmatpush.bf16.msra.mxu0 0
      %1723 = vmatpush.bf16.msra.mxu0 0
      %1724 = vmatpush.bf16.msra.mxu0 0
      %1725 = vmatpush.bf16.msra.mxu0 0
      %1726 = vmatpush.bf16.msra.mxu0 0
      %1727 = vmatpush.bf16.msra.mxu0 0
      %1728 = vmatpush.bf16.msra.mxu0 %v1719
      %1729 = vmatpush.bf16.msra.mxu0 %v1718
      %1730 = vmatmul.bf16.gmra.mxu0 %v1645
      %v1731 = vpop.f32.mrf.mxu0
      %v1732 = vadd.f32 0.0, %v1731
      %v1733 = vpop.f32.mrf.mxu0
      %1734 = vdwg.mxu0
      %v1735 = vpack.c.bf16 %v1377, %v1377
      %v1736 = vpack.c.bf16 %v1402, %v1402
      %v1737 = vpack.c.bf16 %v1427, %v1427
      %v1738 = vpack.c.bf16 %v1452, %v1452
      %v1739 = vpack.c.bf16 %v1536, %v1536
      %v1740 = vpack.c.bf16 %v1561, %v1561
      %v1741 = vpack.c.bf16 %v1586, %v1586
      %v1742 = vpack.c.bf16 %v1611, %v1611
      %v1744 = vsel %vm680, %v1735, 0
      %v1747 = vsel %vm680, %v1739, 0
      %1749 = vmatpush.bf16.xpose.msra.mxu0 0
      %1750 = vmatpush.bf16.xpose.msra.mxu0 0
      %1751 = vmatpush.bf16.xpose.msra.mxu0 0
      %1752 = vmatpush.bf16.xpose.msra.mxu0 0
      %1753 = vmatpush.bf16.xpose.msra.mxu0 0
      %1754 = vmatpush.bf16.xpose.msra.mxu0 0
      %1755 = vmatpush.bf16.xpose.msra.mxu0 0
      %1756 = vmatpush.bf16.xpose.msra.mxu0 %v1747
      %1757 = vmatmul.bf16.gmra.mxu0 %v1744
      %v1758 = vpop.f32.mrf.mxu0
      %v1759 = vadd.f32 0.0, %v1758
      %v1760 = vpop.f32.mrf.mxu0
      %1761 = vdwg.mxu0
      %v1763 = vsel %vm680, %v1736, 0
      %v1766 = vsel %vm680, %v1740, 0
      %1768 = vmatpush.bf16.xpose.msra.mxu0 0
      %1769 = vmatpush.bf16.xpose.msra.mxu0 0
      %1770 = vmatpush.bf16.xpose.msra.mxu0 0
      %1771 = vmatpush.bf16.xpose.msra.mxu0 0
      %1772 = vmatpush.bf16.xpose.msra.mxu0 0
      %1773 = vmatpush.bf16.xpose.msra.mxu0 0
      %1774 = vmatpush.bf16.xpose.msra.mxu0 0
      %1775 = vmatpush.bf16.xpose.msra.mxu0 %v1766
      %1776 = vmatmul.bf16.gmra.mxu0 %v1763
      %v1777 = vpop.f32.mrf.mxu0
      %v1778 = vadd.f32 0.0, %v1777
      %v1779 = vpop.f32.mrf.mxu0
      %1780 = vdwg.mxu0
      %v1782 = vsel %vm680, %v1737, 0
      %v1785 = vsel %vm680, %v1741, 0
      %1787 = vmatpush.bf16.xpose.msra.mxu0 0
      %1788 = vmatpush.bf16.xpose.msra.mxu0 0
      %1789 = vmatpush.bf16.xpose.msra.mxu0 0
      %1790 = vmatpush.bf16.xpose.msra.mxu0 0
      %1791 = vmatpush.bf16.xpose.msra.mxu0 0
      %1792 = vmatpush.bf16.xpose.msra.mxu0 0
      %1793 = vmatpush.bf16.xpose.msra.mxu0 0
      %1794 = vmatpush.bf16.xpose.msra.mxu0 %v1785
      %1795 = vmatmul.bf16.gmra.mxu0 %v1782
      %v1796 = vpop.f32.mrf.mxu0
      %v1797 = vadd.f32 0.0, %v1796
      %v1798 = vpop.f32.mrf.mxu0
      %1799 = vdwg.mxu0
      %v1801 = vsel %vm680, %v1738, 0
      %v1804 = vsel %vm680, %v1742, 0
      %1806 = vmatpush.bf16.xpose.msra.mxu0 0
      %1807 = vmatpush.bf16.xpose.msra.mxu0 0
      %1808 = vmatpush.bf16.xpose.msra.mxu0 0
      %1809 = vmatpush.bf16.xpose.msra.mxu0 0
      %1810 = vmatpush.bf16.xpose.msra.mxu0 0
      %1811 = vmatpush.bf16.xpose.msra.mxu0 0
      %1812 = vmatpush.bf16.xpose.msra.mxu0 0
      %1813 = vmatpush.bf16.xpose.msra.mxu0 %v1804
      %1814 = vmatmul.bf16.gmra.mxu0 %v1801
      %v1815 = vpop.f32.mrf.mxu0
      %v1816 = vadd.f32 0.0, %v1815
      %v1817 = vpop.f32.mrf.mxu0
      %1818 = vdwg.mxu0
      %v1819 = vsel %vm680, %v1759, -inf
      %1820 = vmax.xlane.f32.xlu0 %v1819
      %v1821 = vpop.xlane.xlu0 %1820
      %v1822 = vsel %vm680, %v1778, -inf
      %1823 = vmax.xlane.f32.xlu0 %v1822
      %v1824 = vpop.xlane.xlu0 %1823
      %v1825 = vsel %vm680, %v1797, -inf
      %1826 = vmax.xlane.f32.xlu0 %v1825
      %v1827 = vpop.xlane.xlu0 %1826
      %v1828 = vsel %vm680, %v1816, -inf
      %1829 = vmax.xlane.f32.xlu0 %v1828
      %v1830 = vpop.xlane.xlu0 %1829
      %v1831 = vsub.f32 %v1759, %v1821
      %v1832 = vsub.f32 %v1778, %v1824
      %v1833 = vsub.f32 %v1797, %v1827
      %v1834 = vsub.f32 %v1816, %v1830
      %v1835 = vmul.f32 %v1831, 1.442695
      %v1836 = vpow.pop %v1835
      %v1837 = vmul.f32 %v1832, 1.442695
      %v1838 = vpow.pop %v1837
      %v1839 = vmul.f32 %v1833, 1.442695
      %v1840 = vpow.pop %v1839
      %v1841 = vmul.f32 %v1834, 1.442695
      %v1842 = vpow.pop %v1841
      %v1843 = vsel %vm680, %v1836, 0.0
      %1844 = vadd.xlane.f32.xlu0 %v1843
      %v1845 = vpop.xlane.xlu0 %1844
      %v1846 = vsel %vm680, %v1838, 0.0
      %1847 = vadd.xlane.f32.xlu0 %v1846
      %v1848 = vpop.xlane.xlu0 %1847
      %v1849 = vsel %vm680, %v1840, 0.0
      %1850 = vadd.xlane.f32.xlu0 %v1849
      %v1851 = vpop.xlane.xlu0 %1850
      %v1852 = vsel %vm680, %v1842, 0.0
      %1853 = vadd.xlane.f32.xlu0 %v1852
      %v1854 = vpop.xlane.xlu0 %1853
      %v1855 = vrcp.pop %v1845
      %v1856 = vrcp.pop %v1848
      %v1857 = vrcp.pop %v1851
      %v1858 = vrcp.pop %v1854
      %v1859 = vmul.f32 %v1836, %v1855
      %v1860 = vmul.f32 %v1838, %v1856
      %v1861 = vmul.f32 %v1840, %v1857
      %v1862 = vmul.f32 %v1842, %v1858
      %v1863 = vpack.c.bf16 %v1859, %v1859
      %v1864 = vpack.c.bf16 %v1860, %v1860
      %v1865 = vpack.c.bf16 %v1861, %v1861
      %v1866 = vpack.c.bf16 %v1862, %v1862
      %v1867 = vpack.c.bf16 %v1657, %v1657
      %v1868 = vpack.c.bf16 %v1682, %v1682
      %v1869 = vpack.c.bf16 %v1707, %v1707
      %v1870 = vpack.c.bf16 %v1732, %v1732
      %v1872 = vsel %vm680, %v1863, 0
      %v1875 = vsel %vm684, %v1867, 0
      %1877 = vmatpush.bf16.msra.mxu0 0
      %1878 = vmatpush.bf16.msra.mxu0 0
      %1879 = vmatpush.bf16.msra.mxu0 0
      %1880 = vmatpush.bf16.msra.mxu0 0
      %1881 = vmatpush.bf16.msra.mxu0 0
      %1882 = vmatpush.bf16.msra.mxu0 0
      %1883 = vmatpush.bf16.msra.mxu0 0
      %1884 = vmatpush.bf16.msra.mxu0 %v1875
      %1885 = vmatmul.bf16.gmra.mxu0 %v1872
      %v1886 = vpop.f32.mrf.mxu0
      %v1887 = vadd.f32 0.0, %v1886
      %v1888 = vpop.f32.mrf.mxu0
      %1889 = vdwg.mxu0
      %v1891 = vsel %vm680, %v1864, 0
      %v1894 = vsel %vm684, %v1868, 0
      %1896 = vmatpush.bf16.msra.mxu0 0
      %1897 = vmatpush.bf16.msra.mxu0 0
      %1898 = vmatpush.bf16.msra.mxu0 0
      %1899 = vmatpush.bf16.msra.mxu0 0
      %1900 = vmatpush.bf16.msra.mxu0 0
      %1901 = vmatpush.bf16.msra.mxu0 0
      %1902 = vmatpush.bf16.msra.mxu0 0
      %1903 = vmatpush.bf16.msra.mxu0 %v1894
      %1904 = vmatmul.bf16.gmra.mxu0 %v1891
      %v1905 = vpop.f32.mrf.mxu0
      %v1906 = vadd.f32 0.0, %v1905
      %v1907 = vpop.f32.mrf.mxu0
      %1908 = vdwg.mxu0
      %v1910 = vsel %vm680, %v1865, 0
      %v1913 = vsel %vm684, %v1869, 0
      %1915 = vmatpush.bf16.msra.mxu0 0
      %1916 = vmatpush.bf16.msra.mxu0 0
      %1917 = vmatpush.bf16.msra.mxu0 0
      %1918 = vmatpush.bf16.msra.mxu0 0
      %1919 = vmatpush.bf16.msra.mxu0 0
      %1920 = vmatpush.bf16.msra.mxu0 0
      %1921 = vmatpush.bf16.msra.mxu0 0
      %1922 = vmatpush.bf16.msra.mxu0 %v1913
      %1923 = vmatmul.bf16.gmra.mxu0 %v1910
      %v1924 = vpop.f32.mrf.mxu0
      %v1925 = vadd.f32 0.0, %v1924
      %v1926 = vpop.f32.mrf.mxu0
      %1927 = vdwg.mxu0
      %v1929 = vsel %vm680, %v1866, 0
      %v1932 = vsel %vm684, %v1870, 0
      %1934 = vmatpush.bf16.msra.mxu0 0
      %1935 = vmatpush.bf16.msra.mxu0 0
      %1936 = vmatpush.bf16.msra.mxu0 0
      %1937 = vmatpush.bf16.msra.mxu0 0
      %1938 = vmatpush.bf16.msra.mxu0 0
      %1939 = vmatpush.bf16.msra.mxu0 0
      %1940 = vmatpush.bf16.msra.mxu0 0
      %1941 = vmatpush.bf16.msra.mxu0 %v1932
      %1942 = vmatmul.bf16.gmra.mxu0 %v1929
      %v1943 = vpop.f32.mrf.mxu0
      %v1944 = vadd.f32 0.0, %v1943
      %v1945 = vpop.f32.mrf.mxu0
      %1946 = vdwg.mxu0
      %v1947 = vpack.c.bf16 %v1887, %v1887
      %v1948 = vpack.c.bf16 %v1906, %v1906
      %v1949 = vpack.c.bf16 %v1925, %v1925
      %v1950 = vpack.c.bf16 %v1944, %v1944
      %s1951 = scalar_lea.vmem %s10, 16
      %v1952 = vld [vmem:[%s1951] sm:$0xf]
      %v1953 = vld [vmem:[%s1951 + $0x4] sm:$0xf]
      %v1954 = vld [vmem:[%s1951 + $0x8] sm:$0xf]
      %v1955 = vld [vmem:[%s1951 + $0xc] sm:$0xf]
      %v1957 = vsel %vm680, %v1947, 0
      %v1960 = vsel %vm684, %v1952, 0
      %1962 = vmatpush.bf16.msra.mxu0 0
      %1963 = vmatpush.bf16.msra.mxu0 0
      %1964 = vmatpush.bf16.msra.mxu0 0
      %1965 = vmatpush.bf16.msra.mxu0 0
      %1966 = vmatpush.bf16.msra.mxu0 0
      %1967 = vmatpush.bf16.msra.mxu0 0
      %1968 = vmatpush.bf16.msra.mxu0 0
      %1969 = vmatpush.bf16.msra.mxu0 %v1960
      %1970 = vmatmul.bf16.gmra.mxu0 %v1957
      %v1971 = vpop.f32.mrf.mxu0
      %v1972 = vadd.f32 0.0, %v1971
      %v1973 = vpop.f32.mrf.mxu0
      %1974 = vdwg.mxu0
      %v1976 = vsel %vm680, %v1948, 0
      %v1979 = vsel %vm684, %v1953, 0
      %1981 = vmatpush.bf16.msra.mxu0 0
      %1982 = vmatpush.bf16.msra.mxu0 0
      %1983 = vmatpush.bf16.msra.mxu0 0
      %1984 = vmatpush.bf16.msra.mxu0 0
      %1985 = vmatpush.bf16.msra.mxu0 0
      %1986 = vmatpush.bf16.msra.mxu0 0
      %1987 = vmatpush.bf16.msra.mxu0 0
      %1988 = vmatpush.bf16.msra.mxu0 %v1979
      %1989 = vmatmul.bf16.gmra.mxu0 %v1976
      %v1990 = vpop.f32.mrf.mxu0
      %v1991 = vadd.f32 0.0, %v1990
      %v1992 = vpop.f32.mrf.mxu0
      %1993 = vdwg.mxu0
      %v1995 = vsel %vm680, %v1949, 0
      %v1998 = vsel %vm684, %v1954, 0
      %2000 = vmatpush.bf16.msra.mxu0 0
      %2001 = vmatpush.bf16.msra.mxu0 0
      %2002 = vmatpush.bf16.msra.mxu0 0
      %2003 = vmatpush.bf16.msra.mxu0 0
      %2004 = vmatpush.bf16.msra.mxu0 0
      %2005 = vmatpush.bf16.msra.mxu0 0
      %2006 = vmatpush.bf16.msra.mxu0 0
      %2007 = vmatpush.bf16.msra.mxu0 %v1998
      %2008 = vmatmul.bf16.gmra.mxu0 %v1995
      %v2009 = vpop.f32.mrf.mxu0
      %v2010 = vadd.f32 0.0, %v2009
      %v2011 = vpop.f32.mrf.mxu0
      %2012 = vdwg.mxu0
      %v2014 = vsel %vm680, %v1950, 0
      %v2017 = vsel %vm684, %v1955, 0
      %2019 = vmatpush.bf16.msra.mxu0 0
      %2020 = vmatpush.bf16.msra.mxu0 0
      %2021 = vmatpush.bf16.msra.mxu0 0
      %2022 = vmatpush.bf16.msra.mxu0 0
      %2023 = vmatpush.bf16.msra.mxu0 0
      %2024 = vmatpush.bf16.msra.mxu0 0
      %2025 = vmatpush.bf16.msra.mxu0 0
      %2026 = vmatpush.bf16.msra.mxu0 %v2017
      %2027 = vmatmul.bf16.gmra.mxu0 %v2014
      %v2028 = vpop.f32.mrf.mxu0
      %v2029 = vadd.f32 0.0, %v2028
      %v2030 = vpop.f32.mrf.mxu0
      %2031 = vdwg.mxu0
      %v2032 = vsel %vm519, %v1972, 0.0
      %v2033 = vsel %vm519, %v1991, 0.0
      %v2034 = vadd.f32 %v2032, %v2033
      %v2035 = vsel %vm519, %v2010, 0.0
      %v2036 = vadd.f32 %v2034, %v2035
      %v2037 = vsel %vm519, %v2029, 0.0
      %v2038 = vadd.f32 %v2036, %v2037
      %v2039 = vadd.f32 %v1299, %v2038
      %v2040 = vpack.c.bf16 %v2039, %v2039
      %s2041 = scalar_lea.vmem %s11, 16
      %v2042 = vld [vmem:[%s2041] sm:$0xf]
      %v2043 = vld [vmem:[%s2041 + $0x4] sm:$0xf]
      %v2044 = vld [vmem:[%s2041 + $0x8] sm:$0xf]
      %v2045 = vld [vmem:[%s2041 + $0xc] sm:$0xf]
      %v2050 = vunpack.c.l.b16 %v2042
      %v2051 = vunpack.c.l.b16 %v2043
      %v2052 = vunpack.c.l.b16 %v2044
      %v2053 = vunpack.c.l.b16 %v2045
      %v2054 = vpack.c.b16 %v2051, %v2050
      %v2055 = vpack.c.b16 %v2053, %v2052
      %v2059 = vsel %vm519, %v2040, 0
      %2061 = vmatpush.bf16.msra.mxu0 0
      %2062 = vmatpush.bf16.msra.mxu0 0
      %2063 = vmatpush.bf16.msra.mxu0 0
      %2064 = vmatpush.bf16.msra.mxu0 0
      %2065 = vmatpush.bf16.msra.mxu0 0
      %2066 = vmatpush.bf16.msra.mxu0 0
      %2067 = vmatpush.bf16.msra.mxu0 %v2055
      %2068 = vmatpush.bf16.msra.mxu0 %v2054
      %2069 = vmatmul.bf16.gmra.mxu0 %v2059
      %v2070 = vpop.f32.mrf.mxu0
      %v2071 = vadd.f32 0.0, %v2070
      %v2072 = vpop.f32.mrf.mxu0
      %2073 = vdwg.mxu0
      %v2074 = vadd.f32 %v2039, %v2071
      %s2075 = scalar_lea.vmem %s12, 1
      %v2076 = vld [vmem:[%s2075] sm:$0x1]
      %v2078 = vperm.slane %v2076, 0
      %v2080 = vadd.f32 %v2074, %v2078
      %2081 = vst.msk [vmem:[%s435] sm:$0xff] %vm519, %v2080
      %p2082 = scmp.lt.s32.totalorder %s24, 1
      %s2083 = scalar_select %p2082, %s24, 1
      %s2084 = smul.addr %s2083, 8
      %s2085 = scalar_lea.vmem %s13, %s2084
      // Predicated region
      $region73: #{hybrid_encoder_forward.3} parent=71 // pred_check
        %p2086 = pneg %p320
      $region74: #{hybrid_encoder_forward.3} parent=71 // pred_check_branch
        %2088 = sbr.rel (%p2086) target = $region76
      $region75: #{hybrid_encoder_forward.3} parent=71 // pred_region
        _
      $region76: #{hybrid_encoder_forward.3} parent=71 // pred_fallthru
        _
    $region72: #{hybrid_encoder_forward.3} parent=5 // pred_fallthru
      _
    %p2089 = scmp.le.s32.totalorder 2, %s19
    // Predicated region
    $region77: #{hybrid_encoder_forward.3} parent=5 // pred_check
      %p2090 = pneg %p2089
    $region78: #{hybrid_encoder_forward.3} parent=5 // pred_check_branch
      %2092 = sbr.rel (%p2090) target = $region80
    $region79: #{hybrid_encoder_forward.3} parent=5 // pred_region
      %s2093 = ssub.s32 %s19, 2
      // Predicated region
      $region81: #{hybrid_encoder_forward.3} parent=79 // pred_check
        %p2094 = pneg %p326
      $region82: #{hybrid_encoder_forward.3} parent=79 // pred_check_branch
        %2096 = sbr.rel (%p2094) target = $region84
      $region83: #{hybrid_encoder_forward.3} parent=79 // pred_region
        %p2097 = scmp.lt.s32.totalorder %s25, 1
        %s2098 = scalar_select %p2097, %s25, 1
        %s2099 = smul.addr %s2098, 8
        %s2100 = scalar_lea.vmem %s13, %s2099
      $region84: #{hybrid_encoder_forward.3} parent=79 // pred_fallthru
        _
    $region80: #{hybrid_encoder_forward.3} parent=5 // pred_fallthru
      _
  $region6: #{hybrid_encoder_forward.3} parent=0 // loop_footer
    %s23 = sadd.s32 1, %s19
  $region7: #{hybrid_encoder_forward.3} parent=0 // loop_footer_branch
    %18 = sbr.rel target = $region3
  $region8: #{hybrid_encoder_forward.3} parent=0 // loop_exit
    _

</llo_original>
